<compile_context>
chip_gen: v7x
topology: tpu7x:2x2x1
jax: 0.10.0
libtpu: 0.0.40
codegen_flags: <defaults>
</compile_context>

<pallas_src>
import jax
import jax.numpy as jnp
from jax.experimental import pallas as pl
from jax.experimental.pallas import tpu as pltpu

CHANNEL_LIST = [64, 256, 512, 1024, 2048]
CHANNELS = 32                       # config.channels
LVL_OF_HEAD = (0, 0, 1, 2, 3, 4)    # which pyramid level feeds each score head
_VMEM_LIMIT = 32 * 1024 * 1024      # scoped-VMEM cap: safe on v5e/v6e/v7x
_BLOCK_BUDGET = 8 * 1024 * 1024     # VMEM targeted for double-buffered row blocks


def _round_up(x, m):
    return (x + m - 1) // m * m


def _pick_row_tile(rows, bytes_per_row):
    """Largest row tile (multiple of 8) that fits the VMEM budget, but split so
    there are >= 2 grid steps whenever possible (v7x has two TensorCores)."""
    if rows <= 8:
        return rows
    tm = min(_BLOCK_BUDGET // max(bytes_per_row, 1), _round_up(rows, 8))
    tm = max(8, tm // 8 * 8)
    if -(-rows // tm) < 2:
        tm = max(8, _round_up(-(-rows // 2), 8))
    return tm


# ----------------------------------------------------------------------------
# Kernel 1: fused (backbone 1x1 placeholder) + reduce_rgb + reduce_depth +
#           CrossModality(sum placeholder):
#   out = pool(rgb) @ Wr + pool(depth) @ Wd + b
# with 4 pixels packed per row -> 128-lane, unmasked output stores.
# ----------------------------------------------------------------------------
def _dual_matmul_bias_kernel(xr_ref, xd_ref, wr_ref, wd_ref, b_ref, o_ref):
    acc = jnp.dot(xr_ref[...], wr_ref[...], preferred_element_type=jnp.float32)
    acc = acc + jnp.dot(xd_ref[...], wd_ref[...], preferred_element_type=jnp.float32)
    o_ref[...] = (acc + b_ref[...]).astype(o_ref.dtype)


def fused_level(xr, xd, wr_bd, wd_bd, b_tile):
    """xr, xd: (N,H,W,3) pooled images; wr_bd/wd_bd: (pack*3, pack*32) bf16
    block-diagonal folded weights; b_tile: (1, pack*32) f32."""
    N, H, W, _ = xr.shape
    pack = wr_bd.shape[0] // 3
    M = N * H * W
    assert M % pack == 0
    R, Kp, Np = M // pack, pack * 3, pack * CHANNELS
    xr2 = xr.astype(jnp.bfloat16).reshape(R, Kp)      # free reshape (row-major)
    xd2 = xd.astype(jnp.bfloat16).reshape(R, Kp)
    tm = _pick_row_tile(R, (2 * Kp * 2 + Np * 2) * 2)  # rgb+depth+out, 2 buffers
    out = pl.pallas_call(
        _dual_matmul_bias_kernel,
        out_shape=jax.ShapeDtypeStruct((R, Np), jnp.bfloat16),
        grid=(pl.cdiv(R, tm),),
        in_specs=[
            pl.BlockSpec((tm, Kp), lambda i: (i, 0)),
            pl.BlockSpec((tm, Kp), lambda i: (i, 0)),
            pl.BlockSpec((Kp, Np), lambda i: (0, 0)),
            pl.BlockSpec((Kp, Np), lambda i: (0, 0)),
            pl.BlockSpec((1, Np), lambda i: (0, 0)),
        ],
        out_specs=pl.BlockSpec((tm, Np), lambda i: (i, 0)),
        compiler_params=pltpu.CompilerParams(
            dimension_semantics=("parallel",),
            vmem_limit_bytes=_VMEM_LIMIT),
    )(xr2, xd2, wr_bd, wd_bd, b_tile)
    return out.reshape(N, H, W, CHANNELS)


# ----------------------------------------------------------------------------
# Kernel 2: all 6 score heads in one pallas_call, grid (6, N).
#   t   = X_(H0, W0*C) @ m_(W0*C, Wout)     (bf16 MXU, channel-proj + W-interp
#                                            + level->level0 resize folded in)
#   out = sigmoid(Wh_(Hout, H0) @ t + b)    (f32 matrix & matmul; t stays f32)
# Levels 1..4 are zero-padded to the level-0 slab; the padded rows of m and the
# padded columns of Wh are zero, so the result is exact.
# NOTE: the fully-folded m is the right choice for small Wi (this test); at real
# image resolutions split into C->1 proj + separate H/W interps and K-split the
# first matmul to stay inside v7x's 64 MiB VMEM.
# ----------------------------------------------------------------------------
def _score_heads_kernel(x_ref, m_ref, wh_ref, b_ref, o_ref):
    t = jnp.dot(x_ref[0], m_ref[0], preferred_element_type=jnp.float32)
    out = jnp.dot(wh_ref[0], t, preferred_element_type=jnp.float32)
    o_ref[0] = jax.nn.sigmoid(out + b_ref[0]).astype(o_ref.dtype)


def fused_score_heads(x_stack, m_stack, wh_stack, b_stack, n_batch):
    HN, H0, W0C = x_stack.shape                  # HN = num_heads * N
    num_heads, _, w_out = m_stack.shape
    h_out = wh_stack.shape[1]
    return pl.pallas_call(
        _score_heads_kernel,
        out_shape=jax.ShapeDtypeStruct((HN, h_out, w_out), jnp.float32),
        grid=(num_heads, n_batch),
        in_specs=[
            pl.BlockSpec((1, H0, W0C), lambda h, n: (h * n_batch + n, 0, 0)),
            pl.BlockSpec((1, W0C, w_out), lambda h, n: (h, 0, 0)),
            pl.BlockSpec((1, h_out, H0), lambda h, n: (h, 0, 0)),
            pl.BlockSpec((1, 1, 1), lambda h, n: (h, 0, 0)),
        ],
        out_specs=pl.BlockSpec((1, h_out, w_out),
                               lambda h, n: (h * n_batch + n, 0, 0)),
        compiler_params=pltpu.CompilerParams(
            dimension_semantics=("parallel", "parallel"),
            vmem_limit_bytes=_VMEM_LIMIT),
    )(x_stack, m_stack, wh_stack, b_stack)


# ----------------------------------------------------------------------------
# Placeholders for sub-modules whose source was not provided
# ----------------------------------------------------------------------------
def _avg_pool2_nhwc(x):
    N, H, W, C = x.shape
    return x.reshape(N, H // 2, 2, W // 2, 2, C).mean(axis=(2, 4))


def build_pyramid_nhwc(img):
    # TODO(synk): resnet50 backbone source not provided; deterministic stand-in
    # is cascaded 2x2 average pooling (cumulative strides 2/4/8/16/32), kept as
    # tiny XLA ops.  The placeholder 3->channel_list[i] 1x1 convs are folded
    # into the reduce weights (prepare_params), so no wide-channel feature ever
    # touches HBM.
    feats, cur = [], img
    for _ in range(5):
        cur = _avg_pool2_nhwc(cur)
        feats.append(cur)
    return feats


def iam(f0, f1, f2):
    # TODO(synk): IAM source not provided; identity pass-through placeholder.
    return f0, f1, f2


def decoder(feats):
    feats = list(feats)
    feats[2], feats[3], feats[4] = iam(*feats[2:5])
    feats[1], feats[2], feats[3] = iam(*feats[1:4])
    feats[0], feats[1], feats[2] = iam(*feats[0:3])
    return feats


# ----------------------------------------------------------------------------
# One-time parameter preparation (folding, packing, interp matrices) -- kept
# outside the jitted per-forward trace.
# ----------------------------------------------------------------------------
def _bilinear_matrix(out_size, in_size):
    """Row-interp matrix matching F.interpolate(mode='bilinear', align_corners=True)."""
    if out_size == 1:
        src = jnp.zeros((1,), jnp.float32)
    else:
        src = jnp.arange(out_size, dtype=jnp.float32) * (in_size - 1) / (out_size - 1)
    i0 = jnp.clip(jnp.floor(src), 0, in_size - 1).astype(jnp.int32)
    i1 = jnp.clip(i0 + 1, 0, in_size - 1)
    frac = src - i0.astype(jnp.float32)
    rows = jnp.arange(out_size, dtype=jnp.int32)
    m = jnp.zeros((out_size, in_size), jnp.float32)
    m = m.at[rows, i0].add(1.0 - frac)
    m = m.at[rows, i1].add(frac)
    return m


def prepare_params(params, image_size):
    n, _, h_img, w_img = image_size
    prep = {"lvl_wr": [], "lvl_wd": [], "lvl_b": []}

    for l in range(5):
        hl, wl = h_img >> (l + 1), w_img >> (l + 1)
        m_rows = n * hl * wl
        pack = 4 if m_rows % 4 == 0 else (2 if m_rows % 2 == 0 else 1)
        # Fold placeholder backbone conv (3->C_l) into reduce conv (C_l->32).
        # TODO(synk): ReduceChannnel exact body / CrossModality source not
        # provided; this fold and the elementwise-sum cross are only valid for
        # those placeholders.
        wr = params["rgb_net_w"][l] @ params["reduce_rgb_w"][l]
        br = params["rgb_net_b"][l] @ params["reduce_rgb_w"][l] + params["reduce_rgb_b"][l]
        wd = params["depth_net_w"][l] @ params["reduce_depth_w"][l]
        bd = params["depth_net_b"][l] @ params["reduce_depth_w"][l] + params["reduce_depth_b"][l]
        eye = jnp.eye(pack, dtype=jnp.float32)
        prep["lvl_wr"].append(jnp.kron(eye, wr).astype(jnp.bfloat16))
        prep["lvl_wd"].append(jnp.kron(eye, wd).astype(jnp.bfloat16))
        prep["lvl_b"].append(
            jnp.tile(br + bd, pack).reshape(1, pack * CHANNELS).astype(jnp.float32))

    # Per-head folded matrices (1x1 conv + composed bilinear resizes), padded to
    # the common level-0 slab so one pallas_call serves all 6 heads.
    h0, w0 = h_img >> 1, w_img >> 1
    wh_img = _bilinear_matrix(h_img, h0)
    ww_img = _bilinear_matrix(w_img, w0)
    m_list, wh_list, b_list = [], [], []
    for head, lvl in enumerate(LVL_OF_HEAD):
        hl, wl = h_img >> (lvl + 1), w_img >> (lvl + 1)
        ww = ww_img if lvl == 0 else ww_img @ _bilinear_matrix(w0, wl)   # (Wout, Wl)
        wh = wh_img if lvl == 0 else wh_img @ _bilinear_matrix(h0, hl)   # (Hout, Hl)
        sw = params["score_w"][head][:, 0]                               # (C,)
        # m[(w, c), wout] = ww[wout, w] * score_w[c]
        m = (ww.T[:, None, :] * sw[None, :, None]).reshape(wl * CHANNELS, w_img)
        m = jnp.pad(m, ((0, (w0 - wl) * CHANNELS), (0, 0)))              # (W0*C, Wout)
        wh = jnp.pad(wh, ((0, 0), (0, h0 - hl)))                         # (Hout, H0)
        m_list.append(m.astype(jnp.bfloat16))
        wh_list.append(wh)                                               # stays f32
        b_list.append(params["score_b"][head].reshape(1, 1).astype(jnp.float32))
    prep["head_m"] = jnp.stack(m_list)
    prep["head_wh"] = jnp.stack(wh_list)
    prep["head_b"] = jnp.stack(b_list)
    return prep


# ----------------------------------------------------------------------------
# Net forward
# ----------------------------------------------------------------------------
def net_forward(rgb, depth, prep):
    n, _, h_img, w_img = rgb.shape
    num_heads = len(LVL_OF_HEAD)

    # Single layout change to channels-last; everything downstream stays NHWC.
    rgb_nhwc = jnp.transpose(rgb, (0, 2, 3, 1))
    depth_nhwc = jnp.transpose(depth, (0, 2, 3, 1))

    rgb_pyr = build_pyramid_nhwc(rgb_nhwc)
    depth_pyr = build_pyramid_nhwc(depth_nhwc)

    # backbone conv + reduce_rgb + reduce_depth + CrossModality: one kernel/level.
    feats = [fused_level(rgb_pyr[l], depth_pyr[l], prep["lvl_wr"][l],
                         prep["lvl_wd"][l], prep["lvl_b"][l]) for l in range(5)]

    feats = decoder(feats)   # decoders[0] (IAM placeholders: identity)
    feats = decoder(feats)   # decoders[1]

    # 6 fused score heads (conv C->1, bilinear resize(s), sigmoid) in one call.
    h0, w0 = feats[0].shape[1], feats[0].shape[2]
    padded = {}
    for lvl in sorted(set(LVL_OF_HEAD)):
        f = feats[lvl]
        hl, wl = f.shape[1], f.shape[2]
        x = f.reshape(n, hl, wl * CHANNELS)                   # free reshape
        padded[lvl] = jnp.pad(x, ((0, 0), (0, h0 - hl), (0, (w0 - wl) * CHANNELS)))
    x_stack = jnp.stack([padded[lvl] for lvl in LVL_OF_HEAD])  # (6, N, H0, W0*C)
    x_stack = x_stack.reshape(num_heads * n, h0, w0 * CHANNELS)

    out = fused_score_heads(x_stack, prep["head_m"], prep["head_wh"],
                            prep["head_b"], n)                 # (6*N, H, W) f32
    out = out.reshape(num_heads, n, 1, h_img, w_img)
    return [out[h] for h in range(num_heads)]                  # NCHW interface


# ----------------------------------------------------------------------------
# Deterministic parameter init (Conv2d: normal std=0.01, bias zero)
# ----------------------------------------------------------------------------
def init_params(key):
    params = {}
    keys = iter(jax.random.split(key, 64))

    def conv_w(shape):
        return 0.01 * jax.random.normal(next(keys), shape, jnp.float32)

    params["rgb_net_w"] = [conv_w((3, c)) for c in CHANNEL_LIST]
    params["rgb_net_b"] = [jnp.zeros((c,), jnp.float32) for c in CHANNEL_LIST]
    params["depth_net_w"] = [conv_w((3, c)) for c in CHANNEL_LIST]
    params["depth_net_b"] = [jnp.zeros((c,), jnp.float32) for c in CHANNEL_LIST]

    params["reduce_rgb_w"] = [conv_w((c, CHANNELS)) for c in CHANNEL_LIST]
    params["reduce_rgb_b"] = [jnp.zeros((CHANNELS,), jnp.float32) for _ in CHANNEL_LIST]
    params["reduce_depth_w"] = [conv_w((c, CHANNELS)) for c in CHANNEL_LIST]
    params["reduce_depth_b"] = [jnp.zeros((CHANNELS,), jnp.float32) for _ in CHANNEL_LIST]

    params["score_w"] = [conv_w((CHANNELS, 1)) for _ in range(6)]
    params["score_b"] = [jnp.zeros((1,), jnp.float32) for _ in range(6)]
    return params


if __name__ == "__main__":
    key = jax.random.PRNGKey(0)
    k_rgb, k_depth, k_params = jax.random.split(key, 3)

    N, H, W = 2, 64, 64
    rgb = jax.random.normal(k_rgb, (N, 3, H, W), jnp.float32)
    depth = jax.random.normal(k_depth, (N, 3, H, W), jnp.float32)
    params = init_params(k_params)
    prep = prepare_params(params, (N, 3, H, W))   # one-time fold / pre-cast

    fwd = jax.jit(net_forward)
    preds = jax.block_until_ready(fwd(rgb, depth, prep))

    assert len(preds) == 6
    for p in preds:
        assert p.shape == (N, 1, H, W), p.shape
        assert bool(jnp.all(jnp.isfinite(p)))
        assert bool(jnp.all((p >= 0.0) & (p <= 1.0)))  # sigmoid outputs

    print("KERNEL_OK")
</pallas_src>

<mosaic_0001>
module attributes {stable_mosaic.version = 11 : i64} {
  func.func @_dual_matmul_bias_kernel(%arg0: i32, %arg1: memref<256x12xbf16, #tpu.memory_space<vmem>>, %arg2: memref<256x12xbf16, #tpu.memory_space<vmem>>, %arg3: memref<12x128xbf16, #tpu.memory_space<vmem>>, %arg4: memref<12x128xbf16, #tpu.memory_space<vmem>>, %arg5: memref<1x128xf32, #tpu.memory_space<vmem>>, %arg6: memref<256x128xbf16, #tpu.memory_space<vmem>>) attributes {dimension_semantics = [#tpu.dimension_semantics<parallel>], iteration_bounds = array<i64: 2>, scalar_prefetch = 0 : i64, scratch_operands = 0 : i64, tpu.core_type = #tpu.core_type<tc>, window_params = [{transform_indices = @transform_0, window_bounds = array<i64: 256, 12>}, {transform_indices = @transform_1, window_bounds = array<i64: 256, 12>}, {pipeline_mode = #tpu.pipeline_mode<synchronous>, transform_indices = @transform_2, window_bounds = array<i64: 12, 128>}, {pipeline_mode = #tpu.pipeline_mode<synchronous>, transform_indices = @transform_3, window_bounds = array<i64: 12, 128>}, {pipeline_mode = #tpu.pipeline_mode<synchronous>, transform_indices = @transform_4, window_bounds = array<i64: 1, 128>}, {transform_indices = @transform_5, window_bounds = array<i64: 256, 128>}]} {
    %c0 = arith.constant 0 : index
    %c0_0 = arith.constant 0 : index
    %0 = vector.load %arg1[%c0, %c0_0] : memref<256x12xbf16, #tpu.memory_space<vmem>>, vector<256x12xbf16>
    %c0_1 = arith.constant 0 : index
    %c0_2 = arith.constant 0 : index
    %1 = vector.load %arg3[%c0_1, %c0_2] : memref<12x128xbf16, #tpu.memory_space<vmem>>, vector<12x128xbf16>
    %cst = arith.constant dense<0.000000e+00> : vector<256x128xf32>
    %2 = tpu.matmul %0, %1, %cst {dimension_numbers = #tpu.dot_dimension_numbers<[1], [0], [0], [1], [0, 0, 1, 1], [], []>} : vector<256x12xbf16>, vector<12x128xbf16>, vector<256x128xf32> -> vector<256x128xf32>
    %c0_3 = arith.constant 0 : index
    %c0_4 = arith.constant 0 : index
    %3 = vector.load %arg2[%c0_3, %c0_4] : memref<256x12xbf16, #tpu.memory_space<vmem>>, vector<256x12xbf16>
    %c0_5 = arith.constant 0 : index
    %c0_6 = arith.constant 0 : index
    %4 = vector.load %arg4[%c0_5, %c0_6] : memref<12x128xbf16, #tpu.memory_space<vmem>>, vector<12x128xbf16>
    %cst_7 = arith.constant dense<0.000000e+00> : vector<256x128xf32>
    %5 = tpu.matmul %3, %4, %cst_7 {dimension_numbers = #tpu.dot_dimension_numbers<[1], [0], [0], [1], [0, 0, 1, 1], [], []>} : vector<256x12xbf16>, vector<12x128xbf16>, vector<256x128xf32> -> vector<256x128xf32>
    %6 = arith.addf %2, %5 : vector<256x128xf32>
    %c0_8 = arith.constant 0 : index
    %c0_9 = arith.constant 0 : index
    %7 = vector.load %arg5[%c0_8, %c0_9] : memref<1x128xf32, #tpu.memory_space<vmem>>, vector<1x128xf32>
    %8 = vector.broadcast %7 : vector<1x128xf32> to vector<256x128xf32>
    %9 = arith.addf %6, %8 : vector<256x128xf32>
    %10 = arith.truncf %9 : vector<256x128xf32> to vector<256x128xbf16>
    %c0_10 = arith.constant 0 : index
    %c0_11 = arith.constant 0 : index
    %11 = vector.load %arg6[%c0_10, %c0_11] : memref<256x128xbf16, #tpu.memory_space<vmem>>, vector<256x128xbf16>
    tpu.vector_store %arg6[%c0_10, %c0_11], %10 {strides = array<i32>} : memref<256x128xbf16, #tpu.memory_space<vmem>>, vector<256x128xbf16>,
    return
  }
  func.func @transform_0(%arg0: i32) -> (i32, i32) {
    %c0_i32 = arith.constant 0 : i32
    %c0_i32_0 = arith.constant 0 : i32
    return %arg0, %c0_i32 : i32, i32
  }
  func.func @transform_1(%arg0: i32) -> (i32, i32) {
    %c0_i32 = arith.constant 0 : i32
    %c0_i32_0 = arith.constant 0 : i32
    return %arg0, %c0_i32 : i32, i32
  }
  func.func @transform_2(%arg0: i32) -> (i32, i32) {
    %c0_i32 = arith.constant 0 : i32
    %c0_i32_0 = arith.constant 0 : i32
    %c0_i32_1 = arith.constant 0 : i32
    return %c0_i32, %c0_i32_0 : i32, i32
  }
  func.func @transform_3(%arg0: i32) -> (i32, i32) {
    %c0_i32 = arith.constant 0 : i32
    %c0_i32_0 = arith.constant 0 : i32
    %c0_i32_1 = arith.constant 0 : i32
    return %c0_i32, %c0_i32_0 : i32, i32
  }
  func.func @transform_4(%arg0: i32) -> (i32, i32) {
    %c0_i32 = arith.constant 0 : i32
    %c0_i32_0 = arith.constant 0 : i32
    %c0_i32_1 = arith.constant 0 : i32
    return %c0_i32, %c0_i32_0 : i32, i32
  }
  func.func @transform_5(%arg0: i32) -> (i32, i32) {
    %c0_i32 = arith.constant 0 : i32
    %c0_i32_0 = arith.constant 0 : i32
    return %arg0, %c0_i32 : i32, i32
  }
}

module attributes {stable_mosaic.version = 11 : i64} {
  func.func @_dual_matmul_bias_kernel(%arg0: i32, %arg1: memref<64x12xbf16, #tpu.memory_space<vmem>>, %arg2: memref<64x12xbf16, #tpu.memory_space<vmem>>, %arg3: memref<12x128xbf16, #tpu.memory_space<vmem>>, %arg4: memref<12x128xbf16, #tpu.memory_space<vmem>>, %arg5: memref<1x128xf32, #tpu.memory_space<vmem>>, %arg6: memref<64x128xbf16, #tpu.memory_space<vmem>>) attributes {dimension_semantics = [#tpu.dimension_semantics<parallel>], iteration_bounds = array<i64: 2>, scalar_prefetch = 0 : i64, scratch_operands = 0 : i64, tpu.core_type = #tpu.core_type<tc>, window_params = [{transform_indices = @transform_0, window_bounds = array<i64: 64, 12>}, {transform_indices = @transform_1, window_bounds = array<i64: 64, 12>}, {pipeline_mode = #tpu.pipeline_mode<synchronous>, transform_indices = @transform_2, window_bounds = array<i64: 12, 128>}, {pipeline_mode = #tpu.pipeline_mode<synchronous>, transform_indices = @transform_3, window_bounds = array<i64: 12, 128>}, {pipeline_mode = #tpu.pipeline_mode<synchronous>, transform_indices = @transform_4, window_bounds = array<i64: 1, 128>}, {transform_indices = @transform_5, window_bounds = array<i64: 64, 128>}]} {
    %c0 = arith.constant 0 : index
    %c0_0 = arith.constant 0 : index
    %0 = vector.load %arg1[%c0, %c0_0] : memref<64x12xbf16, #tpu.memory_space<vmem>>, vector<64x12xbf16>
    %c0_1 = arith.constant 0 : index
    %c0_2 = arith.constant 0 : index
    %1 = vector.load %arg3[%c0_1, %c0_2] : memref<12x128xbf16, #tpu.memory_space<vmem>>, vector<12x128xbf16>
    %cst = arith.constant dense<0.000000e+00> : vector<64x128xf32>
    %2 = tpu.matmul %0, %1, %cst {dimension_numbers = #tpu.dot_dimension_numbers<[1], [0], [0], [1], [0, 0, 1, 1], [], []>} : vector<64x12xbf16>, vector<12x128xbf16>, vector<64x128xf32> -> vector<64x128xf32>
    %c0_3 = arith.constant 0 : index
    %c0_4 = arith.constant 0 : index
    %3 = vector.load %arg2[%c0_3, %c0_4] : memref<64x12xbf16, #tpu.memory_space<vmem>>, vector<64x12xbf16>
    %c0_5 = arith.constant 0 : index
    %c0_6 = arith.constant 0 : index
    %4 = vector.load %arg4[%c0_5, %c0_6] : memref<12x128xbf16, #tpu.memory_space<vmem>>, vector<12x128xbf16>
    %cst_7 = arith.constant dense<0.000000e+00> : vector<64x128xf32>
    %5 = tpu.matmul %3, %4, %cst_7 {dimension_numbers = #tpu.dot_dimension_numbers<[1], [0], [0], [1], [0, 0, 1, 1], [], []>} : vector<64x12xbf16>, vector<12x128xbf16>, vector<64x128xf32> -> vector<64x128xf32>
    %6 = arith.addf %2, %5 : vector<64x128xf32>
    %c0_8 = arith.constant 0 : index
    %c0_9 = arith.constant 0 : index
    %7 = vector.load %arg5[%c0_8, %c0_9] : memref<1x128xf32, #tpu.memory_space<vmem>>, vector<1x128xf32>
    %8 = vector.broadcast %7 : vector<1x128xf32> to vector<64x128xf32>
    %9 = arith.addf %6, %8 : vector<64x128xf32>
    %10 = arith.truncf %9 : vector<64x128xf32> to vector<64x128xbf16>
    %c0_10 = arith.constant 0 : index
    %c0_11 = arith.constant 0 : index
    %11 = vector.load %arg6[%c0_10, %c0_11] : memref<64x128xbf16, #tpu.memory_space<vmem>>, vector<64x128xbf16>
    tpu.vector_store %arg6[%c0_10, %c0_11], %10 {strides = array<i32>} : memref<64x128xbf16, #tpu.memory_space<vmem>>, vector<64x128xbf16>,
    return
  }
  func.func @transform_0(%arg0: i32) -> (i32, i32) {
    %c0_i32 = arith.constant 0 : i32
    %c0_i32_0 = arith.constant 0 : i32
    return %arg0, %c0_i32 : i32, i32
  }
  func.func @transform_1(%arg0: i32) -> (i32, i32) {
    %c0_i32 = arith.constant 0 : i32
    %c0_i32_0 = arith.constant 0 : i32
    return %arg0, %c0_i32 : i32, i32
  }
  func.func @transform_2(%arg0: i32) -> (i32, i32) {
    %c0_i32 = arith.constant 0 : i32
    %c0_i32_0 = arith.constant 0 : i32
    %c0_i32_1 = arith.constant 0 : i32
    return %c0_i32, %c0_i32_0 : i32, i32
  }
  func.func @transform_3(%arg0: i32) -> (i32, i32) {
    %c0_i32 = arith.constant 0 : i32
    %c0_i32_0 = arith.constant 0 : i32
    %c0_i32_1 = arith.constant 0 : i32
    return %c0_i32, %c0_i32_0 : i32, i32
  }
  func.func @transform_4(%arg0: i32) -> (i32, i32) {
    %c0_i32 = arith.constant 0 : i32
    %c0_i32_0 = arith.constant 0 : i32
    %c0_i32_1 = arith.constant 0 : i32
    return %c0_i32, %c0_i32_0 : i32, i32
  }
  func.func @transform_5(%arg0: i32) -> (i32, i32) {
    %c0_i32 = arith.constant 0 : i32
    %c0_i32_0 = arith.constant 0 : i32
    return %arg0, %c0_i32 : i32, i32
  }
}

module attributes {stable_mosaic.version = 11 : i64} {
  func.func @_dual_matmul_bias_kernel(%arg0: i32, %arg1: memref<16x12xbf16, #tpu.memory_space<vmem>>, %arg2: memref<16x12xbf16, #tpu.memory_space<vmem>>, %arg3: memref<12x128xbf16, #tpu.memory_space<vmem>>, %arg4: memref<12x128xbf16, #tpu.memory_space<vmem>>, %arg5: memref<1x128xf32, #tpu.memory_space<vmem>>, %arg6: memref<16x128xbf16, #tpu.memory_space<vmem>>) attributes {dimension_semantics = [#tpu.dimension_semantics<parallel>], iteration_bounds = array<i64: 2>, scalar_prefetch = 0 : i64, scratch_operands = 0 : i64, tpu.core_type = #tpu.core_type<tc>, window_params = [{transform_indices = @transform_0, window_bounds = array<i64: 16, 12>}, {transform_indices = @transform_1, window_bounds = array<i64: 16, 12>}, {pipeline_mode = #tpu.pipeline_mode<synchronous>, transform_indices = @transform_2, window_bounds = array<i64: 12, 128>}, {pipeline_mode = #tpu.pipeline_mode<synchronous>, transform_indices = @transform_3, window_bounds = array<i64: 12, 128>}, {pipeline_mode = #tpu.pipeline_mode<synchronous>, transform_indices = @transform_4, window_bounds = array<i64: 1, 128>}, {transform_indices = @transform_5, window_bounds = array<i64: 16, 128>}]} {
    %c0 = arith.constant 0 : index
    %c0_0 = arith.constant 0 : index
    %0 = vector.load %arg1[%c0, %c0_0] : memref<16x12xbf16, #tpu.memory_space<vmem>>, vector<16x12xbf16>
    %c0_1 = arith.constant 0 : index
    %c0_2 = arith.constant 0 : index
    %1 = vector.load %arg3[%c0_1, %c0_2] : memref<12x128xbf16, #tpu.memory_space<vmem>>, vector<12x128xbf16>
    %cst = arith.constant dense<0.000000e+00> : vector<16x128xf32>
    %2 = tpu.matmul %0, %1, %cst {dimension_numbers = #tpu.dot_dimension_numbers<[1], [0], [0], [1], [0, 0, 1, 1], [], []>} : vector<16x12xbf16>, vector<12x128xbf16>, vector<16x128xf32> -> vector<16x128xf32>
    %c0_3 = arith.constant 0 : index
    %c0_4 = arith.constant 0 : index
    %3 = vector.load %arg2[%c0_3, %c0_4] : memref<16x12xbf16, #tpu.memory_space<vmem>>, vector<16x12xbf16>
    %c0_5 = arith.constant 0 : index
    %c0_6 = arith.constant 0 : index
    %4 = vector.load %arg4[%c0_5, %c0_6] : memref<12x128xbf16, #tpu.memory_space<vmem>>, vector<12x128xbf16>
    %cst_7 = arith.constant dense<0.000000e+00> : vector<16x128xf32>
    %5 = tpu.matmul %3, %4, %cst_7 {dimension_numbers = #tpu.dot_dimension_numbers<[1], [0], [0], [1], [0, 0, 1, 1], [], []>} : vector<16x12xbf16>, vector<12x128xbf16>, vector<16x128xf32> -> vector<16x128xf32>
    %6 = arith.addf %2, %5 : vector<16x128xf32>
    %c0_8 = arith.constant 0 : index
    %c0_9 = arith.constant 0 : index
    %7 = vector.load %arg5[%c0_8, %c0_9] : memref<1x128xf32, #tpu.memory_space<vmem>>, vector<1x128xf32>
    %8 = vector.broadcast %7 : vector<1x128xf32> to vector<16x128xf32>
    %9 = arith.addf %6, %8 : vector<16x128xf32>
    %10 = arith.truncf %9 : vector<16x128xf32> to vector<16x128xbf16>
    %c0_10 = arith.constant 0 : index
    %c0_11 = arith.constant 0 : index
    %11 = vector.load %arg6[%c0_10, %c0_11] : memref<16x128xbf16, #tpu.memory_space<vmem>>, vector<16x128xbf16>
    tpu.vector_store %arg6[%c0_10, %c0_11], %10 {strides = array<i32>} : memref<16x128xbf16, #tpu.memory_space<vmem>>, vector<16x128xbf16>,
    return
  }
  func.func @transform_0(%arg0: i32) -> (i32, i32) {
    %c0_i32 = arith.constant 0 : i32
    %c0_i32_0 = arith.constant 0 : i32
    return %arg0, %c0_i32 : i32, i32
  }
  func.func @transform_1(%arg0: i32) -> (i32, i32) {
    %c0_i32 = arith.constant 0 : i32
    %c0_i32_0 = arith.constant 0 : i32
    return %arg0, %c0_i32 : i32, i32
  }
  func.func @transform_2(%arg0: i32) -> (i32, i32) {
    %c0_i32 = arith.constant 0 : i32
    %c0_i32_0 = arith.constant 0 : i32
    %c0_i32_1 = arith.constant 0 : i32
    return %c0_i32, %c0_i32_0 : i32, i32
  }
  func.func @transform_3(%arg0: i32) -> (i32, i32) {
    %c0_i32 = arith.constant 0 : i32
    %c0_i32_0 = arith.constant 0 : i32
    %c0_i32_1 = arith.constant 0 : i32
    return %c0_i32, %c0_i32_0 : i32, i32
  }
  func.func @transform_4(%arg0: i32) -> (i32, i32) {
    %c0_i32 = arith.constant 0 : i32
    %c0_i32_0 = arith.constant 0 : i32
    %c0_i32_1 = arith.constant 0 : i32
    return %c0_i32, %c0_i32_0 : i32, i32
  }
  func.func @transform_5(%arg0: i32) -> (i32, i32) {
    %c0_i32 = arith.constant 0 : i32
    %c0_i32_0 = arith.constant 0 : i32
    return %arg0, %c0_i32 : i32, i32
  }
}

module attributes {stable_mosaic.version = 11 : i64} {
  func.func @_dual_matmul_bias_kernel(%arg0: i32, %arg1: memref<8x12xbf16, #tpu.memory_space<vmem>>, %arg2: memref<8x12xbf16, #tpu.memory_space<vmem>>, %arg3: memref<12x128xbf16, #tpu.memory_space<vmem>>, %arg4: memref<12x128xbf16, #tpu.memory_space<vmem>>, %arg5: memref<1x128xf32, #tpu.memory_space<vmem>>, %arg6: memref<8x128xbf16, #tpu.memory_space<vmem>>) attributes {dimension_semantics = [#tpu.dimension_semantics<parallel>], iteration_bounds = array<i64: 1>, scalar_prefetch = 0 : i64, scratch_operands = 0 : i64, tpu.core_type = #tpu.core_type<tc>, window_params = [{transform_indices = @transform_0, window_bounds = array<i64: 8, 12>}, {transform_indices = @transform_1, window_bounds = array<i64: 8, 12>}, {pipeline_mode = #tpu.pipeline_mode<synchronous>, transform_indices = @transform_2, window_bounds = array<i64: 12, 128>}, {pipeline_mode = #tpu.pipeline_mode<synchronous>, transform_indices = @transform_3, window_bounds = array<i64: 12, 128>}, {pipeline_mode = #tpu.pipeline_mode<synchronous>, transform_indices = @transform_4, window_bounds = array<i64: 1, 128>}, {transform_indices = @transform_5, window_bounds = array<i64: 8, 128>}]} {
    %c0 = arith.constant 0 : index
    %c0_0 = arith.constant 0 : index
    %0 = vector.load %arg1[%c0, %c0_0] : memref<8x12xbf16, #tpu.memory_space<vmem>>, vector<8x12xbf16>
    %c0_1 = arith.constant 0 : index
    %c0_2 = arith.constant 0 : index
    %1 = vector.load %arg3[%c0_1, %c0_2] : memref<12x128xbf16, #tpu.memory_space<vmem>>, vector<12x128xbf16>
    %cst = arith.constant dense<0.000000e+00> : vector<8x128xf32>
    %2 = tpu.matmul %0, %1, %cst {dimension_numbers = #tpu.dot_dimension_numbers<[1], [0], [0], [1], [0, 0, 1, 1], [], []>} : vector<8x12xbf16>, vector<12x128xbf16>, vector<8x128xf32> -> vector<8x128xf32>
    %c0_3 = arith.constant 0 : index
    %c0_4 = arith.constant 0 : index
    %3 = vector.load %arg2[%c0_3, %c0_4] : memref<8x12xbf16, #tpu.memory_space<vmem>>, vector<8x12xbf16>
    %c0_5 = arith.constant 0 : index
    %c0_6 = arith.constant 0 : index
    %4 = vector.load %arg4[%c0_5, %c0_6] : memref<12x128xbf16, #tpu.memory_space<vmem>>, vector<12x128xbf16>
    %cst_7 = arith.constant dense<0.000000e+00> : vector<8x128xf32>
    %5 = tpu.matmul %3, %4, %cst_7 {dimension_numbers = #tpu.dot_dimension_numbers<[1], [0], [0], [1], [0, 0, 1, 1], [], []>} : vector<8x12xbf16>, vector<12x128xbf16>, vector<8x128xf32> -> vector<8x128xf32>
    %6 = arith.addf %2, %5 : vector<8x128xf32>
    %c0_8 = arith.constant 0 : index
    %c0_9 = arith.constant 0 : index
    %7 = vector.load %arg5[%c0_8, %c0_9] : memref<1x128xf32, #tpu.memory_space<vmem>>, vector<1x128xf32>
    %8 = vector.broadcast %7 : vector<1x128xf32> to vector<8x128xf32>
    %9 = arith.addf %6, %8 : vector<8x128xf32>
    %10 = arith.truncf %9 : vector<8x128xf32> to vector<8x128xbf16>
    %c0_10 = arith.constant 0 : index
    %c0_11 = arith.constant 0 : index
    %11 = vector.load %arg6[%c0_10, %c0_11] : memref<8x128xbf16, #tpu.memory_space<vmem>>, vector<8x128xbf16>
    tpu.vector_store %arg6[%c0_10, %c0_11], %10 {strides = array<i32>} : memref<8x128xbf16, #tpu.memory_space<vmem>>, vector<8x128xbf16>,
    return
  }
  func.func @transform_0(%arg0: i32) -> (i32, i32) {
    %c0_i32 = arith.constant 0 : i32
    %c0_i32_0 = arith.constant 0 : i32
    return %arg0, %c0_i32 : i32, i32
  }
  func.func @transform_1(%arg0: i32) -> (i32, i32) {
    %c0_i32 = arith.constant 0 : i32
    %c0_i32_0 = arith.constant 0 : i32
    return %arg0, %c0_i32 : i32, i32
  }
  func.func @transform_2(%arg0: i32) -> (i32, i32) {
    %c0_i32 = arith.constant 0 : i32
    %c0_i32_0 = arith.constant 0 : i32
    %c0_i32_1 = arith.constant 0 : i32
    return %c0_i32, %c0_i32_0 : i32, i32
  }
  func.func @transform_3(%arg0: i32) -> (i32, i32) {
    %c0_i32 = arith.constant 0 : i32
    %c0_i32_0 = arith.constant 0 : i32
    %c0_i32_1 = arith.constant 0 : i32
    return %c0_i32, %c0_i32_0 : i32, i32
  }
  func.func @transform_4(%arg0: i32) -> (i32, i32) {
    %c0_i32 = arith.constant 0 : i32
    %c0_i32_0 = arith.constant 0 : i32
    %c0_i32_1 = arith.constant 0 : i32
    return %c0_i32, %c0_i32_0 : i32, i32
  }
  func.func @transform_5(%arg0: i32) -> (i32, i32) {
    %c0_i32 = arith.constant 0 : i32
    %c0_i32_0 = arith.constant 0 : i32
    return %arg0, %c0_i32 : i32, i32
  }
}

module attributes {stable_mosaic.version = 11 : i64} {
  func.func @_dual_matmul_bias_kernel(%arg0: i32, %arg1: memref<2x12xbf16, #tpu.memory_space<vmem>>, %arg2: memref<2x12xbf16, #tpu.memory_space<vmem>>, %arg3: memref<12x128xbf16, #tpu.memory_space<vmem>>, %arg4: memref<12x128xbf16, #tpu.memory_space<vmem>>, %arg5: memref<1x128xf32, #tpu.memory_space<vmem>>, %arg6: memref<2x128xbf16, #tpu.memory_space<vmem>>) attributes {dimension_semantics = [#tpu.dimension_semantics<parallel>], iteration_bounds = array<i64: 1>, scalar_prefetch = 0 : i64, scratch_operands = 0 : i64, tpu.core_type = #tpu.core_type<tc>, window_params = [{transform_indices = @transform_0, window_bounds = array<i64: 2, 12>}, {transform_indices = @transform_1, window_bounds = array<i64: 2, 12>}, {pipeline_mode = #tpu.pipeline_mode<synchronous>, transform_indices = @transform_2, window_bounds = array<i64: 12, 128>}, {pipeline_mode = #tpu.pipeline_mode<synchronous>, transform_indices = @transform_3, window_bounds = array<i64: 12, 128>}, {pipeline_mode = #tpu.pipeline_mode<synchronous>, transform_indices = @transform_4, window_bounds = array<i64: 1, 128>}, {transform_indices = @transform_5, window_bounds = array<i64: 2, 128>}]} {
    %c0 = arith.constant 0 : index
    %c0_0 = arith.constant 0 : index
    %0 = vector.load %arg1[%c0, %c0_0] : memref<2x12xbf16, #tpu.memory_space<vmem>>, vector<2x12xbf16>
    %c0_1 = arith.constant 0 : index
    %c0_2 = arith.constant 0 : index
    %1 = vector.load %arg3[%c0_1, %c0_2] : memref<12x128xbf16, #tpu.memory_space<vmem>>, vector<12x128xbf16>
    %cst = arith.constant dense<0.000000e+00> : vector<2x128xf32>
    %2 = tpu.matmul %0, %1, %cst {dimension_numbers = #tpu.dot_dimension_numbers<[1], [0], [0], [1], [0, 0, 1, 1], [], []>} : vector<2x12xbf16>, vector<12x128xbf16>, vector<2x128xf32> -> vector<2x128xf32>
    %c0_3 = arith.constant 0 : index
    %c0_4 = arith.constant 0 : index
    %3 = vector.load %arg2[%c0_3, %c0_4] : memref<2x12xbf16, #tpu.memory_space<vmem>>, vector<2x12xbf16>
    %c0_5 = arith.constant 0 : index
    %c0_6 = arith.constant 0 : index
    %4 = vector.load %arg4[%c0_5, %c0_6] : memref<12x128xbf16, #tpu.memory_space<vmem>>, vector<12x128xbf16>
    %cst_7 = arith.constant dense<0.000000e+00> : vector<2x128xf32>
    %5 = tpu.matmul %3, %4, %cst_7 {dimension_numbers = #tpu.dot_dimension_numbers<[1], [0], [0], [1], [0, 0, 1, 1], [], []>} : vector<2x12xbf16>, vector<12x128xbf16>, vector<2x128xf32> -> vector<2x128xf32>
    %6 = arith.addf %2, %5 : vector<2x128xf32>
    %c0_8 = arith.constant 0 : index
    %c0_9 = arith.constant 0 : index
    %7 = vector.load %arg5[%c0_8, %c0_9] : memref<1x128xf32, #tpu.memory_space<vmem>>, vector<1x128xf32>
    %8 = vector.broadcast %7 : vector<1x128xf32> to vector<2x128xf32>
    %9 = arith.addf %6, %8 : vector<2x128xf32>
    %10 = arith.truncf %9 : vector<2x128xf32> to vector<2x128xbf16>
    %c0_10 = arith.constant 0 : index
    %c0_11 = arith.constant 0 : index
    %11 = vector.load %arg6[%c0_10, %c0_11] : memref<2x128xbf16, #tpu.memory_space<vmem>>, vector<2x128xbf16>
    tpu.vector_store %arg6[%c0_10, %c0_11], %10 {strides = array<i32>} : memref<2x128xbf16, #tpu.memory_space<vmem>>, vector<2x128xbf16>,
    return
  }
  func.func @transform_0(%arg0: i32) -> (i32, i32) {
    %c0_i32 = arith.constant 0 : i32
    %c0_i32_0 = arith.constant 0 : i32
    return %arg0, %c0_i32 : i32, i32
  }
  func.func @transform_1(%arg0: i32) -> (i32, i32) {
    %c0_i32 = arith.constant 0 : i32
    %c0_i32_0 = arith.constant 0 : i32
    return %arg0, %c0_i32 : i32, i32
  }
  func.func @transform_2(%arg0: i32) -> (i32, i32) {
    %c0_i32 = arith.constant 0 : i32
    %c0_i32_0 = arith.constant 0 : i32
    %c0_i32_1 = arith.constant 0 : i32
    return %c0_i32, %c0_i32_0 : i32, i32
  }
  func.func @transform_3(%arg0: i32) -> (i32, i32) {
    %c0_i32 = arith.constant 0 : i32
    %c0_i32_0 = arith.constant 0 : i32
    %c0_i32_1 = arith.constant 0 : i32
    return %c0_i32, %c0_i32_0 : i32, i32
  }
  func.func @transform_4(%arg0: i32) -> (i32, i32) {
    %c0_i32 = arith.constant 0 : i32
    %c0_i32_0 = arith.constant 0 : i32
    %c0_i32_1 = arith.constant 0 : i32
    return %c0_i32, %c0_i32_0 : i32, i32
  }
  func.func @transform_5(%arg0: i32) -> (i32, i32) {
    %c0_i32 = arith.constant 0 : i32
    %c0_i32_0 = arith.constant 0 : i32
    return %arg0, %c0_i32 : i32, i32
  }
}

module attributes {stable_mosaic.version = 11 : i64} {
  func.func @_score_heads_kernel(%arg0: i32, %arg1: i32, %arg2: memref<1x32x1024xbf16, #tpu.memory_space<vmem>>, %arg3: memref<1x1024x64xbf16, #tpu.memory_space<vmem>>, %arg4: memref<1x64x32xf32, #tpu.memory_space<vmem>>, %arg5: memref<1x1x1xf32, #tpu.memory_space<vmem>>, %arg6: memref<1x64x64xf32, #tpu.memory_space<vmem>>) attributes {dimension_semantics = [#tpu.dimension_semantics<parallel>, #tpu.dimension_semantics<parallel>], iteration_bounds = array<i64: 6, 2>, scalar_prefetch = 0 : i64, scratch_operands = 0 : i64, tpu.core_type = #tpu.core_type<tc>, window_params = [{transform_indices = @transform_0, window_bounds = array<i64: 1, 32, 1024>}, {transform_indices = @transform_1, window_bounds = array<i64: 1, 1024, 64>}, {transform_indices = @transform_2, window_bounds = array<i64: 1, 64, 32>}, {transform_indices = @transform_3, window_bounds = array<i64: 1, 1, 1>}, {transform_indices = @transform_4, window_bounds = array<i64: 1, 64, 64>}]} {
    %c0 = arith.constant 0 : index
    %c0_0 = arith.constant 0 : index
    %c0_1 = arith.constant 0 : index
    %0 = vector.load %arg2[%c0, %c0_0, %c0_1] : memref<1x32x1024xbf16, #tpu.memory_space<vmem>>, vector<1x32x1024xbf16>
    %1 = vector.shape_cast %0 : vector<1x32x1024xbf16> to vector<32x1024xbf16>
    %c0_2 = arith.constant 0 : index
    %c0_3 = arith.constant 0 : index
    %c0_4 = arith.constant 0 : index
    %2 = vector.load %arg3[%c0_2, %c0_3, %c0_4] : memref<1x1024x64xbf16, #tpu.memory_space<vmem>>, vector<1x1024x64xbf16>
    %3 = vector.shape_cast %2 : vector<1x1024x64xbf16> to vector<1024x64xbf16>
    %cst = arith.constant dense<0.000000e+00> : vector<32x64xf32>
    %4 = tpu.matmul %1, %3, %cst {dimension_numbers = #tpu.dot_dimension_numbers<[1], [0], [0], [1], [0, 0, 1, 1], [], []>} : vector<32x1024xbf16>, vector<1024x64xbf16>, vector<32x64xf32> -> vector<32x64xf32>
    %c0_5 = arith.constant 0 : index
    %c0_6 = arith.constant 0 : index
    %c0_7 = arith.constant 0 : index
    %5 = vector.load %arg4[%c0_5, %c0_6, %c0_7] : memref<1x64x32xf32, #tpu.memory_space<vmem>>, vector<1x64x32xf32>
    %6 = vector.shape_cast %5 : vector<1x64x32xf32> to vector<64x32xf32>
    %cst_8 = arith.constant dense<0.000000e+00> : vector<64x64xf32>
    %7 = tpu.matmul %6, %4, %cst_8 {dimension_numbers = #tpu.dot_dimension_numbers<[1], [0], [0], [1], [0, 0, 1, 1], [], []>} : vector<64x32xf32>, vector<32x64xf32>, vector<64x64xf32> -> vector<64x64xf32>
    %c0_9 = arith.constant 0 : index
    %c0_10 = arith.constant 0 : index
    %c0_11 = arith.constant 0 : index
    %8 = vector.load %arg5[%c0_9, %c0_10, %c0_11] : memref<1x1x1xf32, #tpu.memory_space<vmem>>, vector<1x1x1xf32>
    %9 = vector.shape_cast %8 : vector<1x1x1xf32> to vector<1x1xf32>
    %10 = vector.broadcast %9 : vector<1x1xf32> to vector<64x64xf32>
    %11 = arith.addf %7, %10 : vector<64x64xf32>
    %12 = arith.negf %11 : vector<64x64xf32>
    %13 = math.exp %12 : vector<64x64xf32>
    %cst_12 = arith.constant 1.000000e+00 : f32
    %14 = vector.broadcast %cst_12 : f32 to vector<64x64xf32>
    %15 = arith.addf %14, %13 : vector<64x64xf32>
    %16 = arith.divf %14, %15 : vector<64x64xf32>
    %c0_13 = arith.constant 0 : index
    %c0_14 = arith.constant 0 : index
    %c0_15 = arith.constant 0 : index
    %17 = vector.load %arg6[%c0_13, %c0_14, %c0_15] : memref<1x64x64xf32, #tpu.memory_space<vmem>>, vector<1x64x64xf32>
    %18 = vector.shape_cast %17 : vector<1x64x64xf32> to vector<64x64xf32>
    %19 = vector.shape_cast %16 : vector<64x64xf32> to vector<1x64x64xf32>
    tpu.vector_store %arg6[%c0_13, %c0_14, %c0_15], %19 {strides = array<i32>} : memref<1x64x64xf32, #tpu.memory_space<vmem>>, vector<1x64x64xf32>,
    return
  }
  func.func @transform_0(%arg0: i32, %arg1: i32) -> (i32, i32, i32) {
    %c2_i32 = arith.constant 2 : i32
    %0 = arith.muli %arg0, %c2_i32 : i32
    %1 = arith.addi %0, %arg1 : i32
    %c0_i32 = arith.constant 0 : i32
    %c0_i32_0 = arith.constant 0 : i32
    %c0_i32_1 = arith.constant 0 : i32
    return %1, %c0_i32, %c0_i32_0 : i32, i32, i32
  }
  func.func @transform_1(%arg0: i32, %arg1: i32) -> (i32, i32, i32) {
    %c0_i32 = arith.constant 0 : i32
    %c0_i32_0 = arith.constant 0 : i32
    %c0_i32_1 = arith.constant 0 : i32
    return %arg0, %c0_i32, %c0_i32_0 : i32, i32, i32
  }
  func.func @transform_2(%arg0: i32, %arg1: i32) -> (i32, i32, i32) {
    %c0_i32 = arith.constant 0 : i32
    %c0_i32_0 = arith.constant 0 : i32
    %c0_i32_1 = arith.constant 0 : i32
    return %arg0, %c0_i32, %c0_i32_0 : i32, i32, i32
  }
  func.func @transform_3(%arg0: i32, %arg1: i32) -> (i32, i32, i32) {
    %c0_i32 = arith.constant 0 : i32
    %c0_i32_0 = arith.constant 0 : i32
    %c0_i32_1 = arith.constant 0 : i32
    return %arg0, %c0_i32, %c0_i32_0 : i32, i32, i32
  }
  func.func @transform_4(%arg0: i32, %arg1: i32) -> (i32, i32, i32) {
    %c2_i32 = arith.constant 2 : i32
    %0 = arith.muli %arg0, %c2_i32 : i32
    %1 = arith.addi %0, %arg1 : i32
    %c0_i32 = arith.constant 0 : i32
    %c0_i32_0 = arith.constant 0 : i32
    %c0_i32_1 = arith.constant 0 : i32
    return %1, %c0_i32, %c0_i32_0 : i32, i32, i32
  }
}

</mosaic_0001>

<llo_original>
// kernel: net_forward.6
$region0: #{net_forward.6}
  #allocation0 [shape = 'u32[]', space=smem, size = 0x4, offset = 0x4, fixed_abs, tag = 'smem constant byte address 0x4 - core index']
  #allocation1 [shape = 'u32[144,128]{1,0:T(1,128)}', space=vmem, size = 0x12000, scoped, tag = 'internal scratch']
  %s0 = inlined_call_operand.vmem [shape: bf16[512,12], index: 0, kind: input, shape index: {}]
  %s1 = inlined_call_operand.vmem [shape: bf16[512,12], index: 1, kind: input, shape index: {}]
  %s2 = inlined_call_operand.vmem [shape: bf16[12,128], index: 2, kind: input, shape index: {}]
  %s3 = inlined_call_operand.vmem [shape: bf16[12,128], index: 3, kind: input, shape index: {}]
  %s4 = inlined_call_operand.vmem [shape: f32[1,128], index: 4, kind: input, shape index: {}]
  %s5 = inlined_call_operand.vmem [shape: bf16[512,128], index: 5, kind: output, shape index: {}]
  %s6 = sld [smem:[#allocation0]]
  $region53: #{net_forward.6} parent=0
    _
  %s8 = ssub.s32 1, %s6
  %s9 = scalar_select 0, %s8, %s6
  loop: start=0, step=1, limit=4
  $region2: #{net_forward.6} parent=0 // loop_pre_header
    _
  $region3: #{net_forward.6} parent=0 // loop_header
    %s11 = sphi 0, %s15
    %p12 = scmp.ge.s32.totalorder %s11, 4
    %s21 = sphi 0, %s23
    %s24 = sphi 0, %s21
    %s25 = sphi 0, %s24
    %s41 = sphi 0, %s25
    %s47 = sphi 0, %s49
    %s50 = sphi 0, %s47
    %s51 = sphi 0, %s50
    %s67 = sphi 0, %s51
    %s71 = sphi 0, %s71
    %s73 = sphi 0, %s71
    %s74 = sphi 0, %s73
    %s88 = sphi 0, %s74
    %s92 = sphi 0, %s92
    %s94 = sphi 0, %s92
    %s95 = sphi 0, %s94
    %s109 = sphi 0, %s95
    %s113 = sphi 0, %s113
    %s115 = sphi 0, %s113
    %s116 = sphi 0, %s115
    %s130 = sphi 0, %s116
    %s136 = sphi 0, %s138
    %s139 = sphi 0, %s136
    %s140 = sphi 0, %s139
    %s156 = sphi 0, %s140
  $region4: #{net_forward.6} parent=0 // loop_header_branch
    %14 = sbr.rel (%p12) target = $region8
  $region5: #{net_forward.6} parent=0 // loop_body
    %s16 = ssub.s32 %s11, 1
    %s17 = ssub.s32 %s11, 2
    %s18 = sadd.s32 %s11, 1
    %s19 = ssub.s32 %s11, %s18
    %p20 = scmp.eq.s32.totalorder %s19, 0
    %s22 = sadd.s32 %s21, 1
    %s23 = scalar_select %p20, %s21, %s22
    %p26 = pneg %p20
    %p27 = scmp.eq.s32.totalorder %s11, 1
    %p28 = por %p26, %p27
    %p29 = scmp.ne.s32.totalorder %s21, %s24
    %p30 = scmp.eq.s32.totalorder %s11, 0
    %p31 = por %p29, %p30
    %p32 = scmp.ne.s32.totalorder %s21, %s24
    %p33 = scmp.eq.s32.totalorder %s16, 1
    %p34 = por %p32, %p33
    %p35 = scmp.ne.s32.totalorder %s24, %s25
    %p36 = scmp.eq.s32.totalorder %s16, 0
    %p37 = por %p35, %p36
    %p38 = scmp.ne.s32.totalorder %s24, %s25
    %p39 = scmp.eq.s32.totalorder %s17, 1
    %p40 = por %p38, %p39
    %p42 = scmp.ne.s32.totalorder %s25, %s41
    %p43 = scmp.eq.s32.totalorder %s17, 0
    %p44 = por %p42, %p43
    %s45 = ssub.s32 %s11, %s18
    %p46 = scmp.eq.s32.totalorder %s45, 0
    %s48 = sadd.s32 %s47, 1
    %s49 = scalar_select %p46, %s47, %s48
    %p52 = pneg %p46
    %p53 = scmp.eq.s32.totalorder %s11, 1
    %p54 = por %p52, %p53
    %p55 = scmp.ne.s32.totalorder %s47, %s50
    %p56 = scmp.eq.s32.totalorder %s11, 0
    %p57 = por %p55, %p56
    %p58 = scmp.ne.s32.totalorder %s47, %s50
    %p59 = scmp.eq.s32.totalorder %s16, 1
    %p60 = por %p58, %p59
    %p61 = scmp.ne.s32.totalorder %s50, %s51
    %p62 = scmp.eq.s32.totalorder %s16, 0
    %p63 = por %p61, %p62
    %p64 = scmp.ne.s32.totalorder %s50, %s51
    %p65 = scmp.eq.s32.totalorder %s17, 1
    %p66 = por %p64, %p65
    %p68 = scmp.ne.s32.totalorder %s51, %s67
    %p69 = scmp.eq.s32.totalorder %s17, 0
    %p70 = por %p68, %p69
    %s72 = sadd.s32 %s71, 1
    %p75 = scmp.eq.s32.totalorder %s11, 1
    %p76 = scmp.ne.s32.totalorder %s71, %s73
    %p77 = scmp.eq.s32.totalorder %s11, 0
    %p78 = por %p76, %p77
    %p79 = scmp.ne.s32.totalorder %s71, %s73
    %p80 = scmp.eq.s32.totalorder %s16, 1
    %p81 = por %p79, %p80
    %p82 = scmp.ne.s32.totalorder %s73, %s74
    %p83 = scmp.eq.s32.totalorder %s16, 0
    %p84 = por %p82, %p83
    %p85 = scmp.ne.s32.totalorder %s73, %s74
    %p86 = scmp.eq.s32.totalorder %s17, 1
    %p87 = por %p85, %p86
    %p89 = scmp.ne.s32.totalorder %s74, %s88
    %p90 = scmp.eq.s32.totalorder %s17, 0
    %p91 = por %p89, %p90
    %s93 = sadd.s32 %s92, 1
    %p96 = scmp.eq.s32.totalorder %s11, 1
    %p97 = scmp.ne.s32.totalorder %s92, %s94
    %p98 = scmp.eq.s32.totalorder %s11, 0
    %p99 = por %p97, %p98
    %p100 = scmp.ne.s32.totalorder %s92, %s94
    %p101 = scmp.eq.s32.totalorder %s16, 1
    %p102 = por %p100, %p101
    %p103 = scmp.ne.s32.totalorder %s94, %s95
    %p104 = scmp.eq.s32.totalorder %s16, 0
    %p105 = por %p103, %p104
    %p106 = scmp.ne.s32.totalorder %s94, %s95
    %p107 = scmp.eq.s32.totalorder %s17, 1
    %p108 = por %p106, %p107
    %p110 = scmp.ne.s32.totalorder %s95, %s109
    %p111 = scmp.eq.s32.totalorder %s17, 0
    %p112 = por %p110, %p111
    %s114 = sadd.s32 %s113, 1
    %p117 = scmp.eq.s32.totalorder %s11, 1
    %p118 = scmp.ne.s32.totalorder %s113, %s115
    %p119 = scmp.eq.s32.totalorder %s11, 0
    %p120 = por %p118, %p119
    %p121 = scmp.ne.s32.totalorder %s113, %s115
    %p122 = scmp.eq.s32.totalorder %s16, 1
    %p123 = por %p121, %p122
    %p124 = scmp.ne.s32.totalorder %s115, %s116
    %p125 = scmp.eq.s32.totalorder %s16, 0
    %p126 = por %p124, %p125
    %p127 = scmp.ne.s32.totalorder %s115, %s116
    %p128 = scmp.eq.s32.totalorder %s17, 1
    %p129 = por %p127, %p128
    %p131 = scmp.ne.s32.totalorder %s116, %s130
    %p132 = scmp.eq.s32.totalorder %s17, 0
    %p133 = por %p131, %p132
    %s134 = ssub.s32 %s11, %s18
    %p135 = scmp.eq.s32.totalorder %s134, 0
    %s137 = sadd.s32 %s136, 1
    %s138 = scalar_select %p135, %s136, %s137
    %p141 = pneg %p135
    %p142 = scmp.eq.s32.totalorder %s11, 1
    %p143 = por %p141, %p142
    %p144 = scmp.ne.s32.totalorder %s136, %s139
    %p145 = scmp.eq.s32.totalorder %s11, 0
    %p146 = por %p144, %p145
    %p147 = scmp.ne.s32.totalorder %s136, %s139
    %p148 = scmp.eq.s32.totalorder %s16, 1
    %p149 = por %p147, %p148
    %p150 = scmp.ne.s32.totalorder %s139, %s140
    %p151 = scmp.eq.s32.totalorder %s16, 0
    %p152 = por %p150, %p151
    %p153 = scmp.ne.s32.totalorder %s139, %s140
    %p154 = scmp.eq.s32.totalorder %s17, 1
    %p155 = por %p153, %p154
    %p157 = scmp.ne.s32.totalorder %s140, %s156
    %p158 = scmp.eq.s32.totalorder %s17, 0
    %p159 = por %p157, %p158
    %p160 = scmp.le.s32.totalorder 1, %s11
    %p161 = scmp.lt.s32.totalorder %s11, 3
    %p162 = pnand %p160, %p161
    %p163 = pneg %p162
    // Predicated region
    $region9: #{net_forward.6} parent=5 // pred_check
      _
    $region10: #{net_forward.6} parent=5 // pred_check_branch
      %165 = sbr.rel (%p162) target = $region12
    $region11: #{net_forward.6} parent=5 // pred_region
      %s166 = ssub.s32 %s11, 1
      // Predicated region
      $region13: #{net_forward.6} parent=11 // pred_check
        %p167 = pneg %p84
      $region14: #{net_forward.6} parent=11 // pred_check_branch
        %169 = sbr.rel (%p167) target = $region16
      $region15: #{net_forward.6} parent=11 // pred_region
        _
      $region16: #{net_forward.6} parent=11 // pred_fallthru
        _
      // Predicated region
      $region17: #{net_forward.6} parent=11 // pred_check
        %p170 = pneg %p105
      $region18: #{net_forward.6} parent=11 // pred_check_branch
        %172 = sbr.rel (%p170) target = $region20
      $region19: #{net_forward.6} parent=11 // pred_region
        _
      $region20: #{net_forward.6} parent=11 // pred_fallthru
        _
      // Predicated region
      $region21: #{net_forward.6} parent=11 // pred_check
        %p173 = pneg %p126
      $region22: #{net_forward.6} parent=11 // pred_check_branch
        %175 = sbr.rel (%p173) target = $region24
      $region23: #{net_forward.6} parent=11 // pred_region
        _
      $region24: #{net_forward.6} parent=11 // pred_fallthru
        _
    $region12: #{net_forward.6} parent=5 // pred_fallthru
      _
    %p176 = scmp.lt.s32.totalorder %s11, 2
    // Predicated region
    $region25: #{net_forward.6} parent=5 // pred_check
      %p177 = pneg %p176
    $region26: #{net_forward.6} parent=5 // pred_check_branch
      %179 = sbr.rel (%p177) target = $region28
    $region27: #{net_forward.6} parent=5 // pred_region
      // Predicated region
      $region29: #{net_forward.6} parent=27 // pred_check
        %p180 = pneg %p31
      $region30: #{net_forward.6} parent=27 // pred_check_branch
        %182 = sbr.rel (%p180) target = $region32
      $region31: #{net_forward.6} parent=27 // pred_region
        %s183 = smul.u32 32, %s11
        %p184 = scmp.lt.s32.totalorder %s183, 63
        %s185 = scalar_select %p184, %s183, 63
        %s186 = smul.addr %s185, 4
        %s187 = scalar_lea.vmem %s0, %s186
        %s188 = smul.u32 32, %s11
      $region32: #{net_forward.6} parent=27 // pred_fallthru
        _
      // Predicated region
      $region33: #{net_forward.6} parent=27 // pred_check
        %p189 = pneg %p57
      $region34: #{net_forward.6} parent=27 // pred_check_branch
        %191 = sbr.rel (%p189) target = $region36
      $region35: #{net_forward.6} parent=27 // pred_region
        %s192 = smul.u32 32, %s11
        %p193 = scmp.lt.s32.totalorder %s192, 63
        %s194 = scalar_select %p193, %s192, 63
        %s195 = smul.addr %s194, 4
        %s196 = scalar_lea.vmem %s1, %s195
        %s197 = smul.u32 32, %s11
      $region36: #{net_forward.6} parent=27 // pred_fallthru
        _
    $region28: #{net_forward.6} parent=5 // pred_fallthru
      _
    %p198 = scmp.le.s32.totalorder 1, %s11
    %p199 = scmp.lt.s32.totalorder %s11, 3
    %p200 = pnand %p198, %p199
    %p201 = pneg %p200
    // Predicated region
    $region37: #{net_forward.6} parent=5 // pred_check
      _
    $region38: #{net_forward.6} parent=5 // pred_check_branch
      %203 = sbr.rel (%p200) target = $region40
    $region39: #{net_forward.6} parent=5 // pred_region
      %s204 = ssub.s32 %s11, 1
      %s205 = smul.u32 32, %s16
      %p206 = scmp.lt.s32.totalorder %s205, 63
      %s207 = scalar_select %p206, %s205, 63
      %s208 = smul.addr %s207, 4
      %s209 = scalar_lea.vmem %s0, %s208
      %p210 = pneg %p37
      %p211 = pneg %p34
      %s212 = smul.u32 32, %s16
      %p213 = scmp.lt.s32.totalorder %s212, 63
      %s214 = scalar_select %p213, %s212, 63
      %s215 = smul.addr %s214, 4
      %s216 = scalar_lea.vmem %s1, %s215
      %p217 = pneg %p63
      %p218 = pneg %p60
      %p219 = pneg %p84
      %p220 = pneg %p81
      %p221 = pneg %p105
      %p222 = pneg %p102
      %p223 = pneg %p126
      %p224 = pneg %p123
      %p225 = pneg %p152
      %p226 = pneg %p149
      %s227 = smul.u32 32, %s16
      %p228 = scmp.lt.s32.totalorder %s227, 63
      %s229 = scalar_select %p228, %s227, 63
      %s230 = smul.addr %s229, 4
      %s231 = scalar_lea.vmem %s5, %s230
      %s232 = smul.u32 32, %s16
      %p233 = scmp.lt.s32.totalorder %s232, 63
      %s234 = scalar_select %p233, %s232, 63
      %s235 = smul.addr %s234, 4
      %s236 = scalar_lea.vmem %s0, %s235
      %s237 = smul.u32 32, %s16
      %s238 = smul.u32 32, %s16
      %p239 = scmp.lt.s32.totalorder %s238, 63
      %s240 = scalar_select %p239, %s238, 63
      %s241 = smul.addr %s240, 4
      %s242 = scalar_lea.vmem %s1, %s241
      %s243 = smul.u32 32, %s16
      %s244 = smul.u32 32, %s16
      %p245 = scmp.lt.s32.totalorder %s244, 63
      %s246 = scalar_select %p245, %s244, 63
      %s247 = smul.addr %s246, 4
      %s248 = scalar_lea.vmem %s5, %s247
      %s249 = smul.u32 32, %s16
      %v251 = vld [vmem:[%s236] sm:$0xf]
      %v252 = vld [vmem:[%s236 + $0x4] sm:$0xf]
      %v253 = vld [vmem:[%s236 + $0x8] sm:$0xf]
      %v254 = vld [vmem:[%s236 + $0xc] sm:$0xf]
      %v255 = vld [vmem:[%s236 + $0x10] sm:$0xf]
      %v256 = vld [vmem:[%s236 + $0x14] sm:$0xf]
      %v257 = vld [vmem:[%s236 + $0x18] sm:$0xf]
      %v258 = vld [vmem:[%s236 + $0x1c] sm:$0xf]
      %v259 = vld [vmem:[%s236 + $0x20] sm:$0xf]
      %v260 = vld [vmem:[%s236 + $0x24] sm:$0xf]
      %v261 = vld [vmem:[%s236 + $0x28] sm:$0xf]
      %v262 = vld [vmem:[%s236 + $0x2c] sm:$0xf]
      %v263 = vld [vmem:[%s236 + $0x30] sm:$0xf]
      %v264 = vld [vmem:[%s236 + $0x34] sm:$0xf]
      %v265 = vld [vmem:[%s236 + $0x38] sm:$0xf]
      %v266 = vld [vmem:[%s236 + $0x3c] sm:$0xf]
      %v267 = vld [vmem:[%s236 + $0x40] sm:$0xf]
      %v268 = vld [vmem:[%s236 + $0x44] sm:$0xf]
      %v269 = vld [vmem:[%s236 + $0x48] sm:$0xf]
      %v270 = vld [vmem:[%s236 + $0x4c] sm:$0xf]
      %v271 = vld [vmem:[%s236 + $0x50] sm:$0xf]
      %v272 = vld [vmem:[%s236 + $0x54] sm:$0xf]
      %v273 = vld [vmem:[%s236 + $0x58] sm:$0xf]
      %v274 = vld [vmem:[%s236 + $0x5c] sm:$0xf]
      %v275 = vld [vmem:[%s236 + $0x60] sm:$0xf]
      %v276 = vld [vmem:[%s236 + $0x64] sm:$0xf]
      %v277 = vld [vmem:[%s236 + $0x68] sm:$0xf]
      %v278 = vld [vmem:[%s236 + $0x6c] sm:$0xf]
      %v279 = vld [vmem:[%s236 + $0x70] sm:$0xf]
      %v280 = vld [vmem:[%s236 + $0x74] sm:$0xf]
      %v281 = vld [vmem:[%s236 + $0x78] sm:$0xf]
      %v282 = vld [vmem:[%s236 + $0x7c] sm:$0xf]
      %v283 = vld [vmem:[%s2] sm:$0xf]
      %v284 = vld [vmem:[%s2 + $0x4] sm:$0x3]
      %v285 = vld [vmem:[%s242] sm:$0xf]
      %v286 = vld [vmem:[%s242 + $0x4] sm:$0xf]
      %v287 = vld [vmem:[%s242 + $0x8] sm:$0xf]
      %v288 = vld [vmem:[%s242 + $0xc] sm:$0xf]
      %v289 = vld [vmem:[%s242 + $0x10] sm:$0xf]
      %v290 = vld [vmem:[%s242 + $0x14] sm:$0xf]
      %v291 = vld [vmem:[%s242 + $0x18] sm:$0xf]
      %v292 = vld [vmem:[%s242 + $0x1c] sm:$0xf]
      %v293 = vld [vmem:[%s242 + $0x20] sm:$0xf]
      %v294 = vld [vmem:[%s242 + $0x24] sm:$0xf]
      %v295 = vld [vmem:[%s242 + $0x28] sm:$0xf]
      %v296 = vld [vmem:[%s242 + $0x2c] sm:$0xf]
      %v297 = vld [vmem:[%s242 + $0x30] sm:$0xf]
      %v298 = vld [vmem:[%s242 + $0x34] sm:$0xf]
      %v299 = vld [vmem:[%s242 + $0x38] sm:$0xf]
      %v300 = vld [vmem:[%s242 + $0x3c] sm:$0xf]
      %v301 = vld [vmem:[%s242 + $0x40] sm:$0xf]
      %v302 = vld [vmem:[%s242 + $0x44] sm:$0xf]
      %v303 = vld [vmem:[%s242 + $0x48] sm:$0xf]
      %v304 = vld [vmem:[%s242 + $0x4c] sm:$0xf]
      %v305 = vld [vmem:[%s242 + $0x50] sm:$0xf]
      %v306 = vld [vmem:[%s242 + $0x54] sm:$0xf]
      %v307 = vld [vmem:[%s242 + $0x58] sm:$0xf]
      %v308 = vld [vmem:[%s242 + $0x5c] sm:$0xf]
      %v309 = vld [vmem:[%s242 + $0x60] sm:$0xf]
      %v310 = vld [vmem:[%s242 + $0x64] sm:$0xf]
      %v311 = vld [vmem:[%s242 + $0x68] sm:$0xf]
      %v312 = vld [vmem:[%s242 + $0x6c] sm:$0xf]
      %v313 = vld [vmem:[%s242 + $0x70] sm:$0xf]
      %v314 = vld [vmem:[%s242 + $0x74] sm:$0xf]
      %v315 = vld [vmem:[%s242 + $0x78] sm:$0xf]
      %v316 = vld [vmem:[%s242 + $0x7c] sm:$0xf]
      %v317 = vld [vmem:[%s3] sm:$0xf]
      %v318 = vld [vmem:[%s3 + $0x4] sm:$0x3]
      %v351 = vunpack.c.l.b16 %v285
      %v352 = vunpack.c.l.b16 %v286
      %v353 = vunpack.c.l.b16 %v287
      %v354 = vunpack.c.l.b16 %v288
      %v355 = vunpack.c.l.b16 %v289
      %v356 = vunpack.c.l.b16 %v290
      %v357 = vunpack.c.l.b16 %v291
      %v358 = vunpack.c.l.b16 %v292
      %v359 = vunpack.c.l.b16 %v293
      %v360 = vunpack.c.l.b16 %v294
      %v361 = vunpack.c.l.b16 %v295
      %v362 = vunpack.c.l.b16 %v296
      %v363 = vunpack.c.l.b16 %v297
      %v364 = vunpack.c.l.b16 %v298
      %v365 = vunpack.c.l.b16 %v299
      %v366 = vunpack.c.l.b16 %v300
      %v367 = vunpack.c.l.b16 %v301
      %v368 = vunpack.c.l.b16 %v302
      %v369 = vunpack.c.l.b16 %v303
      %v370 = vunpack.c.l.b16 %v304
      %v371 = vunpack.c.l.b16 %v305
      %v372 = vunpack.c.l.b16 %v306
      %v373 = vunpack.c.l.b16 %v307
      %v374 = vunpack.c.l.b16 %v308
      %v375 = vunpack.c.l.b16 %v309
      %v376 = vunpack.c.l.b16 %v310
      %v377 = vunpack.c.l.b16 %v311
      %v378 = vunpack.c.l.b16 %v312
      %v379 = vunpack.c.l.b16 %v313
      %v380 = vunpack.c.l.b16 %v314
      %v381 = vunpack.c.l.b16 %v315
      %v382 = vunpack.c.l.b16 %v316
      %v383 = vpack.c.b16 %v352, %v351
      %v384 = vpack.c.b16 %v354, %v353
      %v385 = vpack.c.b16 %v356, %v355
      %v386 = vpack.c.b16 %v358, %v357
      %v387 = vpack.c.b16 %v360, %v359
      %v388 = vpack.c.b16 %v362, %v361
      %v389 = vpack.c.b16 %v364, %v363
      %v390 = vpack.c.b16 %v366, %v365
      %v391 = vpack.c.b16 %v368, %v367
      %v392 = vpack.c.b16 %v370, %v369
      %v393 = vpack.c.b16 %v372, %v371
      %v394 = vpack.c.b16 %v374, %v373
      %v395 = vpack.c.b16 %v376, %v375
      %v396 = vpack.c.b16 %v378, %v377
      %v397 = vpack.c.b16 %v380, %v379
      %v398 = vpack.c.b16 %v382, %v381
      %v401 = vunpack.c.l.b16 %v317
      %v402 = vunpack.c.l.b16 %v318
      %v403 = vpack.c.b16 %v402, %v401
      %vm404 = vcmask 97280
      %v406 = vsel %vm404, %v383, 0
      %v409 = vsel %vm404, %v384, 0
      %v412 = vsel %vm404, %v385, 0
      %v415 = vsel %vm404, %v386, 0
      %v418 = vsel %vm404, %v387, 0
      %v421 = vsel %vm404, %v388, 0
      %v424 = vsel %vm404, %v389, 0
      %v427 = vsel %vm404, %v390, 0
      %v430 = vsel %vm404, %v391, 0
      %v433 = vsel %vm404, %v392, 0
      %v436 = vsel %vm404, %v393, 0
      %v439 = vsel %vm404, %v394, 0
      %v442 = vsel %vm404, %v395, 0
      %v445 = vsel %vm404, %v396, 0
      %v448 = vsel %vm404, %v397, 0
      %v451 = vsel %vm404, %v398, 0
      %vm453 = vcmask 1045504
      %v455 = vsel %vm453, %v403, 0
      %457 = vmatprep.subr.bf16.mxu0 0
      %458 = vmatpush1.bf16.msra.mxu0 %v455
      %459 = vmatprep.subr.bf16.mxu0 0
      %460 = vmatpush1.bf16.msra.mxu0 0
      %461 = vmatprep.subr.bf16.mxu0 0
      %462 = vmatpush1.bf16.msra.mxu0 0
      %463 = vmatprep.subr.bf16.mxu0 0
      %464 = vmatpush1.bf16.msra.mxu0 0
      %465 = vmatprep.subr.bf16.mxu0 0
      %466 = vmatpush1.bf16.msra.mxu0 0
      %467 = vmatprep.subr.bf16.mxu0 0
      %468 = vmatpush1.bf16.msra.mxu0 0
      %469 = vmatprep.subr.bf16.mxu0 0
      %470 = vmatpush1.bf16.msra.mxu0 0
      %471 = vmatprep.subr.bf16.mxu0 0
      %472 = vmatpush1.bf16.msra.mxu0 0
      %473 = vmatprep.subr.bf16.mxu0 0
      %474 = vmatpush1.bf16.msra.mxu0 0
      %475 = vmatprep.subr.bf16.mxu0 0
      %476 = vmatpush1.bf16.msra.mxu0 0
      %477 = vmatprep.subr.bf16.mxu0 0
      %478 = vmatpush1.bf16.msra.mxu0 0
      %479 = vmatprep.subr.bf16.mxu0 0
      %480 = vmatpush1.bf16.msra.mxu0 0
      %481 = vmatprep.subr.bf16.mxu0 0
      %482 = vmatpush1.bf16.msra.mxu0 0
      %483 = vmatprep.subr.bf16.mxu0 0
      %484 = vmatpush1.bf16.msra.mxu0 0
      %485 = vmatprep.subr.bf16.mxu0 0
      %486 = vmatpush1.bf16.msra.mxu0 0
      %487 = vmatprep.subr.bf16.mxu0 0
      %488 = vmatpush1.bf16.msra.mxu0 0
      %489 = vmatprep.mubr.bf16.mxu0 0
      %490 = vmatmul.mubr.bf16.gmra.mrb[0].mxu0 %v406
      %v491 = vpop.f32.mrb[0].mxu0
      %v492 = vadd.f32 0.0, %v491
      %v493 = vpop.f32.mrb[0].mxu0
      %v494 = vpop.f32.mrb[0].mxu0
      %v495 = vadd.f32 0.0, %v494
      %v496 = vpop.f32.mrb[0].mxu0
      %497 = vmatprep.mubr.bf16.mxu0 0
      %498 = vmatmul.mubr.bf16.gmra.mrb[0].mxu0 %v409
      %v499 = vpop.f32.mrb[0].mxu0
      %v500 = vadd.f32 0.0, %v499
      %v501 = vpop.f32.mrb[0].mxu0
      %v502 = vpop.f32.mrb[0].mxu0
      %v503 = vadd.f32 0.0, %v502
      %v504 = vpop.f32.mrb[0].mxu0
      %505 = vmatprep.mubr.bf16.mxu0 0
      %506 = vmatmul.mubr.bf16.gmra.mrb[0].mxu0 %v412
      %v507 = vpop.f32.mrb[0].mxu0
      %v508 = vadd.f32 0.0, %v507
      %v509 = vpop.f32.mrb[0].mxu0
      %v510 = vpop.f32.mrb[0].mxu0
      %v511 = vadd.f32 0.0, %v510
      %v512 = vpop.f32.mrb[0].mxu0
      %513 = vmatprep.mubr.bf16.mxu0 0
      %514 = vmatmul.mubr.bf16.gmra.mrb[0].mxu0 %v415
      %v515 = vpop.f32.mrb[0].mxu0
      %v516 = vadd.f32 0.0, %v515
      %v517 = vpop.f32.mrb[0].mxu0
      %v518 = vpop.f32.mrb[0].mxu0
      %v519 = vadd.f32 0.0, %v518
      %v520 = vpop.f32.mrb[0].mxu0
      %521 = vmatprep.mubr.bf16.mxu0 0
      %522 = vmatmul.mubr.bf16.gmra.mrb[0].mxu0 %v418
      %v523 = vpop.f32.mrb[0].mxu0
      %v524 = vadd.f32 0.0, %v523
      %v525 = vpop.f32.mrb[0].mxu0
      %v526 = vpop.f32.mrb[0].mxu0
      %v527 = vadd.f32 0.0, %v526
      %v528 = vpop.f32.mrb[0].mxu0
      %529 = vmatprep.mubr.bf16.mxu0 0
      %530 = vmatmul.mubr.bf16.gmra.mrb[0].mxu0 %v421
      %v531 = vpop.f32.mrb[0].mxu0
      %v532 = vadd.f32 0.0, %v531
      %v533 = vpop.f32.mrb[0].mxu0
      %v534 = vpop.f32.mrb[0].mxu0
      %v535 = vadd.f32 0.0, %v534
      %v536 = vpop.f32.mrb[0].mxu0
      %537 = vmatprep.mubr.bf16.mxu0 0
      %538 = vmatmul.mubr.bf16.gmra.mrb[0].mxu0 %v424
      %v539 = vpop.f32.mrb[0].mxu0
      %v540 = vadd.f32 0.0, %v539
      %v541 = vpop.f32.mrb[0].mxu0
      %v542 = vpop.f32.mrb[0].mxu0
      %v543 = vadd.f32 0.0, %v542
      %v544 = vpop.f32.mrb[0].mxu0
      %545 = vmatprep.mubr.bf16.mxu0 0
      %546 = vmatmul.mubr.bf16.gmra.mrb[0].mxu0 %v427
      %v547 = vpop.f32.mrb[0].mxu0
      %v548 = vadd.f32 0.0, %v547
      %v549 = vpop.f32.mrb[0].mxu0
      %v550 = vpop.f32.mrb[0].mxu0
      %v551 = vadd.f32 0.0, %v550
      %v552 = vpop.f32.mrb[0].mxu0
      %553 = vmatprep.mubr.bf16.mxu0 0
      %554 = vmatmul.mubr.bf16.gmra.mrb[0].mxu0 %v430
      %v555 = vpop.f32.mrb[0].mxu0
      %v556 = vadd.f32 0.0, %v555
      %v557 = vpop.f32.mrb[0].mxu0
      %v558 = vpop.f32.mrb[0].mxu0
      %v559 = vadd.f32 0.0, %v558
      %v560 = vpop.f32.mrb[0].mxu0
      %561 = vmatprep.mubr.bf16.mxu0 0
      %562 = vmatmul.mubr.bf16.gmra.mrb[0].mxu0 %v433
      %v563 = vpop.f32.mrb[0].mxu0
      %v564 = vadd.f32 0.0, %v563
      %v565 = vpop.f32.mrb[0].mxu0
      %v566 = vpop.f32.mrb[0].mxu0
      %v567 = vadd.f32 0.0, %v566
      %v568 = vpop.f32.mrb[0].mxu0
      %569 = vmatprep.mubr.bf16.mxu0 0
      %570 = vmatmul.mubr.bf16.gmra.mrb[0].mxu0 %v436
      %v571 = vpop.f32.mrb[0].mxu0
      %v572 = vadd.f32 0.0, %v571
      %v573 = vpop.f32.mrb[0].mxu0
      %v574 = vpop.f32.mrb[0].mxu0
      %v575 = vadd.f32 0.0, %v574
      %v576 = vpop.f32.mrb[0].mxu0
      %577 = vmatprep.mubr.bf16.mxu0 0
      %578 = vmatmul.mubr.bf16.gmra.mrb[0].mxu0 %v439
      %v579 = vpop.f32.mrb[0].mxu0
      %v580 = vadd.f32 0.0, %v579
      %v581 = vpop.f32.mrb[0].mxu0
      %v582 = vpop.f32.mrb[0].mxu0
      %v583 = vadd.f32 0.0, %v582
      %v584 = vpop.f32.mrb[0].mxu0
      %585 = vmatprep.mubr.bf16.mxu0 0
      %586 = vmatmul.mubr.bf16.gmra.mrb[0].mxu0 %v442
      %v587 = vpop.f32.mrb[0].mxu0
      %v588 = vadd.f32 0.0, %v587
      %v589 = vpop.f32.mrb[0].mxu0
      %v590 = vpop.f32.mrb[0].mxu0
      %v591 = vadd.f32 0.0, %v590
      %v592 = vpop.f32.mrb[0].mxu0
      %593 = vmatprep.mubr.bf16.mxu0 0
      %594 = vmatmul.mubr.bf16.gmra.mrb[0].mxu0 %v445
      %v595 = vpop.f32.mrb[0].mxu0
      %v596 = vadd.f32 0.0, %v595
      %v597 = vpop.f32.mrb[0].mxu0
      %v598 = vpop.f32.mrb[0].mxu0
      %v599 = vadd.f32 0.0, %v598
      %v600 = vpop.f32.mrb[0].mxu0
      %601 = vmatprep.mubr.bf16.mxu0 0
      %602 = vmatmul.mubr.bf16.gmra.mrb[0].mxu0 %v448
      %v603 = vpop.f32.mrb[0].mxu0
      %v604 = vadd.f32 0.0, %v603
      %v605 = vpop.f32.mrb[0].mxu0
      %v606 = vpop.f32.mrb[0].mxu0
      %v607 = vadd.f32 0.0, %v606
      %v608 = vpop.f32.mrb[0].mxu0
      %609 = vmatprep.mubr.bf16.mxu0 0
      %610 = vmatmul.mubr.bf16.gmra.mrb[0].mxu0 %v451
      %v611 = vpop.f32.mrb[0].mxu0
      %v612 = vadd.f32 0.0, %v611
      %v613 = vpop.f32.mrb[0].mxu0
      %v614 = vpop.f32.mrb[0].mxu0
      %v615 = vadd.f32 0.0, %v614
      %v616 = vpop.f32.mrb[0].mxu0
      %617 = vdwg.mxu0
      %v650 = vunpack.c.l.b16 %v251
      %v651 = vunpack.c.l.b16 %v252
      %v652 = vunpack.c.l.b16 %v253
      %v653 = vunpack.c.l.b16 %v254
      %v654 = vunpack.c.l.b16 %v255
      %v655 = vunpack.c.l.b16 %v256
      %v656 = vunpack.c.l.b16 %v257
      %v657 = vunpack.c.l.b16 %v258
      %v658 = vunpack.c.l.b16 %v259
      %v659 = vunpack.c.l.b16 %v260
      %v660 = vunpack.c.l.b16 %v261
      %v661 = vunpack.c.l.b16 %v262
      %v662 = vunpack.c.l.b16 %v263
      %v663 = vunpack.c.l.b16 %v264
      %v664 = vunpack.c.l.b16 %v265
      %v665 = vunpack.c.l.b16 %v266
      %v666 = vunpack.c.l.b16 %v267
      %v667 = vunpack.c.l.b16 %v268
      %v668 = vunpack.c.l.b16 %v269
      %v669 = vunpack.c.l.b16 %v270
      %v670 = vunpack.c.l.b16 %v271
      %v671 = vunpack.c.l.b16 %v272
      %v672 = vunpack.c.l.b16 %v273
      %v673 = vunpack.c.l.b16 %v274
      %v674 = vunpack.c.l.b16 %v275
      %v675 = vunpack.c.l.b16 %v276
      %v676 = vunpack.c.l.b16 %v277
      %v677 = vunpack.c.l.b16 %v278
      %v678 = vunpack.c.l.b16 %v279
      %v679 = vunpack.c.l.b16 %v280
      %v680 = vunpack.c.l.b16 %v281
      %v681 = vunpack.c.l.b16 %v282
      %v682 = vpack.c.b16 %v651, %v650
      %v683 = vpack.c.b16 %v653, %v652
      %v684 = vpack.c.b16 %v655, %v654
      %v685 = vpack.c.b16 %v657, %v656
      %v686 = vpack.c.b16 %v659, %v658
      %v687 = vpack.c.b16 %v661, %v660
      %v688 = vpack.c.b16 %v663, %v662
      %v689 = vpack.c.b16 %v665, %v664
      %v690 = vpack.c.b16 %v667, %v666
      %v691 = vpack.c.b16 %v669, %v668
      %v692 = vpack.c.b16 %v671, %v670
      %v693 = vpack.c.b16 %v673, %v672
      %v694 = vpack.c.b16 %v675, %v674
      %v695 = vpack.c.b16 %v677, %v676
      %v696 = vpack.c.b16 %v679, %v678
      %v697 = vpack.c.b16 %v681, %v680
      %v700 = vunpack.c.l.b16 %v283
      %v701 = vunpack.c.l.b16 %v284
      %v702 = vpack.c.b16 %v701, %v700
      %v704 = vsel %vm404, %v682, 0
      %v707 = vsel %vm404, %v683, 0
      %v710 = vsel %vm404, %v684, 0
      %v713 = vsel %vm404, %v685, 0
      %v716 = vsel %vm404, %v686, 0
      %v719 = vsel %vm404, %v687, 0
      %v722 = vsel %vm404, %v688, 0
      %v725 = vsel %vm404, %v689, 0
      %v728 = vsel %vm404, %v690, 0
      %v731 = vsel %vm404, %v691, 0
      %v734 = vsel %vm404, %v692, 0
      %v737 = vsel %vm404, %v693, 0
      %v740 = vsel %vm404, %v694, 0
      %v743 = vsel %vm404, %v695, 0
      %v746 = vsel %vm404, %v696, 0
      %v749 = vsel %vm404, %v697, 0
      %v752 = vsel %vm453, %v702, 0
      %754 = vmatprep.subr.bf16.mxu0 0
      %755 = vmatpush1.bf16.msra.mxu0 %v752
      %756 = vmatprep.subr.bf16.mxu0 0
      %757 = vmatpush1.bf16.msra.mxu0 0
      %758 = vmatprep.subr.bf16.mxu0 0
      %759 = vmatpush1.bf16.msra.mxu0 0
      %760 = vmatprep.subr.bf16.mxu0 0
      %761 = vmatpush1.bf16.msra.mxu0 0
      %762 = vmatprep.subr.bf16.mxu0 0
      %763 = vmatpush1.bf16.msra.mxu0 0
      %764 = vmatprep.subr.bf16.mxu0 0
      %765 = vmatpush1.bf16.msra.mxu0 0
      %766 = vmatprep.subr.bf16.mxu0 0
      %767 = vmatpush1.bf16.msra.mxu0 0
      %768 = vmatprep.subr.bf16.mxu0 0
      %769 = vmatpush1.bf16.msra.mxu0 0
      %770 = vmatprep.subr.bf16.mxu0 0
      %771 = vmatpush1.bf16.msra.mxu0 0
      %772 = vmatprep.subr.bf16.mxu0 0
      %773 = vmatpush1.bf16.msra.mxu0 0
      %774 = vmatprep.subr.bf16.mxu0 0
      %775 = vmatpush1.bf16.msra.mxu0 0
      %776 = vmatprep.subr.bf16.mxu0 0
      %777 = vmatpush1.bf16.msra.mxu0 0
      %778 = vmatprep.subr.bf16.mxu0 0
      %779 = vmatpush1.bf16.msra.mxu0 0
      %780 = vmatprep.subr.bf16.mxu0 0
      %781 = vmatpush1.bf16.msra.mxu0 0
      %782 = vmatprep.subr.bf16.mxu0 0
      %783 = vmatpush1.bf16.msra.mxu0 0
      %784 = vmatprep.subr.bf16.mxu0 0
      %785 = vmatpush1.bf16.msra.mxu0 0
      %786 = vmatprep.mubr.bf16.mxu0 0
      %787 = vmatmul.mubr.bf16.gmra.mrb[0].mxu0 %v704
      %v788 = vpop.f32.mrb[0].mxu0
      %v789 = vadd.f32 %v492, %v788
      %v790 = vpop.f32.mrb[0].mxu0
      %v791 = vpop.f32.mrb[0].mxu0
      %v792 = vadd.f32 %v495, %v791
      %v793 = vpop.f32.mrb[0].mxu0
      %794 = vmatprep.mubr.bf16.mxu0 0
      %795 = vmatmul.mubr.bf16.gmra.mrb[0].mxu0 %v707
      %v796 = vpop.f32.mrb[0].mxu0
      %v797 = vadd.f32 %v500, %v796
      %v798 = vpop.f32.mrb[0].mxu0
      %v799 = vpop.f32.mrb[0].mxu0
      %v800 = vadd.f32 %v503, %v799
      %v801 = vpop.f32.mrb[0].mxu0
      %802 = vmatprep.mubr.bf16.mxu0 0
      %803 = vmatmul.mubr.bf16.gmra.mrb[0].mxu0 %v710
      %v804 = vpop.f32.mrb[0].mxu0
      %v805 = vadd.f32 %v508, %v804
      %v806 = vpop.f32.mrb[0].mxu0
      %v807 = vpop.f32.mrb[0].mxu0
      %v808 = vadd.f32 %v511, %v807
      %v809 = vpop.f32.mrb[0].mxu0
      %810 = vmatprep.mubr.bf16.mxu0 0
      %811 = vmatmul.mubr.bf16.gmra.mrb[0].mxu0 %v713
      %v812 = vpop.f32.mrb[0].mxu0
      %v813 = vadd.f32 %v516, %v812
      %v814 = vpop.f32.mrb[0].mxu0
      %v815 = vpop.f32.mrb[0].mxu0
      %v816 = vadd.f32 %v519, %v815
      %v817 = vpop.f32.mrb[0].mxu0
      %818 = vmatprep.mubr.bf16.mxu0 0
      %819 = vmatmul.mubr.bf16.gmra.mrb[0].mxu0 %v716
      %v820 = vpop.f32.mrb[0].mxu0
      %v821 = vadd.f32 %v524, %v820
      %v822 = vpop.f32.mrb[0].mxu0
      %v823 = vpop.f32.mrb[0].mxu0
      %v824 = vadd.f32 %v527, %v823
      %v825 = vpop.f32.mrb[0].mxu0
      %826 = vmatprep.mubr.bf16.mxu0 0
      %827 = vmatmul.mubr.bf16.gmra.mrb[0].mxu0 %v719
      %v828 = vpop.f32.mrb[0].mxu0
      %v829 = vadd.f32 %v532, %v828
      %v830 = vpop.f32.mrb[0].mxu0
      %v831 = vpop.f32.mrb[0].mxu0
      %v832 = vadd.f32 %v535, %v831
      %v833 = vpop.f32.mrb[0].mxu0
      %834 = vmatprep.mubr.bf16.mxu0 0
      %835 = vmatmul.mubr.bf16.gmra.mrb[0].mxu0 %v722
      %v836 = vpop.f32.mrb[0].mxu0
      %v837 = vadd.f32 %v540, %v836
      %v838 = vpop.f32.mrb[0].mxu0
      %v839 = vpop.f32.mrb[0].mxu0
      %v840 = vadd.f32 %v543, %v839
      %v841 = vpop.f32.mrb[0].mxu0
      %842 = vmatprep.mubr.bf16.mxu0 0
      %843 = vmatmul.mubr.bf16.gmra.mrb[0].mxu0 %v725
      %v844 = vpop.f32.mrb[0].mxu0
      %v845 = vadd.f32 %v548, %v844
      %v846 = vpop.f32.mrb[0].mxu0
      %v847 = vpop.f32.mrb[0].mxu0
      %v848 = vadd.f32 %v551, %v847
      %v849 = vpop.f32.mrb[0].mxu0
      %850 = vmatprep.mubr.bf16.mxu0 0
      %851 = vmatmul.mubr.bf16.gmra.mrb[0].mxu0 %v728
      %v852 = vpop.f32.mrb[0].mxu0
      %v853 = vadd.f32 %v556, %v852
      %v854 = vpop.f32.mrb[0].mxu0
      %v855 = vpop.f32.mrb[0].mxu0
      %v856 = vadd.f32 %v559, %v855
      %v857 = vpop.f32.mrb[0].mxu0
      %858 = vmatprep.mubr.bf16.mxu0 0
      %859 = vmatmul.mubr.bf16.gmra.mrb[0].mxu0 %v731
      %v860 = vpop.f32.mrb[0].mxu0
      %v861 = vadd.f32 %v564, %v860
      %v862 = vpop.f32.mrb[0].mxu0
      %v863 = vpop.f32.mrb[0].mxu0
      %v864 = vadd.f32 %v567, %v863
      %v865 = vpop.f32.mrb[0].mxu0
      %866 = vmatprep.mubr.bf16.mxu0 0
      %867 = vmatmul.mubr.bf16.gmra.mrb[0].mxu0 %v734
      %v868 = vpop.f32.mrb[0].mxu0
      %v869 = vadd.f32 %v572, %v868
      %v870 = vpop.f32.mrb[0].mxu0
      %v871 = vpop.f32.mrb[0].mxu0
      %v872 = vadd.f32 %v575, %v871
      %v873 = vpop.f32.mrb[0].mxu0
      %874 = vmatprep.mubr.bf16.mxu0 0
      %875 = vmatmul.mubr.bf16.gmra.mrb[0].mxu0 %v737
      %v876 = vpop.f32.mrb[0].mxu0
      %v877 = vadd.f32 %v580, %v876
      %v878 = vpop.f32.mrb[0].mxu0
      %v879 = vpop.f32.mrb[0].mxu0
      %v880 = vadd.f32 %v583, %v879
      %v881 = vpop.f32.mrb[0].mxu0
      %882 = vmatprep.mubr.bf16.mxu0 0
      %883 = vmatmul.mubr.bf16.gmra.mrb[0].mxu0 %v740
      %v884 = vpop.f32.mrb[0].mxu0
      %v885 = vadd.f32 %v588, %v884
      %v886 = vpop.f32.mrb[0].mxu0
      %v887 = vpop.f32.mrb[0].mxu0
      %v888 = vadd.f32 %v591, %v887
      %v889 = vpop.f32.mrb[0].mxu0
      %890 = vmatprep.mubr.bf16.mxu0 0
      %891 = vmatmul.mubr.bf16.gmra.mrb[0].mxu0 %v743
      %v892 = vpop.f32.mrb[0].mxu0
      %v893 = vadd.f32 %v596, %v892
      %v894 = vpop.f32.mrb[0].mxu0
      %v895 = vpop.f32.mrb[0].mxu0
      %v896 = vadd.f32 %v599, %v895
      %v897 = vpop.f32.mrb[0].mxu0
      %898 = vmatprep.mubr.bf16.mxu0 0
      %899 = vmatmul.mubr.bf16.gmra.mrb[0].mxu0 %v746
      %v900 = vpop.f32.mrb[0].mxu0
      %v901 = vadd.f32 %v604, %v900
      %v902 = vpop.f32.mrb[0].mxu0
      %v903 = vpop.f32.mrb[0].mxu0
      %v904 = vadd.f32 %v607, %v903
      %v905 = vpop.f32.mrb[0].mxu0
      %906 = vmatprep.mubr.bf16.mxu0 0
      %907 = vmatmul.mubr.bf16.gmra.mrb[0].mxu0 %v749
      %v908 = vpop.f32.mrb[0].mxu0
      %v909 = vadd.f32 %v612, %v908
      %v910 = vpop.f32.mrb[0].mxu0
      %v911 = vpop.f32.mrb[0].mxu0
      %v912 = vadd.f32 %v615, %v911
      %v913 = vpop.f32.mrb[0].mxu0
      %914 = vdwg.mxu0
      %v915 = vld [vmem:[%s4] sm:$0x1]
      %v917 = vlaneseq
      %v918 = vshrl.u32 %v917, 7
      %v919 = vsub.s32 0, %v918
      %v920 = vrot.slane %v915, %v919
      %v922 = vadd.f32 %v789, %v920
      %v923 = vadd.f32 %v792, %v920
      %v924 = vadd.f32 %v797, %v920
      %v925 = vadd.f32 %v800, %v920
      %v926 = vadd.f32 %v805, %v920
      %v927 = vadd.f32 %v808, %v920
      %v928 = vadd.f32 %v813, %v920
      %v929 = vadd.f32 %v816, %v920
      %v930 = vadd.f32 %v821, %v920
      %v931 = vadd.f32 %v824, %v920
      %v932 = vadd.f32 %v829, %v920
      %v933 = vadd.f32 %v832, %v920
      %v934 = vadd.f32 %v837, %v920
      %v935 = vadd.f32 %v840, %v920
      %v936 = vadd.f32 %v845, %v920
      %v937 = vadd.f32 %v848, %v920
      %v938 = vadd.f32 %v853, %v920
      %v939 = vadd.f32 %v856, %v920
      %v940 = vadd.f32 %v861, %v920
      %v941 = vadd.f32 %v864, %v920
      %v942 = vadd.f32 %v869, %v920
      %v943 = vadd.f32 %v872, %v920
      %v944 = vadd.f32 %v877, %v920
      %v945 = vadd.f32 %v880, %v920
      %v946 = vadd.f32 %v885, %v920
      %v947 = vadd.f32 %v888, %v920
      %v948 = vadd.f32 %v893, %v920
      %v949 = vadd.f32 %v896, %v920
      %v950 = vadd.f32 %v901, %v920
      %v951 = vadd.f32 %v904, %v920
      %v952 = vadd.f32 %v909, %v920
      %v953 = vadd.f32 %v912, %v920
      %v954 = vpack.c.bf16 %v923, %v922
      %v955 = vpack.c.bf16 %v925, %v924
      %v956 = vpack.c.bf16 %v927, %v926
      %v957 = vpack.c.bf16 %v929, %v928
      %v958 = vpack.c.bf16 %v931, %v930
      %v959 = vpack.c.bf16 %v933, %v932
      %v960 = vpack.c.bf16 %v935, %v934
      %v961 = vpack.c.bf16 %v937, %v936
      %v962 = vpack.c.bf16 %v939, %v938
      %v963 = vpack.c.bf16 %v941, %v940
      %v964 = vpack.c.bf16 %v943, %v942
      %v965 = vpack.c.bf16 %v945, %v944
      %v966 = vpack.c.bf16 %v947, %v946
      %v967 = vpack.c.bf16 %v949, %v948
      %v968 = vpack.c.bf16 %v951, %v950
      %v969 = vpack.c.bf16 %v953, %v952
      %v986 = vunpack.c.l.b16 %v954
      %v987 = vunpack.c.h.b16 %v954
      %v988 = vunpack.c.l.b16 %v955
      %v989 = vunpack.c.h.b16 %v955
      %v990 = vunpack.c.l.b16 %v956
      %v991 = vunpack.c.h.b16 %v956
      %v992 = vunpack.c.l.b16 %v957
      %v993 = vunpack.c.h.b16 %v957
      %v994 = vunpack.c.l.b16 %v958
      %v995 = vunpack.c.h.b16 %v958
      %v996 = vunpack.c.l.b16 %v959
      %v997 = vunpack.c.h.b16 %v959
      %v998 = vunpack.c.l.b16 %v960
      %v999 = vunpack.c.h.b16 %v960
      %v1000 = vunpack.c.l.b16 %v961
      %v1001 = vunpack.c.h.b16 %v961
      %v1002 = vunpack.c.l.b16 %v962
      %v1003 = vunpack.c.h.b16 %v962
      %v1004 = vunpack.c.l.b16 %v963
      %v1005 = vunpack.c.h.b16 %v963
      %v1006 = vunpack.c.l.b16 %v964
      %v1007 = vunpack.c.h.b16 %v964
      %v1008 = vunpack.c.l.b16 %v965
      %v1009 = vunpack.c.h.b16 %v965
      %v1010 = vunpack.c.l.b16 %v966
      %v1011 = vunpack.c.h.b16 %v966
      %v1012 = vunpack.c.l.b16 %v967
      %v1013 = vunpack.c.h.b16 %v967
      %v1014 = vunpack.c.l.b16 %v968
      %v1015 = vunpack.c.h.b16 %v968
      %v1016 = vunpack.c.l.b16 %v969
      %v1017 = vunpack.c.h.b16 %v969
      %v1018 = vpack.c.b16 %v986, %v986
      %v1019 = vpack.c.b16 %v987, %v987
      %v1020 = vpack.c.b16 %v988, %v988
      %v1021 = vpack.c.b16 %v989, %v989
      %v1022 = vpack.c.b16 %v990, %v990
      %v1023 = vpack.c.b16 %v991, %v991
      %v1024 = vpack.c.b16 %v992, %v992
      %v1025 = vpack.c.b16 %v993, %v993
      %v1026 = vpack.c.b16 %v994, %v994
      %v1027 = vpack.c.b16 %v995, %v995
      %v1028 = vpack.c.b16 %v996, %v996
      %v1029 = vpack.c.b16 %v997, %v997
      %v1030 = vpack.c.b16 %v998, %v998
      %v1031 = vpack.c.b16 %v999, %v999
      %v1032 = vpack.c.b16 %v1000, %v1000
      %v1033 = vpack.c.b16 %v1001, %v1001
      %v1034 = vpack.c.b16 %v1002, %v1002
      %v1035 = vpack.c.b16 %v1003, %v1003
      %v1036 = vpack.c.b16 %v1004, %v1004
      %v1037 = vpack.c.b16 %v1005, %v1005
      %v1038 = vpack.c.b16 %v1006, %v1006
      %v1039 = vpack.c.b16 %v1007, %v1007
      %v1040 = vpack.c.b16 %v1008, %v1008
      %v1041 = vpack.c.b16 %v1009, %v1009
      %v1042 = vpack.c.b16 %v1010, %v1010
      %v1043 = vpack.c.b16 %v1011, %v1011
      %v1044 = vpack.c.b16 %v1012, %v1012
      %v1045 = vpack.c.b16 %v1013, %v1013
      %v1046 = vpack.c.b16 %v1014, %v1014
      %v1047 = vpack.c.b16 %v1015, %v1015
      %v1048 = vpack.c.b16 %v1016, %v1016
      %v1049 = vpack.c.b16 %v1017, %v1017
      %1082 = vst [vmem:[%s248] sm:$0xf] %v1018
      %1083 = vst [vmem:[%s248 + $0x4] sm:$0xf] %v1019
      %1084 = vst [vmem:[%s248 + $0x8] sm:$0xf] %v1020
      %1085 = vst [vmem:[%s248 + $0xc] sm:$0xf] %v1021
      %1086 = vst [vmem:[%s248 + $0x10] sm:$0xf] %v1022
      %1087 = vst [vmem:[%s248 + $0x14] sm:$0xf] %v1023
      %1088 = vst [vmem:[%s248 + $0x18] sm:$0xf] %v1024
      %1089 = vst [vmem:[%s248 + $0x1c] sm:$0xf] %v1025
      %1090 = vst [vmem:[%s248 + $0x20] sm:$0xf] %v1026
      %1091 = vst [vmem:[%s248 + $0x24] sm:$0xf] %v1027
      %1092 = vst [vmem:[%s248 + $0x28] sm:$0xf] %v1028
      %1093 = vst [vmem:[%s248 + $0x2c] sm:$0xf] %v1029
      %1094 = vst [vmem:[%s248 + $0x30] sm:$0xf] %v1030
      %1095 = vst [vmem:[%s248 + $0x34] sm:$0xf] %v1031
      %1096 = vst [vmem:[%s248 + $0x38] sm:$0xf] %v1032
      %1097 = vst [vmem:[%s248 + $0x3c] sm:$0xf] %v1033
      %1098 = vst [vmem:[%s248 + $0x40] sm:$0xf] %v1034
      %1099 = vst [vmem:[%s248 + $0x44] sm:$0xf] %v1035
      %1100 = vst [vmem:[%s248 + $0x48] sm:$0xf] %v1036
      %1101 = vst [vmem:[%s248 + $0x4c] sm:$0xf] %v1037
      %1102 = vst [vmem:[%s248 + $0x50] sm:$0xf] %v1038
      %1103 = vst [vmem:[%s248 + $0x54] sm:$0xf] %v1039
      %1104 = vst [vmem:[%s248 + $0x58] sm:$0xf] %v1040
      %1105 = vst [vmem:[%s248 + $0x5c] sm:$0xf] %v1041
      %1106 = vst [vmem:[%s248 + $0x60] sm:$0xf] %v1042
      %1107 = vst [vmem:[%s248 + $0x64] sm:$0xf] %v1043
      %1108 = vst [vmem:[%s248 + $0x68] sm:$0xf] %v1044
      %1109 = vst [vmem:[%s248 + $0x6c] sm:$0xf] %v1045
      %1110 = vst [vmem:[%s248 + $0x70] sm:$0xf] %v1046
      %1111 = vst [vmem:[%s248 + $0x74] sm:$0xf] %v1047
      %1112 = vst [vmem:[%s248 + $0x78] sm:$0xf] %v1048
      %1113 = vst [vmem:[%s248 + $0x7c] sm:$0xf] %v1049
      %s1114 = smul.u32 32, %s16
      %p1115 = scmp.lt.s32.totalorder %s1114, 63
      %s1116 = scalar_select %p1115, %s1114, 63
      %s1117 = smul.addr %s1116, 4
      %s1118 = scalar_lea.vmem %s5, %s1117
      // Predicated region
      $region41: #{net_forward.6} parent=39 // pred_check
        %p1119 = pneg %p149
      $region42: #{net_forward.6} parent=39 // pred_check_branch
        %1121 = sbr.rel (%p1119) target = $region44
      $region43: #{net_forward.6} parent=39 // pred_region
        %s1122 = smul.u32 32, %s16
      $region44: #{net_forward.6} parent=39 // pred_fallthru
        _
    $region40: #{net_forward.6} parent=5 // pred_fallthru
      _
    %p1123 = scmp.le.s32.totalorder 2, %s11
    // Predicated region
    $region45: #{net_forward.6} parent=5 // pred_check
      %p1124 = pneg %p1123
    $region46: #{net_forward.6} parent=5 // pred_check_branch
      %1126 = sbr.rel (%p1124) target = $region48
    $region47: #{net_forward.6} parent=5 // pred_region
      %s1127 = ssub.s32 %s11, 2
      // Predicated region
      $region49: #{net_forward.6} parent=47 // pred_check
        %p1128 = pneg %p155
      $region50: #{net_forward.6} parent=47 // pred_check_branch
        %1130 = sbr.rel (%p1128) target = $region52
      $region51: #{net_forward.6} parent=47 // pred_region
        %s1131 = smul.u32 32, %s17
        %p1132 = scmp.lt.s32.totalorder %s1131, 63
        %s1133 = scalar_select %p1132, %s1131, 63
        %s1134 = smul.addr %s1133, 4
        %s1135 = scalar_lea.vmem %s5, %s1134
      $region52: #{net_forward.6} parent=47 // pred_fallthru
        _
    $region48: #{net_forward.6} parent=5 // pred_fallthru
      _
  $region6: #{net_forward.6} parent=0 // loop_footer
    %s15 = sadd.s32 1, %s11
  $region7: #{net_forward.6} parent=0 // loop_footer_branch
    %10 = sbr.rel target = $region3
  $region8: #{net_forward.6} parent=0 // loop_exit
    _

// kernel: net_forward.7
$region0: #{net_forward.7}
  #allocation0 [shape = 'u32[]', space=smem, size = 0x4, offset = 0x4, fixed_abs, tag = 'smem constant byte address 0x4 - core index']
  #allocation1 [shape = 'u32[144,128]{1,0:T(1,128)}', space=vmem, size = 0x12000, scoped, tag = 'internal scratch']
  %s0 = inlined_call_operand.vmem [shape: bf16[128,12], index: 0, kind: input, shape index: {}]
  %s1 = inlined_call_operand.vmem [shape: bf16[128,12], index: 1, kind: input, shape index: {}]
  %s2 = inlined_call_operand.vmem [shape: bf16[12,128], index: 2, kind: input, shape index: {}]
  %s3 = inlined_call_operand.vmem [shape: bf16[12,128], index: 3, kind: input, shape index: {}]
  %s4 = inlined_call_operand.vmem [shape: f32[1,128], index: 4, kind: input, shape index: {}]
  %s5 = inlined_call_operand.vmem [shape: bf16[128,128], index: 5, kind: output, shape index: {}]
  %s6 = sld [smem:[#allocation0]]
  $region53: #{net_forward.7} parent=0
    _
  %s8 = ssub.s32 1, %s6
  %s9 = scalar_select 0, %s8, %s6
  loop: start=0, step=1, limit=4
  $region2: #{net_forward.7} parent=0 // loop_pre_header
    _
  $region3: #{net_forward.7} parent=0 // loop_header
    %s11 = sphi 0, %s15
    %p12 = scmp.ge.s32.totalorder %s11, 4
    %s21 = sphi 0, %s23
    %s24 = sphi 0, %s21
    %s25 = sphi 0, %s24
    %s41 = sphi 0, %s25
    %s47 = sphi 0, %s49
    %s50 = sphi 0, %s47
    %s51 = sphi 0, %s50
    %s67 = sphi 0, %s51
    %s71 = sphi 0, %s71
    %s73 = sphi 0, %s71
    %s74 = sphi 0, %s73
    %s88 = sphi 0, %s74
    %s92 = sphi 0, %s92
    %s94 = sphi 0, %s92
    %s95 = sphi 0, %s94
    %s109 = sphi 0, %s95
    %s113 = sphi 0, %s113
    %s115 = sphi 0, %s113
    %s116 = sphi 0, %s115
    %s130 = sphi 0, %s116
    %s136 = sphi 0, %s138
    %s139 = sphi 0, %s136
    %s140 = sphi 0, %s139
    %s156 = sphi 0, %s140
  $region4: #{net_forward.7} parent=0 // loop_header_branch
    %14 = sbr.rel (%p12) target = $region8
  $region5: #{net_forward.7} parent=0 // loop_body
    %s16 = ssub.s32 %s11, 1
    %s17 = ssub.s32 %s11, 2
    %s18 = sadd.s32 %s11, 1
    %s19 = ssub.s32 %s11, %s18
    %p20 = scmp.eq.s32.totalorder %s19, 0
    %s22 = sadd.s32 %s21, 1
    %s23 = scalar_select %p20, %s21, %s22
    %p26 = pneg %p20
    %p27 = scmp.eq.s32.totalorder %s11, 1
    %p28 = por %p26, %p27
    %p29 = scmp.ne.s32.totalorder %s21, %s24
    %p30 = scmp.eq.s32.totalorder %s11, 0
    %p31 = por %p29, %p30
    %p32 = scmp.ne.s32.totalorder %s21, %s24
    %p33 = scmp.eq.s32.totalorder %s16, 1
    %p34 = por %p32, %p33
    %p35 = scmp.ne.s32.totalorder %s24, %s25
    %p36 = scmp.eq.s32.totalorder %s16, 0
    %p37 = por %p35, %p36
    %p38 = scmp.ne.s32.totalorder %s24, %s25
    %p39 = scmp.eq.s32.totalorder %s17, 1
    %p40 = por %p38, %p39
    %p42 = scmp.ne.s32.totalorder %s25, %s41
    %p43 = scmp.eq.s32.totalorder %s17, 0
    %p44 = por %p42, %p43
    %s45 = ssub.s32 %s11, %s18
    %p46 = scmp.eq.s32.totalorder %s45, 0
    %s48 = sadd.s32 %s47, 1
    %s49 = scalar_select %p46, %s47, %s48
    %p52 = pneg %p46
    %p53 = scmp.eq.s32.totalorder %s11, 1
    %p54 = por %p52, %p53
    %p55 = scmp.ne.s32.totalorder %s47, %s50
    %p56 = scmp.eq.s32.totalorder %s11, 0
    %p57 = por %p55, %p56
    %p58 = scmp.ne.s32.totalorder %s47, %s50
    %p59 = scmp.eq.s32.totalorder %s16, 1
    %p60 = por %p58, %p59
    %p61 = scmp.ne.s32.totalorder %s50, %s51
    %p62 = scmp.eq.s32.totalorder %s16, 0
    %p63 = por %p61, %p62
    %p64 = scmp.ne.s32.totalorder %s50, %s51
    %p65 = scmp.eq.s32.totalorder %s17, 1
    %p66 = por %p64, %p65
    %p68 = scmp.ne.s32.totalorder %s51, %s67
    %p69 = scmp.eq.s32.totalorder %s17, 0
    %p70 = por %p68, %p69
    %s72 = sadd.s32 %s71, 1
    %p75 = scmp.eq.s32.totalorder %s11, 1
    %p76 = scmp.ne.s32.totalorder %s71, %s73
    %p77 = scmp.eq.s32.totalorder %s11, 0
    %p78 = por %p76, %p77
    %p79 = scmp.ne.s32.totalorder %s71, %s73
    %p80 = scmp.eq.s32.totalorder %s16, 1
    %p81 = por %p79, %p80
    %p82 = scmp.ne.s32.totalorder %s73, %s74
    %p83 = scmp.eq.s32.totalorder %s16, 0
    %p84 = por %p82, %p83
    %p85 = scmp.ne.s32.totalorder %s73, %s74
    %p86 = scmp.eq.s32.totalorder %s17, 1
    %p87 = por %p85, %p86
    %p89 = scmp.ne.s32.totalorder %s74, %s88
    %p90 = scmp.eq.s32.totalorder %s17, 0
    %p91 = por %p89, %p90
    %s93 = sadd.s32 %s92, 1
    %p96 = scmp.eq.s32.totalorder %s11, 1
    %p97 = scmp.ne.s32.totalorder %s92, %s94
    %p98 = scmp.eq.s32.totalorder %s11, 0
    %p99 = por %p97, %p98
    %p100 = scmp.ne.s32.totalorder %s92, %s94
    %p101 = scmp.eq.s32.totalorder %s16, 1
    %p102 = por %p100, %p101
    %p103 = scmp.ne.s32.totalorder %s94, %s95
    %p104 = scmp.eq.s32.totalorder %s16, 0
    %p105 = por %p103, %p104
    %p106 = scmp.ne.s32.totalorder %s94, %s95
    %p107 = scmp.eq.s32.totalorder %s17, 1
    %p108 = por %p106, %p107
    %p110 = scmp.ne.s32.totalorder %s95, %s109
    %p111 = scmp.eq.s32.totalorder %s17, 0
    %p112 = por %p110, %p111
    %s114 = sadd.s32 %s113, 1
    %p117 = scmp.eq.s32.totalorder %s11, 1
    %p118 = scmp.ne.s32.totalorder %s113, %s115
    %p119 = scmp.eq.s32.totalorder %s11, 0
    %p120 = por %p118, %p119
    %p121 = scmp.ne.s32.totalorder %s113, %s115
    %p122 = scmp.eq.s32.totalorder %s16, 1
    %p123 = por %p121, %p122
    %p124 = scmp.ne.s32.totalorder %s115, %s116
    %p125 = scmp.eq.s32.totalorder %s16, 0
    %p126 = por %p124, %p125
    %p127 = scmp.ne.s32.totalorder %s115, %s116
    %p128 = scmp.eq.s32.totalorder %s17, 1
    %p129 = por %p127, %p128
    %p131 = scmp.ne.s32.totalorder %s116, %s130
    %p132 = scmp.eq.s32.totalorder %s17, 0
    %p133 = por %p131, %p132
    %s134 = ssub.s32 %s11, %s18
    %p135 = scmp.eq.s32.totalorder %s134, 0
    %s137 = sadd.s32 %s136, 1
    %s138 = scalar_select %p135, %s136, %s137
    %p141 = pneg %p135
    %p142 = scmp.eq.s32.totalorder %s11, 1
    %p143 = por %p141, %p142
    %p144 = scmp.ne.s32.totalorder %s136, %s139
    %p145 = scmp.eq.s32.totalorder %s11, 0
    %p146 = por %p144, %p145
    %p147 = scmp.ne.s32.totalorder %s136, %s139
    %p148 = scmp.eq.s32.totalorder %s16, 1
    %p149 = por %p147, %p148
    %p150 = scmp.ne.s32.totalorder %s139, %s140
    %p151 = scmp.eq.s32.totalorder %s16, 0
    %p152 = por %p150, %p151
    %p153 = scmp.ne.s32.totalorder %s139, %s140
    %p154 = scmp.eq.s32.totalorder %s17, 1
    %p155 = por %p153, %p154
    %p157 = scmp.ne.s32.totalorder %s140, %s156
    %p158 = scmp.eq.s32.totalorder %s17, 0
    %p159 = por %p157, %p158
    %p160 = scmp.le.s32.totalorder 1, %s11
    %p161 = scmp.lt.s32.totalorder %s11, 3
    %p162 = pnand %p160, %p161
    %p163 = pneg %p162
    // Predicated region
    $region9: #{net_forward.7} parent=5 // pred_check
      _
    $region10: #{net_forward.7} parent=5 // pred_check_branch
      %165 = sbr.rel (%p162) target = $region12
    $region11: #{net_forward.7} parent=5 // pred_region
      %s166 = ssub.s32 %s11, 1
      // Predicated region
      $region13: #{net_forward.7} parent=11 // pred_check
        %p167 = pneg %p84
      $region14: #{net_forward.7} parent=11 // pred_check_branch
        %169 = sbr.rel (%p167) target = $region16
      $region15: #{net_forward.7} parent=11 // pred_region
        _
      $region16: #{net_forward.7} parent=11 // pred_fallthru
        _
      // Predicated region
      $region17: #{net_forward.7} parent=11 // pred_check
        %p170 = pneg %p105
      $region18: #{net_forward.7} parent=11 // pred_check_branch
        %172 = sbr.rel (%p170) target = $region20
      $region19: #{net_forward.7} parent=11 // pred_region
        _
      $region20: #{net_forward.7} parent=11 // pred_fallthru
        _
      // Predicated region
      $region21: #{net_forward.7} parent=11 // pred_check
        %p173 = pneg %p126
      $region22: #{net_forward.7} parent=11 // pred_check_branch
        %175 = sbr.rel (%p173) target = $region24
      $region23: #{net_forward.7} parent=11 // pred_region
        _
      $region24: #{net_forward.7} parent=11 // pred_fallthru
        _
    $region12: #{net_forward.7} parent=5 // pred_fallthru
      _
    %p176 = scmp.lt.s32.totalorder %s11, 2
    // Predicated region
    $region25: #{net_forward.7} parent=5 // pred_check
      %p177 = pneg %p176
    $region26: #{net_forward.7} parent=5 // pred_check_branch
      %179 = sbr.rel (%p177) target = $region28
    $region27: #{net_forward.7} parent=5 // pred_region
      // Predicated region
      $region29: #{net_forward.7} parent=27 // pred_check
        %p180 = pneg %p31
      $region30: #{net_forward.7} parent=27 // pred_check_branch
        %182 = sbr.rel (%p180) target = $region32
      $region31: #{net_forward.7} parent=27 // pred_region
        %s183 = smul.u32 8, %s11
        %p184 = scmp.lt.s32.totalorder %s183, 15
        %s185 = scalar_select %p184, %s183, 15
        %s186 = smul.addr %s185, 4
        %s187 = scalar_lea.vmem %s0, %s186
        %s188 = smul.u32 8, %s11
      $region32: #{net_forward.7} parent=27 // pred_fallthru
        _
      // Predicated region
      $region33: #{net_forward.7} parent=27 // pred_check
        %p189 = pneg %p57
      $region34: #{net_forward.7} parent=27 // pred_check_branch
        %191 = sbr.rel (%p189) target = $region36
      $region35: #{net_forward.7} parent=27 // pred_region
        %s192 = smul.u32 8, %s11
        %p193 = scmp.lt.s32.totalorder %s192, 15
        %s194 = scalar_select %p193, %s192, 15
        %s195 = smul.addr %s194, 4
        %s196 = scalar_lea.vmem %s1, %s195
        %s197 = smul.u32 8, %s11
      $region36: #{net_forward.7} parent=27 // pred_fallthru
        _
    $region28: #{net_forward.7} parent=5 // pred_fallthru
      _
    %p198 = scmp.le.s32.totalorder 1, %s11
    %p199 = scmp.lt.s32.totalorder %s11, 3
    %p200 = pnand %p198, %p199
    %p201 = pneg %p200
    // Predicated region
    $region37: #{net_forward.7} parent=5 // pred_check
      _
    $region38: #{net_forward.7} parent=5 // pred_check_branch
      %203 = sbr.rel (%p200) target = $region40
    $region39: #{net_forward.7} parent=5 // pred_region
      %s204 = ssub.s32 %s11, 1
      %s205 = smul.u32 8, %s16
      %p206 = scmp.lt.s32.totalorder %s205, 15
      %s207 = scalar_select %p206, %s205, 15
      %s208 = smul.addr %s207, 4
      %s209 = scalar_lea.vmem %s0, %s208
      %p210 = pneg %p37
      %p211 = pneg %p34
      %s212 = smul.u32 8, %s16
      %p213 = scmp.lt.s32.totalorder %s212, 15
      %s214 = scalar_select %p213, %s212, 15
      %s215 = smul.addr %s214, 4
      %s216 = scalar_lea.vmem %s1, %s215
      %p217 = pneg %p63
      %p218 = pneg %p60
      %p219 = pneg %p84
      %p220 = pneg %p81
      %p221 = pneg %p105
      %p222 = pneg %p102
      %p223 = pneg %p126
      %p224 = pneg %p123
      %p225 = pneg %p152
      %p226 = pneg %p149
      %s227 = smul.u32 8, %s16
      %p228 = scmp.lt.s32.totalorder %s227, 15
      %s229 = scalar_select %p228, %s227, 15
      %s230 = smul.addr %s229, 4
      %s231 = scalar_lea.vmem %s5, %s230
      %s232 = smul.u32 8, %s16
      %p233 = scmp.lt.s32.totalorder %s232, 15
      %s234 = scalar_select %p233, %s232, 15
      %s235 = smul.addr %s234, 4
      %s236 = scalar_lea.vmem %s0, %s235
      %s237 = smul.u32 8, %s16
      %s238 = smul.u32 8, %s16
      %p239 = scmp.lt.s32.totalorder %s238, 15
      %s240 = scalar_select %p239, %s238, 15
      %s241 = smul.addr %s240, 4
      %s242 = scalar_lea.vmem %s1, %s241
      %s243 = smul.u32 8, %s16
      %s244 = smul.u32 8, %s16
      %p245 = scmp.lt.s32.totalorder %s244, 15
      %s246 = scalar_select %p245, %s244, 15
      %s247 = smul.addr %s246, 4
      %s248 = scalar_lea.vmem %s5, %s247
      %s249 = smul.u32 8, %s16
      %v251 = vld [vmem:[%s236] sm:$0xf]
      %v252 = vld [vmem:[%s236 + $0x4] sm:$0xf]
      %v253 = vld [vmem:[%s236 + $0x8] sm:$0xf]
      %v254 = vld [vmem:[%s236 + $0xc] sm:$0xf]
      %v255 = vld [vmem:[%s236 + $0x10] sm:$0xf]
      %v256 = vld [vmem:[%s236 + $0x14] sm:$0xf]
      %v257 = vld [vmem:[%s236 + $0x18] sm:$0xf]
      %v258 = vld [vmem:[%s236 + $0x1c] sm:$0xf]
      %v259 = vld [vmem:[%s2] sm:$0xf]
      %v260 = vld [vmem:[%s2 + $0x4] sm:$0x3]
      %v261 = vld [vmem:[%s242] sm:$0xf]
      %v262 = vld [vmem:[%s242 + $0x4] sm:$0xf]
      %v263 = vld [vmem:[%s242 + $0x8] sm:$0xf]
      %v264 = vld [vmem:[%s242 + $0xc] sm:$0xf]
      %v265 = vld [vmem:[%s242 + $0x10] sm:$0xf]
      %v266 = vld [vmem:[%s242 + $0x14] sm:$0xf]
      %v267 = vld [vmem:[%s242 + $0x18] sm:$0xf]
      %v268 = vld [vmem:[%s242 + $0x1c] sm:$0xf]
      %v269 = vld [vmem:[%s3] sm:$0xf]
      %v270 = vld [vmem:[%s3 + $0x4] sm:$0x3]
      %v279 = vunpack.c.l.b16 %v261
      %v280 = vunpack.c.l.b16 %v262
      %v281 = vunpack.c.l.b16 %v263
      %v282 = vunpack.c.l.b16 %v264
      %v283 = vunpack.c.l.b16 %v265
      %v284 = vunpack.c.l.b16 %v266
      %v285 = vunpack.c.l.b16 %v267
      %v286 = vunpack.c.l.b16 %v268
      %v287 = vpack.c.b16 %v280, %v279
      %v288 = vpack.c.b16 %v282, %v281
      %v289 = vpack.c.b16 %v284, %v283
      %v290 = vpack.c.b16 %v286, %v285
      %v293 = vunpack.c.l.b16 %v269
      %v294 = vunpack.c.l.b16 %v270
      %v295 = vpack.c.b16 %v294, %v293
      %vm296 = vcmask 97280
      %v298 = vsel %vm296, %v287, 0
      %v301 = vsel %vm296, %v288, 0
      %v304 = vsel %vm296, %v289, 0
      %v307 = vsel %vm296, %v290, 0
      %vm309 = vcmask 1045504
      %v311 = vsel %vm309, %v295, 0
      %313 = vmatprep.subr.bf16.mxu0 0
      %314 = vmatpush1.bf16.msra.mxu0 %v311
      %315 = vmatprep.subr.bf16.mxu0 0
      %316 = vmatpush1.bf16.msra.mxu0 0
      %317 = vmatprep.subr.bf16.mxu0 0
      %318 = vmatpush1.bf16.msra.mxu0 0
      %319 = vmatprep.subr.bf16.mxu0 0
      %320 = vmatpush1.bf16.msra.mxu0 0
      %321 = vmatprep.subr.bf16.mxu0 0
      %322 = vmatpush1.bf16.msra.mxu0 0
      %323 = vmatprep.subr.bf16.mxu0 0
      %324 = vmatpush1.bf16.msra.mxu0 0
      %325 = vmatprep.subr.bf16.mxu0 0
      %326 = vmatpush1.bf16.msra.mxu0 0
      %327 = vmatprep.subr.bf16.mxu0 0
      %328 = vmatpush1.bf16.msra.mxu0 0
      %329 = vmatprep.subr.bf16.mxu0 0
      %330 = vmatpush1.bf16.msra.mxu0 0
      %331 = vmatprep.subr.bf16.mxu0 0
      %332 = vmatpush1.bf16.msra.mxu0 0
      %333 = vmatprep.subr.bf16.mxu0 0
      %334 = vmatpush1.bf16.msra.mxu0 0
      %335 = vmatprep.subr.bf16.mxu0 0
      %336 = vmatpush1.bf16.msra.mxu0 0
      %337 = vmatprep.subr.bf16.mxu0 0
      %338 = vmatpush1.bf16.msra.mxu0 0
      %339 = vmatprep.subr.bf16.mxu0 0
      %340 = vmatpush1.bf16.msra.mxu0 0
      %341 = vmatprep.subr.bf16.mxu0 0
      %342 = vmatpush1.bf16.msra.mxu0 0
      %343 = vmatprep.subr.bf16.mxu0 0
      %344 = vmatpush1.bf16.msra.mxu0 0
      %345 = vmatprep.mubr.bf16.mxu0 0
      %346 = vmatmul.mubr.bf16.gmra.mrb[0].mxu0 %v298
      %v347 = vpop.f32.mrb[0].mxu0
      %v348 = vadd.f32 0.0, %v347
      %v349 = vpop.f32.mrb[0].mxu0
      %v350 = vpop.f32.mrb[0].mxu0
      %v351 = vadd.f32 0.0, %v350
      %v352 = vpop.f32.mrb[0].mxu0
      %353 = vmatprep.mubr.bf16.mxu0 0
      %354 = vmatmul.mubr.bf16.gmra.mrb[0].mxu0 %v301
      %v355 = vpop.f32.mrb[0].mxu0
      %v356 = vadd.f32 0.0, %v355
      %v357 = vpop.f32.mrb[0].mxu0
      %v358 = vpop.f32.mrb[0].mxu0
      %v359 = vadd.f32 0.0, %v358
      %v360 = vpop.f32.mrb[0].mxu0
      %361 = vmatprep.mubr.bf16.mxu0 0
      %362 = vmatmul.mubr.bf16.gmra.mrb[0].mxu0 %v304
      %v363 = vpop.f32.mrb[0].mxu0
      %v364 = vadd.f32 0.0, %v363
      %v365 = vpop.f32.mrb[0].mxu0
      %v366 = vpop.f32.mrb[0].mxu0
      %v367 = vadd.f32 0.0, %v366
      %v368 = vpop.f32.mrb[0].mxu0
      %369 = vmatprep.mubr.bf16.mxu0 0
      %370 = vmatmul.mubr.bf16.gmra.mrb[0].mxu0 %v307
      %v371 = vpop.f32.mrb[0].mxu0
      %v372 = vadd.f32 0.0, %v371
      %v373 = vpop.f32.mrb[0].mxu0
      %v374 = vpop.f32.mrb[0].mxu0
      %v375 = vadd.f32 0.0, %v374
      %v376 = vpop.f32.mrb[0].mxu0
      %377 = vdwg.mxu0
      %v386 = vunpack.c.l.b16 %v251
      %v387 = vunpack.c.l.b16 %v252
      %v388 = vunpack.c.l.b16 %v253
      %v389 = vunpack.c.l.b16 %v254
      %v390 = vunpack.c.l.b16 %v255
      %v391 = vunpack.c.l.b16 %v256
      %v392 = vunpack.c.l.b16 %v257
      %v393 = vunpack.c.l.b16 %v258
      %v394 = vpack.c.b16 %v387, %v386
      %v395 = vpack.c.b16 %v389, %v388
      %v396 = vpack.c.b16 %v391, %v390
      %v397 = vpack.c.b16 %v393, %v392
      %v400 = vunpack.c.l.b16 %v259
      %v401 = vunpack.c.l.b16 %v260
      %v402 = vpack.c.b16 %v401, %v400
      %v404 = vsel %vm296, %v394, 0
      %v407 = vsel %vm296, %v395, 0
      %v410 = vsel %vm296, %v396, 0
      %v413 = vsel %vm296, %v397, 0
      %v416 = vsel %vm309, %v402, 0
      %418 = vmatprep.subr.bf16.mxu0 0
      %419 = vmatpush1.bf16.msra.mxu0 %v416
      %420 = vmatprep.subr.bf16.mxu0 0
      %421 = vmatpush1.bf16.msra.mxu0 0
      %422 = vmatprep.subr.bf16.mxu0 0
      %423 = vmatpush1.bf16.msra.mxu0 0
      %424 = vmatprep.subr.bf16.mxu0 0
      %425 = vmatpush1.bf16.msra.mxu0 0
      %426 = vmatprep.subr.bf16.mxu0 0
      %427 = vmatpush1.bf16.msra.mxu0 0
      %428 = vmatprep.subr.bf16.mxu0 0
      %429 = vmatpush1.bf16.msra.mxu0 0
      %430 = vmatprep.subr.bf16.mxu0 0
      %431 = vmatpush1.bf16.msra.mxu0 0
      %432 = vmatprep.subr.bf16.mxu0 0
      %433 = vmatpush1.bf16.msra.mxu0 0
      %434 = vmatprep.subr.bf16.mxu0 0
      %435 = vmatpush1.bf16.msra.mxu0 0
      %436 = vmatprep.subr.bf16.mxu0 0
      %437 = vmatpush1.bf16.msra.mxu0 0
      %438 = vmatprep.subr.bf16.mxu0 0
      %439 = vmatpush1.bf16.msra.mxu0 0
      %440 = vmatprep.subr.bf16.mxu0 0
      %441 = vmatpush1.bf16.msra.mxu0 0
      %442 = vmatprep.subr.bf16.mxu0 0
      %443 = vmatpush1.bf16.msra.mxu0 0
      %444 = vmatprep.subr.bf16.mxu0 0
      %445 = vmatpush1.bf16.msra.mxu0 0
      %446 = vmatprep.subr.bf16.mxu0 0
      %447 = vmatpush1.bf16.msra.mxu0 0
      %448 = vmatprep.subr.bf16.mxu0 0
      %449 = vmatpush1.bf16.msra.mxu0 0
      %450 = vmatprep.mubr.bf16.mxu0 0
      %451 = vmatmul.mubr.bf16.gmra.mrb[0].mxu0 %v404
      %v452 = vpop.f32.mrb[0].mxu0
      %v453 = vadd.f32 %v348, %v452
      %v454 = vpop.f32.mrb[0].mxu0
      %v455 = vpop.f32.mrb[0].mxu0
      %v456 = vadd.f32 %v351, %v455
      %v457 = vpop.f32.mrb[0].mxu0
      %458 = vmatprep.mubr.bf16.mxu0 0
      %459 = vmatmul.mubr.bf16.gmra.mrb[0].mxu0 %v407
      %v460 = vpop.f32.mrb[0].mxu0
      %v461 = vadd.f32 %v356, %v460
      %v462 = vpop.f32.mrb[0].mxu0
      %v463 = vpop.f32.mrb[0].mxu0
      %v464 = vadd.f32 %v359, %v463
      %v465 = vpop.f32.mrb[0].mxu0
      %466 = vmatprep.mubr.bf16.mxu0 0
      %467 = vmatmul.mubr.bf16.gmra.mrb[0].mxu0 %v410
      %v468 = vpop.f32.mrb[0].mxu0
      %v469 = vadd.f32 %v364, %v468
      %v470 = vpop.f32.mrb[0].mxu0
      %v471 = vpop.f32.mrb[0].mxu0
      %v472 = vadd.f32 %v367, %v471
      %v473 = vpop.f32.mrb[0].mxu0
      %474 = vmatprep.mubr.bf16.mxu0 0
      %475 = vmatmul.mubr.bf16.gmra.mrb[0].mxu0 %v413
      %v476 = vpop.f32.mrb[0].mxu0
      %v477 = vadd.f32 %v372, %v476
      %v478 = vpop.f32.mrb[0].mxu0
      %v479 = vpop.f32.mrb[0].mxu0
      %v480 = vadd.f32 %v375, %v479
      %v481 = vpop.f32.mrb[0].mxu0
      %482 = vdwg.mxu0
      %v483 = vld [vmem:[%s4] sm:$0x1]
      %v485 = vlaneseq
      %v486 = vshrl.u32 %v485, 7
      %v487 = vsub.s32 0, %v486
      %v488 = vrot.slane %v483, %v487
      %v490 = vadd.f32 %v453, %v488
      %v491 = vadd.f32 %v456, %v488
      %v492 = vadd.f32 %v461, %v488
      %v493 = vadd.f32 %v464, %v488
      %v494 = vadd.f32 %v469, %v488
      %v495 = vadd.f32 %v472, %v488
      %v496 = vadd.f32 %v477, %v488
      %v497 = vadd.f32 %v480, %v488
      %v498 = vpack.c.bf16 %v491, %v490
      %v499 = vpack.c.bf16 %v493, %v492
      %v500 = vpack.c.bf16 %v495, %v494
      %v501 = vpack.c.bf16 %v497, %v496
      %v506 = vunpack.c.l.b16 %v498
      %v507 = vunpack.c.h.b16 %v498
      %v508 = vunpack.c.l.b16 %v499
      %v509 = vunpack.c.h.b16 %v499
      %v510 = vunpack.c.l.b16 %v500
      %v511 = vunpack.c.h.b16 %v500
      %v512 = vunpack.c.l.b16 %v501
      %v513 = vunpack.c.h.b16 %v501
      %v514 = vpack.c.b16 %v506, %v506
      %v515 = vpack.c.b16 %v507, %v507
      %v516 = vpack.c.b16 %v508, %v508
      %v517 = vpack.c.b16 %v509, %v509
      %v518 = vpack.c.b16 %v510, %v510
      %v519 = vpack.c.b16 %v511, %v511
      %v520 = vpack.c.b16 %v512, %v512
      %v521 = vpack.c.b16 %v513, %v513
      %530 = vst [vmem:[%s248] sm:$0xf] %v514
      %531 = vst [vmem:[%s248 + $0x4] sm:$0xf] %v515
      %532 = vst [vmem:[%s248 + $0x8] sm:$0xf] %v516
      %533 = vst [vmem:[%s248 + $0xc] sm:$0xf] %v517
      %534 = vst [vmem:[%s248 + $0x10] sm:$0xf] %v518
      %535 = vst [vmem:[%s248 + $0x14] sm:$0xf] %v519
      %536 = vst [vmem:[%s248 + $0x18] sm:$0xf] %v520
      %537 = vst [vmem:[%s248 + $0x1c] sm:$0xf] %v521
      %s538 = smul.u32 8, %s16
      %p539 = scmp.lt.s32.totalorder %s538, 15
      %s540 = scalar_select %p539, %s538, 15
      %s541 = smul.addr %s540, 4
      %s542 = scalar_lea.vmem %s5, %s541
      // Predicated region
      $region41: #{net_forward.7} parent=39 // pred_check
        %p543 = pneg %p149
      $region42: #{net_forward.7} parent=39 // pred_check_branch
        %545 = sbr.rel (%p543) target = $region44
      $region43: #{net_forward.7} parent=39 // pred_region
        %s546 = smul.u32 8, %s16
      $region44: #{net_forward.7} parent=39 // pred_fallthru
        _
    $region40: #{net_forward.7} parent=5 // pred_fallthru
      _
    %p547 = scmp.le.s32.totalorder 2, %s11
    // Predicated region
    $region45: #{net_forward.7} parent=5 // pred_check
      %p548 = pneg %p547
    $region46: #{net_forward.7} parent=5 // pred_check_branch
      %550 = sbr.rel (%p548) target = $region48
    $region47: #{net_forward.7} parent=5 // pred_region
      %s551 = ssub.s32 %s11, 2
      // Predicated region
      $region49: #{net_forward.7} parent=47 // pred_check
        %p552 = pneg %p155
      $region50: #{net_forward.7} parent=47 // pred_check_branch
        %554 = sbr.rel (%p552) target = $region52
      $region51: #{net_forward.7} parent=47 // pred_region
        %s555 = smul.u32 8, %s17
        %p556 = scmp.lt.s32.totalorder %s555, 15
        %s557 = scalar_select %p556, %s555, 15
        %s558 = smul.addr %s557, 4
        %s559 = scalar_lea.vmem %s5, %s558
      $region52: #{net_forward.7} parent=47 // pred_fallthru
        _
    $region48: #{net_forward.7} parent=5 // pred_fallthru
      _
  $region6: #{net_forward.7} parent=0 // loop_footer
    %s15 = sadd.s32 1, %s11
  $region7: #{net_forward.7} parent=0 // loop_footer_branch
    %10 = sbr.rel target = $region3
  $region8: #{net_forward.7} parent=0 // loop_exit
    _

// kernel: net_forward.8
$region0: #{net_forward.8}
  #allocation0 [shape = 'u32[]', space=smem, size = 0x4, offset = 0x4, fixed_abs, tag = 'smem constant byte address 0x4 - core index']
  #allocation1 [shape = 'u32[144,128]{1,0:T(1,128)}', space=vmem, size = 0x12000, scoped, tag = 'internal scratch']
  %s0 = inlined_call_operand.vmem [shape: bf16[32,12], index: 0, kind: input, shape index: {}]
  %s1 = inlined_call_operand.vmem [shape: bf16[32,12], index: 1, kind: input, shape index: {}]
  %s2 = inlined_call_operand.vmem [shape: bf16[12,128], index: 2, kind: input, shape index: {}]
  %s3 = inlined_call_operand.vmem [shape: bf16[12,128], index: 3, kind: input, shape index: {}]
  %s4 = inlined_call_operand.vmem [shape: f32[1,128], index: 4, kind: input, shape index: {}]
  %s5 = inlined_call_operand.vmem [shape: bf16[32,128], index: 5, kind: output, shape index: {}]
  %s6 = sld [smem:[#allocation0]]
  $region53: #{net_forward.8} parent=0
    _
  %s8 = ssub.s32 1, %s6
  %s9 = scalar_select 0, %s8, %s6
  loop: start=0, step=1, limit=4
  $region2: #{net_forward.8} parent=0 // loop_pre_header
    _
  $region3: #{net_forward.8} parent=0 // loop_header
    %s11 = sphi 0, %s15
    %p12 = scmp.ge.s32.totalorder %s11, 4
    %s21 = sphi 0, %s23
    %s24 = sphi 0, %s21
    %s25 = sphi 0, %s24
    %s41 = sphi 0, %s25
    %s47 = sphi 0, %s49
    %s50 = sphi 0, %s47
    %s51 = sphi 0, %s50
    %s67 = sphi 0, %s51
    %s71 = sphi 0, %s71
    %s73 = sphi 0, %s71
    %s74 = sphi 0, %s73
    %s88 = sphi 0, %s74
    %s92 = sphi 0, %s92
    %s94 = sphi 0, %s92
    %s95 = sphi 0, %s94
    %s109 = sphi 0, %s95
    %s113 = sphi 0, %s113
    %s115 = sphi 0, %s113
    %s116 = sphi 0, %s115
    %s130 = sphi 0, %s116
    %s136 = sphi 0, %s138
    %s139 = sphi 0, %s136
    %s140 = sphi 0, %s139
    %s156 = sphi 0, %s140
  $region4: #{net_forward.8} parent=0 // loop_header_branch
    %14 = sbr.rel (%p12) target = $region8
  $region5: #{net_forward.8} parent=0 // loop_body
    %s16 = ssub.s32 %s11, 1
    %s17 = ssub.s32 %s11, 2
    %s18 = sadd.s32 %s11, 1
    %s19 = ssub.s32 %s11, %s18
    %p20 = scmp.eq.s32.totalorder %s19, 0
    %s22 = sadd.s32 %s21, 1
    %s23 = scalar_select %p20, %s21, %s22
    %p26 = pneg %p20
    %p27 = scmp.eq.s32.totalorder %s11, 1
    %p28 = por %p26, %p27
    %p29 = scmp.ne.s32.totalorder %s21, %s24
    %p30 = scmp.eq.s32.totalorder %s11, 0
    %p31 = por %p29, %p30
    %p32 = scmp.ne.s32.totalorder %s21, %s24
    %p33 = scmp.eq.s32.totalorder %s16, 1
    %p34 = por %p32, %p33
    %p35 = scmp.ne.s32.totalorder %s24, %s25
    %p36 = scmp.eq.s32.totalorder %s16, 0
    %p37 = por %p35, %p36
    %p38 = scmp.ne.s32.totalorder %s24, %s25
    %p39 = scmp.eq.s32.totalorder %s17, 1
    %p40 = por %p38, %p39
    %p42 = scmp.ne.s32.totalorder %s25, %s41
    %p43 = scmp.eq.s32.totalorder %s17, 0
    %p44 = por %p42, %p43
    %s45 = ssub.s32 %s11, %s18
    %p46 = scmp.eq.s32.totalorder %s45, 0
    %s48 = sadd.s32 %s47, 1
    %s49 = scalar_select %p46, %s47, %s48
    %p52 = pneg %p46
    %p53 = scmp.eq.s32.totalorder %s11, 1
    %p54 = por %p52, %p53
    %p55 = scmp.ne.s32.totalorder %s47, %s50
    %p56 = scmp.eq.s32.totalorder %s11, 0
    %p57 = por %p55, %p56
    %p58 = scmp.ne.s32.totalorder %s47, %s50
    %p59 = scmp.eq.s32.totalorder %s16, 1
    %p60 = por %p58, %p59
    %p61 = scmp.ne.s32.totalorder %s50, %s51
    %p62 = scmp.eq.s32.totalorder %s16, 0
    %p63 = por %p61, %p62
    %p64 = scmp.ne.s32.totalorder %s50, %s51
    %p65 = scmp.eq.s32.totalorder %s17, 1
    %p66 = por %p64, %p65
    %p68 = scmp.ne.s32.totalorder %s51, %s67
    %p69 = scmp.eq.s32.totalorder %s17, 0
    %p70 = por %p68, %p69
    %s72 = sadd.s32 %s71, 1
    %p75 = scmp.eq.s32.totalorder %s11, 1
    %p76 = scmp.ne.s32.totalorder %s71, %s73
    %p77 = scmp.eq.s32.totalorder %s11, 0
    %p78 = por %p76, %p77
    %p79 = scmp.ne.s32.totalorder %s71, %s73
    %p80 = scmp.eq.s32.totalorder %s16, 1
    %p81 = por %p79, %p80
    %p82 = scmp.ne.s32.totalorder %s73, %s74
    %p83 = scmp.eq.s32.totalorder %s16, 0
    %p84 = por %p82, %p83
    %p85 = scmp.ne.s32.totalorder %s73, %s74
    %p86 = scmp.eq.s32.totalorder %s17, 1
    %p87 = por %p85, %p86
    %p89 = scmp.ne.s32.totalorder %s74, %s88
    %p90 = scmp.eq.s32.totalorder %s17, 0
    %p91 = por %p89, %p90
    %s93 = sadd.s32 %s92, 1
    %p96 = scmp.eq.s32.totalorder %s11, 1
    %p97 = scmp.ne.s32.totalorder %s92, %s94
    %p98 = scmp.eq.s32.totalorder %s11, 0
    %p99 = por %p97, %p98
    %p100 = scmp.ne.s32.totalorder %s92, %s94
    %p101 = scmp.eq.s32.totalorder %s16, 1
    %p102 = por %p100, %p101
    %p103 = scmp.ne.s32.totalorder %s94, %s95
    %p104 = scmp.eq.s32.totalorder %s16, 0
    %p105 = por %p103, %p104
    %p106 = scmp.ne.s32.totalorder %s94, %s95
    %p107 = scmp.eq.s32.totalorder %s17, 1
    %p108 = por %p106, %p107
    %p110 = scmp.ne.s32.totalorder %s95, %s109
    %p111 = scmp.eq.s32.totalorder %s17, 0
    %p112 = por %p110, %p111
    %s114 = sadd.s32 %s113, 1
    %p117 = scmp.eq.s32.totalorder %s11, 1
    %p118 = scmp.ne.s32.totalorder %s113, %s115
    %p119 = scmp.eq.s32.totalorder %s11, 0
    %p120 = por %p118, %p119
    %p121 = scmp.ne.s32.totalorder %s113, %s115
    %p122 = scmp.eq.s32.totalorder %s16, 1
    %p123 = por %p121, %p122
    %p124 = scmp.ne.s32.totalorder %s115, %s116
    %p125 = scmp.eq.s32.totalorder %s16, 0
    %p126 = por %p124, %p125
    %p127 = scmp.ne.s32.totalorder %s115, %s116
    %p128 = scmp.eq.s32.totalorder %s17, 1
    %p129 = por %p127, %p128
    %p131 = scmp.ne.s32.totalorder %s116, %s130
    %p132 = scmp.eq.s32.totalorder %s17, 0
    %p133 = por %p131, %p132
    %s134 = ssub.s32 %s11, %s18
    %p135 = scmp.eq.s32.totalorder %s134, 0
    %s137 = sadd.s32 %s136, 1
    %s138 = scalar_select %p135, %s136, %s137
    %p141 = pneg %p135
    %p142 = scmp.eq.s32.totalorder %s11, 1
    %p143 = por %p141, %p142
    %p144 = scmp.ne.s32.totalorder %s136, %s139
    %p145 = scmp.eq.s32.totalorder %s11, 0
    %p146 = por %p144, %p145
    %p147 = scmp.ne.s32.totalorder %s136, %s139
    %p148 = scmp.eq.s32.totalorder %s16, 1
    %p149 = por %p147, %p148
    %p150 = scmp.ne.s32.totalorder %s139, %s140
    %p151 = scmp.eq.s32.totalorder %s16, 0
    %p152 = por %p150, %p151
    %p153 = scmp.ne.s32.totalorder %s139, %s140
    %p154 = scmp.eq.s32.totalorder %s17, 1
    %p155 = por %p153, %p154
    %p157 = scmp.ne.s32.totalorder %s140, %s156
    %p158 = scmp.eq.s32.totalorder %s17, 0
    %p159 = por %p157, %p158
    %p160 = scmp.le.s32.totalorder 1, %s11
    %p161 = scmp.lt.s32.totalorder %s11, 3
    %p162 = pnand %p160, %p161
    %p163 = pneg %p162
    // Predicated region
    $region9: #{net_forward.8} parent=5 // pred_check
      _
    $region10: #{net_forward.8} parent=5 // pred_check_branch
      %165 = sbr.rel (%p162) target = $region12
    $region11: #{net_forward.8} parent=5 // pred_region
      %s166 = ssub.s32 %s11, 1
      // Predicated region
      $region13: #{net_forward.8} parent=11 // pred_check
        %p167 = pneg %p84
      $region14: #{net_forward.8} parent=11 // pred_check_branch
        %169 = sbr.rel (%p167) target = $region16
      $region15: #{net_forward.8} parent=11 // pred_region
        _
      $region16: #{net_forward.8} parent=11 // pred_fallthru
        _
      // Predicated region
      $region17: #{net_forward.8} parent=11 // pred_check
        %p170 = pneg %p105
      $region18: #{net_forward.8} parent=11 // pred_check_branch
        %172 = sbr.rel (%p170) target = $region20
      $region19: #{net_forward.8} parent=11 // pred_region
        _
      $region20: #{net_forward.8} parent=11 // pred_fallthru
        _
      // Predicated region
      $region21: #{net_forward.8} parent=11 // pred_check
        %p173 = pneg %p126
      $region22: #{net_forward.8} parent=11 // pred_check_branch
        %175 = sbr.rel (%p173) target = $region24
      $region23: #{net_forward.8} parent=11 // pred_region
        _
      $region24: #{net_forward.8} parent=11 // pred_fallthru
        _
    $region12: #{net_forward.8} parent=5 // pred_fallthru
      _
    %p176 = scmp.lt.s32.totalorder %s11, 2
    // Predicated region
    $region25: #{net_forward.8} parent=5 // pred_check
      %p177 = pneg %p176
    $region26: #{net_forward.8} parent=5 // pred_check_branch
      %179 = sbr.rel (%p177) target = $region28
    $region27: #{net_forward.8} parent=5 // pred_region
      // Predicated region
      $region29: #{net_forward.8} parent=27 // pred_check
        %p180 = pneg %p31
      $region30: #{net_forward.8} parent=27 // pred_check_branch
        %182 = sbr.rel (%p180) target = $region32
      $region31: #{net_forward.8} parent=27 // pred_region
        %s183 = smul.u32 2, %s11
        %p184 = scmp.lt.s32.totalorder %s183, 3
        %s185 = scalar_select %p184, %s183, 3
        %s186 = smul.addr %s185, 4
        %s187 = scalar_lea.vmem %s0, %s186
        %s188 = smul.u32 2, %s11
      $region32: #{net_forward.8} parent=27 // pred_fallthru
        _
      // Predicated region
      $region33: #{net_forward.8} parent=27 // pred_check
        %p189 = pneg %p57
      $region34: #{net_forward.8} parent=27 // pred_check_branch
        %191 = sbr.rel (%p189) target = $region36
      $region35: #{net_forward.8} parent=27 // pred_region
        %s192 = smul.u32 2, %s11
        %p193 = scmp.lt.s32.totalorder %s192, 3
        %s194 = scalar_select %p193, %s192, 3
        %s195 = smul.addr %s194, 4
        %s196 = scalar_lea.vmem %s1, %s195
        %s197 = smul.u32 2, %s11
      $region36: #{net_forward.8} parent=27 // pred_fallthru
        _
    $region28: #{net_forward.8} parent=5 // pred_fallthru
      _
    %p198 = scmp.le.s32.totalorder 1, %s11
    %p199 = scmp.lt.s32.totalorder %s11, 3
    %p200 = pnand %p198, %p199
    %p201 = pneg %p200
    // Predicated region
    $region37: #{net_forward.8} parent=5 // pred_check
      _
    $region38: #{net_forward.8} parent=5 // pred_check_branch
      %203 = sbr.rel (%p200) target = $region40
    $region39: #{net_forward.8} parent=5 // pred_region
      %s204 = ssub.s32 %s11, 1
      %s205 = smul.u32 2, %s16
      %p206 = scmp.lt.s32.totalorder %s205, 3
      %s207 = scalar_select %p206, %s205, 3
      %s208 = smul.addr %s207, 4
      %s209 = scalar_lea.vmem %s0, %s208
      %p210 = pneg %p37
      %p211 = pneg %p34
      %s212 = smul.u32 2, %s16
      %p213 = scmp.lt.s32.totalorder %s212, 3
      %s214 = scalar_select %p213, %s212, 3
      %s215 = smul.addr %s214, 4
      %s216 = scalar_lea.vmem %s1, %s215
      %p217 = pneg %p63
      %p218 = pneg %p60
      %p219 = pneg %p84
      %p220 = pneg %p81
      %p221 = pneg %p105
      %p222 = pneg %p102
      %p223 = pneg %p126
      %p224 = pneg %p123
      %p225 = pneg %p152
      %p226 = pneg %p149
      %s227 = smul.u32 2, %s16
      %p228 = scmp.lt.s32.totalorder %s227, 3
      %s229 = scalar_select %p228, %s227, 3
      %s230 = smul.addr %s229, 4
      %s231 = scalar_lea.vmem %s5, %s230
      %s232 = smul.u32 2, %s16
      %p233 = scmp.lt.s32.totalorder %s232, 3
      %s234 = scalar_select %p233, %s232, 3
      %s235 = smul.addr %s234, 4
      %s236 = scalar_lea.vmem %s0, %s235
      %s237 = smul.u32 2, %s16
      %s238 = smul.u32 2, %s16
      %p239 = scmp.lt.s32.totalorder %s238, 3
      %s240 = scalar_select %p239, %s238, 3
      %s241 = smul.addr %s240, 4
      %s242 = scalar_lea.vmem %s1, %s241
      %s243 = smul.u32 2, %s16
      %s244 = smul.u32 2, %s16
      %p245 = scmp.lt.s32.totalorder %s244, 3
      %s246 = scalar_select %p245, %s244, 3
      %s247 = smul.addr %s246, 4
      %s248 = scalar_lea.vmem %s5, %s247
      %s249 = smul.u32 2, %s16
      %v251 = vld [vmem:[%s236] sm:$0xf]
      %v252 = vld [vmem:[%s236 + $0x4] sm:$0xf]
      %v253 = vld [vmem:[%s2] sm:$0xf]
      %v254 = vld [vmem:[%s2 + $0x4] sm:$0x3]
      %v255 = vld [vmem:[%s242] sm:$0xf]
      %v256 = vld [vmem:[%s242 + $0x4] sm:$0xf]
      %v257 = vld [vmem:[%s3] sm:$0xf]
      %v258 = vld [vmem:[%s3 + $0x4] sm:$0x3]
      %v261 = vunpack.c.l.b16 %v255
      %v262 = vunpack.c.l.b16 %v256
      %v263 = vpack.c.b16 %v262, %v261
      %v266 = vunpack.c.l.b16 %v257
      %v267 = vunpack.c.l.b16 %v258
      %v268 = vpack.c.b16 %v267, %v266
      %vm269 = vcmask 97280
      %v271 = vsel %vm269, %v263, 0
      %vm273 = vcmask 1045504
      %v275 = vsel %vm273, %v268, 0
      %277 = vmatprep.subr.bf16.mxu0 0
      %278 = vmatpush1.bf16.msra.mxu0 %v275
      %279 = vmatprep.subr.bf16.mxu0 0
      %280 = vmatpush1.bf16.msra.mxu0 0
      %281 = vmatprep.subr.bf16.mxu0 0
      %282 = vmatpush1.bf16.msra.mxu0 0
      %283 = vmatprep.subr.bf16.mxu0 0
      %284 = vmatpush1.bf16.msra.mxu0 0
      %285 = vmatprep.subr.bf16.mxu0 0
      %286 = vmatpush1.bf16.msra.mxu0 0
      %287 = vmatprep.subr.bf16.mxu0 0
      %288 = vmatpush1.bf16.msra.mxu0 0
      %289 = vmatprep.subr.bf16.mxu0 0
      %290 = vmatpush1.bf16.msra.mxu0 0
      %291 = vmatprep.subr.bf16.mxu0 0
      %292 = vmatpush1.bf16.msra.mxu0 0
      %293 = vmatprep.subr.bf16.mxu0 0
      %294 = vmatpush1.bf16.msra.mxu0 0
      %295 = vmatprep.subr.bf16.mxu0 0
      %296 = vmatpush1.bf16.msra.mxu0 0
      %297 = vmatprep.subr.bf16.mxu0 0
      %298 = vmatpush1.bf16.msra.mxu0 0
      %299 = vmatprep.subr.bf16.mxu0 0
      %300 = vmatpush1.bf16.msra.mxu0 0
      %301 = vmatprep.subr.bf16.mxu0 0
      %302 = vmatpush1.bf16.msra.mxu0 0
      %303 = vmatprep.subr.bf16.mxu0 0
      %304 = vmatpush1.bf16.msra.mxu0 0
      %305 = vmatprep.subr.bf16.mxu0 0
      %306 = vmatpush1.bf16.msra.mxu0 0
      %307 = vmatprep.subr.bf16.mxu0 0
      %308 = vmatpush1.bf16.msra.mxu0 0
      %309 = vmatprep.mubr.bf16.mxu0 0
      %310 = vmatmul.mubr.bf16.gmra.mrb[0].mxu0 %v271
      %v311 = vpop.f32.mrb[0].mxu0
      %v312 = vadd.f32 0.0, %v311
      %v313 = vpop.f32.mrb[0].mxu0
      %v314 = vpop.f32.mrb[0].mxu0
      %v315 = vadd.f32 0.0, %v314
      %v316 = vpop.f32.mrb[0].mxu0
      %317 = vdwg.mxu0
      %v320 = vunpack.c.l.b16 %v251
      %v321 = vunpack.c.l.b16 %v252
      %v322 = vpack.c.b16 %v321, %v320
      %v325 = vunpack.c.l.b16 %v253
      %v326 = vunpack.c.l.b16 %v254
      %v327 = vpack.c.b16 %v326, %v325
      %v329 = vsel %vm269, %v322, 0
      %v332 = vsel %vm273, %v327, 0
      %334 = vmatprep.subr.bf16.mxu0 0
      %335 = vmatpush1.bf16.msra.mxu0 %v332
      %336 = vmatprep.subr.bf16.mxu0 0
      %337 = vmatpush1.bf16.msra.mxu0 0
      %338 = vmatprep.subr.bf16.mxu0 0
      %339 = vmatpush1.bf16.msra.mxu0 0
      %340 = vmatprep.subr.bf16.mxu0 0
      %341 = vmatpush1.bf16.msra.mxu0 0
      %342 = vmatprep.subr.bf16.mxu0 0
      %343 = vmatpush1.bf16.msra.mxu0 0
      %344 = vmatprep.subr.bf16.mxu0 0
      %345 = vmatpush1.bf16.msra.mxu0 0
      %346 = vmatprep.subr.bf16.mxu0 0
      %347 = vmatpush1.bf16.msra.mxu0 0
      %348 = vmatprep.subr.bf16.mxu0 0
      %349 = vmatpush1.bf16.msra.mxu0 0
      %350 = vmatprep.subr.bf16.mxu0 0
      %351 = vmatpush1.bf16.msra.mxu0 0
      %352 = vmatprep.subr.bf16.mxu0 0
      %353 = vmatpush1.bf16.msra.mxu0 0
      %354 = vmatprep.subr.bf16.mxu0 0
      %355 = vmatpush1.bf16.msra.mxu0 0
      %356 = vmatprep.subr.bf16.mxu0 0
      %357 = vmatpush1.bf16.msra.mxu0 0
      %358 = vmatprep.subr.bf16.mxu0 0
      %359 = vmatpush1.bf16.msra.mxu0 0
      %360 = vmatprep.subr.bf16.mxu0 0
      %361 = vmatpush1.bf16.msra.mxu0 0
      %362 = vmatprep.subr.bf16.mxu0 0
      %363 = vmatpush1.bf16.msra.mxu0 0
      %364 = vmatprep.subr.bf16.mxu0 0
      %365 = vmatpush1.bf16.msra.mxu0 0
      %366 = vmatprep.mubr.bf16.mxu0 0
      %367 = vmatmul.mubr.bf16.gmra.mrb[0].mxu0 %v329
      %v368 = vpop.f32.mrb[0].mxu0
      %v369 = vadd.f32 %v312, %v368
      %v370 = vpop.f32.mrb[0].mxu0
      %v371 = vpop.f32.mrb[0].mxu0
      %v372 = vadd.f32 %v315, %v371
      %v373 = vpop.f32.mrb[0].mxu0
      %374 = vdwg.mxu0
      %v375 = vld [vmem:[%s4] sm:$0x1]
      %v377 = vlaneseq
      %v378 = vshrl.u32 %v377, 7
      %v379 = vsub.s32 0, %v378
      %v380 = vrot.slane %v375, %v379
      %v382 = vadd.f32 %v369, %v380
      %v383 = vadd.f32 %v372, %v380
      %v384 = vpack.c.bf16 %v383, %v382
      %v386 = vunpack.c.l.b16 %v384
      %v387 = vunpack.c.h.b16 %v384
      %v388 = vpack.c.b16 %v386, %v386
      %v389 = vpack.c.b16 %v387, %v387
      %392 = vst [vmem:[%s248] sm:$0xf] %v388
      %393 = vst [vmem:[%s248 + $0x4] sm:$0xf] %v389
      %s394 = smul.u32 2, %s16
      %p395 = scmp.lt.s32.totalorder %s394, 3
      %s396 = scalar_select %p395, %s394, 3
      %s397 = smul.addr %s396, 4
      %s398 = scalar_lea.vmem %s5, %s397
      // Predicated region
      $region41: #{net_forward.8} parent=39 // pred_check
        %p399 = pneg %p149
      $region42: #{net_forward.8} parent=39 // pred_check_branch
        %401 = sbr.rel (%p399) target = $region44
      $region43: #{net_forward.8} parent=39 // pred_region
        %s402 = smul.u32 2, %s16
      $region44: #{net_forward.8} parent=39 // pred_fallthru
        _
    $region40: #{net_forward.8} parent=5 // pred_fallthru
      _
    %p403 = scmp.le.s32.totalorder 2, %s11
    // Predicated region
    $region45: #{net_forward.8} parent=5 // pred_check
      %p404 = pneg %p403
    $region46: #{net_forward.8} parent=5 // pred_check_branch
      %406 = sbr.rel (%p404) target = $region48
    $region47: #{net_forward.8} parent=5 // pred_region
      %s407 = ssub.s32 %s11, 2
      // Predicated region
      $region49: #{net_forward.8} parent=47 // pred_check
        %p408 = pneg %p155
      $region50: #{net_forward.8} parent=47 // pred_check_branch
        %410 = sbr.rel (%p408) target = $region52
      $region51: #{net_forward.8} parent=47 // pred_region
        %s411 = smul.u32 2, %s17
        %p412 = scmp.lt.s32.totalorder %s411, 3
        %s413 = scalar_select %p412, %s411, 3
        %s414 = smul.addr %s413, 4
        %s415 = scalar_lea.vmem %s5, %s414
      $region52: #{net_forward.8} parent=47 // pred_fallthru
        _
    $region48: #{net_forward.8} parent=5 // pred_fallthru
      _
  $region6: #{net_forward.8} parent=0 // loop_footer
    %s15 = sadd.s32 1, %s11
  $region7: #{net_forward.8} parent=0 // loop_footer_branch
    %10 = sbr.rel target = $region3
  $region8: #{net_forward.8} parent=0 // loop_exit
    _

// kernel: net_forward.9
$region0: #{net_forward.9}
  #allocation0 [shape = 'u32[]', space=smem, size = 0x4, offset = 0x4, fixed_abs, tag = 'smem constant byte address 0x4 - core index']
  #allocation1 [shape = 'u32[144,128]{1,0:T(1,128)}', space=vmem, size = 0x12000, scoped, tag = 'internal scratch']
  %s0 = inlined_call_operand.vmem [shape: bf16[8,12], index: 0, kind: input, shape index: {}]
  %s1 = inlined_call_operand.vmem [shape: bf16[8,12], index: 1, kind: input, shape index: {}]
  %s2 = inlined_call_operand.vmem [shape: bf16[12,128], index: 2, kind: input, shape index: {}]
  %s3 = inlined_call_operand.vmem [shape: bf16[12,128], index: 3, kind: input, shape index: {}]
  %s4 = inlined_call_operand.vmem [shape: f32[1,128], index: 4, kind: input, shape index: {}]
  %s5 = inlined_call_operand.vmem [shape: bf16[8,128], index: 5, kind: output, shape index: {}]
  %s6 = sld [smem:[#allocation0]]
  $region30: #{net_forward.9} parent=0
    _
  %s8 = ssub.s32 1, %s6
  %s9 = scalar_select 0, %s8, %s6
  // Predicated region
  $region2: #{net_forward.9} parent=0 // pred_check
    _
  $region3: #{net_forward.9} parent=0 // pred_check_branch
    %11 = sbr.rel (0) target = $region5
  $region4: #{net_forward.9} parent=0 // pred_region
    _
  $region5: #{net_forward.9} parent=0 // pred_fallthru
    _
  // Predicated region
  $region6: #{net_forward.9} parent=0 // pred_check
    _
  $region7: #{net_forward.9} parent=0 // pred_check_branch
    %13 = sbr.rel (0) target = $region9
  $region8: #{net_forward.9} parent=0 // pred_region
    _
  $region9: #{net_forward.9} parent=0 // pred_fallthru
    _
  // Predicated region
  $region10: #{net_forward.9} parent=0 // pred_check
    _
  $region11: #{net_forward.9} parent=0 // pred_check_branch
    %15 = sbr.rel (0) target = $region13
  $region12: #{net_forward.9} parent=0 // pred_region
    _
  $region13: #{net_forward.9} parent=0 // pred_fallthru
    _
  // Predicated region
  $region14: #{net_forward.9} parent=0 // pred_check
    _
  $region15: #{net_forward.9} parent=0 // pred_check_branch
    %17 = sbr.rel (0) target = $region17
  $region16: #{net_forward.9} parent=0 // pred_region
    _
  $region17: #{net_forward.9} parent=0 // pred_fallthru
    _
  // Predicated region
  $region18: #{net_forward.9} parent=0 // pred_check
    _
  $region19: #{net_forward.9} parent=0 // pred_check_branch
    %19 = sbr.rel (0) target = $region21
  $region20: #{net_forward.9} parent=0 // pred_region
    _
  $region21: #{net_forward.9} parent=0 // pred_fallthru
    _
  %v21 = vld [vmem:[%s0] sm:$0xf]
  %v22 = vld [vmem:[%s2] sm:$0xf]
  %v23 = vld [vmem:[%s2 + $0x4] sm:$0x3]
  %v24 = vld [vmem:[%s1] sm:$0xf]
  %v25 = vld [vmem:[%s3] sm:$0xf]
  %v26 = vld [vmem:[%s3 + $0x4] sm:$0x3]
  %v29 = vunpack.c.l.b16 %v25
  %v30 = vunpack.c.l.b16 %v26
  %v31 = vpack.c.b16 %v30, %v29
  %vm32 = vcmask 97280
  %v34 = vsel %vm32, %v24, 0
  %vm36 = vcmask 1045504
  %v38 = vsel %vm36, %v31, 0
  %40 = vmatprep.subr.bf16.mxu0 0
  %41 = vmatpush1.bf16.msra.mxu0 %v38
  %42 = vmatprep.subr.bf16.mxu0 0
  %43 = vmatpush1.bf16.msra.mxu0 0
  %44 = vmatprep.subr.bf16.mxu0 0
  %45 = vmatpush1.bf16.msra.mxu0 0
  %46 = vmatprep.subr.bf16.mxu0 0
  %47 = vmatpush1.bf16.msra.mxu0 0
  %48 = vmatprep.subr.bf16.mxu0 0
  %49 = vmatpush1.bf16.msra.mxu0 0
  %50 = vmatprep.subr.bf16.mxu0 0
  %51 = vmatpush1.bf16.msra.mxu0 0
  %52 = vmatprep.subr.bf16.mxu0 0
  %53 = vmatpush1.bf16.msra.mxu0 0
  %54 = vmatprep.subr.bf16.mxu0 0
  %55 = vmatpush1.bf16.msra.mxu0 0
  %56 = vmatprep.subr.bf16.mxu0 0
  %57 = vmatpush1.bf16.msra.mxu0 0
  %58 = vmatprep.subr.bf16.mxu0 0
  %59 = vmatpush1.bf16.msra.mxu0 0
  %60 = vmatprep.subr.bf16.mxu0 0
  %61 = vmatpush1.bf16.msra.mxu0 0
  %62 = vmatprep.subr.bf16.mxu0 0
  %63 = vmatpush1.bf16.msra.mxu0 0
  %64 = vmatprep.subr.bf16.mxu0 0
  %65 = vmatpush1.bf16.msra.mxu0 0
  %66 = vmatprep.subr.bf16.mxu0 0
  %67 = vmatpush1.bf16.msra.mxu0 0
  %68 = vmatprep.subr.bf16.mxu0 0
  %69 = vmatpush1.bf16.msra.mxu0 0
  %70 = vmatprep.subr.bf16.mxu0 0
  %71 = vmatpush1.bf16.msra.mxu0 0
  %72 = vmatprep.mubr.bf16.mxu0 0
  %73 = vmatmul.mubr.bf16.gmra.mrb[0].mxu0 %v34
  %v74 = vpop.f32.mrb[0].mxu0
  %v75 = vadd.f32 0.0, %v74
  %v76 = vpop.f32.mrb[0].mxu0
  %v77 = vpop.f32.mrb[0].mxu0
  %v78 = vpop.f32.mrb[0].mxu0
  %79 = vdwg.mxu0
  %v82 = vunpack.c.l.b16 %v22
  %v83 = vunpack.c.l.b16 %v23
  %v84 = vpack.c.b16 %v83, %v82
  %v86 = vsel %vm32, %v21, 0
  %v89 = vsel %vm36, %v84, 0
  %91 = vmatprep.subr.bf16.mxu0 0
  %92 = vmatpush1.bf16.msra.mxu0 %v89
  %93 = vmatprep.subr.bf16.mxu0 0
  %94 = vmatpush1.bf16.msra.mxu0 0
  %95 = vmatprep.subr.bf16.mxu0 0
  %96 = vmatpush1.bf16.msra.mxu0 0
  %97 = vmatprep.subr.bf16.mxu0 0
  %98 = vmatpush1.bf16.msra.mxu0 0
  %99 = vmatprep.subr.bf16.mxu0 0
  %100 = vmatpush1.bf16.msra.mxu0 0
  %101 = vmatprep.subr.bf16.mxu0 0
  %102 = vmatpush1.bf16.msra.mxu0 0
  %103 = vmatprep.subr.bf16.mxu0 0
  %104 = vmatpush1.bf16.msra.mxu0 0
  %105 = vmatprep.subr.bf16.mxu0 0
  %106 = vmatpush1.bf16.msra.mxu0 0
  %107 = vmatprep.subr.bf16.mxu0 0
  %108 = vmatpush1.bf16.msra.mxu0 0
  %109 = vmatprep.subr.bf16.mxu0 0
  %110 = vmatpush1.bf16.msra.mxu0 0
  %111 = vmatprep.subr.bf16.mxu0 0
  %112 = vmatpush1.bf16.msra.mxu0 0
  %113 = vmatprep.subr.bf16.mxu0 0
  %114 = vmatpush1.bf16.msra.mxu0 0
  %115 = vmatprep.subr.bf16.mxu0 0
  %116 = vmatpush1.bf16.msra.mxu0 0
  %117 = vmatprep.subr.bf16.mxu0 0
  %118 = vmatpush1.bf16.msra.mxu0 0
  %119 = vmatprep.subr.bf16.mxu0 0
  %120 = vmatpush1.bf16.msra.mxu0 0
  %121 = vmatprep.subr.bf16.mxu0 0
  %122 = vmatpush1.bf16.msra.mxu0 0
  %123 = vmatprep.mubr.bf16.mxu0 0
  %124 = vmatmul.mubr.bf16.gmra.mrb[0].mxu0 %v86
  %v125 = vpop.f32.mrb[0].mxu0
  %v126 = vadd.f32 %v75, %v125
  %v127 = vpop.f32.mrb[0].mxu0
  %v128 = vpop.f32.mrb[0].mxu0
  %v129 = vpop.f32.mrb[0].mxu0
  %130 = vdwg.mxu0
  %v131 = vld [vmem:[%s4] sm:$0x1]
  %v133 = vlaneseq
  %v134 = vshrl.u32 %v133, 7
  %v135 = vsub.s32 0, %v134
  %v136 = vrot.slane %v131, %v135
  %v138 = vadd.f32 %v126, %v136
  %v139 = vpack.c.bf16 %v138, %v138
  %140 = vst [vmem:[%s5] sm:$0xf] %v139
  // Predicated region
  $region22: #{net_forward.9} parent=0 // pred_check
    _
  $region23: #{net_forward.9} parent=0 // pred_check_branch
    %142 = sbr.rel (0) target = $region25
  $region24: #{net_forward.9} parent=0 // pred_region
    _
  $region25: #{net_forward.9} parent=0 // pred_fallthru
    _
  // Predicated region
  $region26: #{net_forward.9} parent=0 // pred_check
    _
  $region27: #{net_forward.9} parent=0 // pred_check_branch
    %144 = sbr.rel (0) target = $region29
  $region28: #{net_forward.9} parent=0 // pred_region
    _
  $region29: #{net_forward.9} parent=0 // pred_fallthru
    _

// kernel: net_forward.10
$region0: #{net_forward.10}
  #allocation0 [shape = 'u32[]', space=smem, size = 0x4, offset = 0x4, fixed_abs, tag = 'smem constant byte address 0x4 - core index']
  #allocation1 [shape = 'u32[144,128]{1,0:T(1,128)}', space=vmem, size = 0x12000, scoped, tag = 'internal scratch']
  %s0 = inlined_call_operand.vmem [shape: bf16[2,12], index: 0, kind: input, shape index: {}]
  %s1 = inlined_call_operand.vmem [shape: bf16[2,12], index: 1, kind: input, shape index: {}]
  %s2 = inlined_call_operand.vmem [shape: bf16[12,128], index: 2, kind: input, shape index: {}]
  %s3 = inlined_call_operand.vmem [shape: bf16[12,128], index: 3, kind: input, shape index: {}]
  %s4 = inlined_call_operand.vmem [shape: f32[1,128], index: 4, kind: input, shape index: {}]
  %s5 = inlined_call_operand.vmem [shape: bf16[2,128], index: 5, kind: output, shape index: {}]
  %s6 = sld [smem:[#allocation0]]
  $region30: #{net_forward.10} parent=0
    _
  %s8 = ssub.s32 1, %s6
  %s9 = scalar_select 0, %s8, %s6
  // Predicated region
  $region2: #{net_forward.10} parent=0 // pred_check
    _
  $region3: #{net_forward.10} parent=0 // pred_check_branch
    %11 = sbr.rel (0) target = $region5
  $region4: #{net_forward.10} parent=0 // pred_region
    _
  $region5: #{net_forward.10} parent=0 // pred_fallthru
    _
  // Predicated region
  $region6: #{net_forward.10} parent=0 // pred_check
    _
  $region7: #{net_forward.10} parent=0 // pred_check_branch
    %13 = sbr.rel (0) target = $region9
  $region8: #{net_forward.10} parent=0 // pred_region
    _
  $region9: #{net_forward.10} parent=0 // pred_fallthru
    _
  // Predicated region
  $region10: #{net_forward.10} parent=0 // pred_check
    _
  $region11: #{net_forward.10} parent=0 // pred_check_branch
    %15 = sbr.rel (0) target = $region13
  $region12: #{net_forward.10} parent=0 // pred_region
    _
  $region13: #{net_forward.10} parent=0 // pred_fallthru
    _
  // Predicated region
  $region14: #{net_forward.10} parent=0 // pred_check
    _
  $region15: #{net_forward.10} parent=0 // pred_check_branch
    %17 = sbr.rel (0) target = $region17
  $region16: #{net_forward.10} parent=0 // pred_region
    _
  $region17: #{net_forward.10} parent=0 // pred_fallthru
    _
  // Predicated region
  $region18: #{net_forward.10} parent=0 // pred_check
    _
  $region19: #{net_forward.10} parent=0 // pred_check_branch
    %19 = sbr.rel (0) target = $region21
  $region20: #{net_forward.10} parent=0 // pred_region
    _
  $region21: #{net_forward.10} parent=0 // pred_fallthru
    _
  %v21 = vld [vmem:[%s0] sm:$0x1]
  %v22 = vld [vmem:[%s2] sm:$0xf]
  %v23 = vld [vmem:[%s2 + $0x4] sm:$0x3]
  %v24 = vld [vmem:[%s1] sm:$0x1]
  %v25 = vld [vmem:[%s3] sm:$0xf]
  %v26 = vld [vmem:[%s3 + $0x4] sm:$0x3]
  %v29 = vunpack.c.l.b16 %v25
  %v30 = vunpack.c.l.b16 %v26
  %v31 = vpack.c.b16 %v30, %v29
  %vm32 = vcmask 97280
  %v34 = vsel %vm32, %v24, 0
  %vm36 = vcmask 1045504
  %v38 = vsel %vm36, %v31, 0
  %40 = vmatprep.subr.bf16.mxu0 0
  %41 = vmatpush1.bf16.msra.mxu0 %v38
  %42 = vmatprep.subr.bf16.mxu0 0
  %43 = vmatpush1.bf16.msra.mxu0 0
  %44 = vmatprep.subr.bf16.mxu0 0
  %45 = vmatpush1.bf16.msra.mxu0 0
  %46 = vmatprep.subr.bf16.mxu0 0
  %47 = vmatpush1.bf16.msra.mxu0 0
  %48 = vmatprep.subr.bf16.mxu0 0
  %49 = vmatpush1.bf16.msra.mxu0 0
  %50 = vmatprep.subr.bf16.mxu0 0
  %51 = vmatpush1.bf16.msra.mxu0 0
  %52 = vmatprep.subr.bf16.mxu0 0
  %53 = vmatpush1.bf16.msra.mxu0 0
  %54 = vmatprep.subr.bf16.mxu0 0
  %55 = vmatpush1.bf16.msra.mxu0 0
  %56 = vmatprep.subr.bf16.mxu0 0
  %57 = vmatpush1.bf16.msra.mxu0 0
  %58 = vmatprep.subr.bf16.mxu0 0
  %59 = vmatpush1.bf16.msra.mxu0 0
  %60 = vmatprep.subr.bf16.mxu0 0
  %61 = vmatpush1.bf16.msra.mxu0 0
  %62 = vmatprep.subr.bf16.mxu0 0
  %63 = vmatpush1.bf16.msra.mxu0 0
  %64 = vmatprep.subr.bf16.mxu0 0
  %65 = vmatpush1.bf16.msra.mxu0 0
  %66 = vmatprep.subr.bf16.mxu0 0
  %67 = vmatpush1.bf16.msra.mxu0 0
  %68 = vmatprep.subr.bf16.mxu0 0
  %69 = vmatpush1.bf16.msra.mxu0 0
  %70 = vmatprep.subr.bf16.mxu0 0
  %71 = vmatpush1.bf16.msra.mxu0 0
  %72 = vmatprep.mubr.bf16.mxu0 0
  %73 = vmatmul.mubr.bf16.gmra.mrb[0].mxu0 %v34
  %v74 = vpop.f32.mrb[0].mxu0
  %v75 = vadd.f32 0.0, %v74
  %v76 = vpop.f32.mrb[0].mxu0
  %v77 = vpop.f32.mrb[0].mxu0
  %v78 = vpop.f32.mrb[0].mxu0
  %79 = vdwg.mxu0
  %v82 = vunpack.c.l.b16 %v22
  %v83 = vunpack.c.l.b16 %v23
  %v84 = vpack.c.b16 %v83, %v82
  %v86 = vsel %vm32, %v21, 0
  %v89 = vsel %vm36, %v84, 0
  %91 = vmatprep.subr.bf16.mxu0 0
  %92 = vmatpush1.bf16.msra.mxu0 %v89
  %93 = vmatprep.subr.bf16.mxu0 0
  %94 = vmatpush1.bf16.msra.mxu0 0
  %95 = vmatprep.subr.bf16.mxu0 0
  %96 = vmatpush1.bf16.msra.mxu0 0
  %97 = vmatprep.subr.bf16.mxu0 0
  %98 = vmatpush1.bf16.msra.mxu0 0
  %99 = vmatprep.subr.bf16.mxu0 0
  %100 = vmatpush1.bf16.msra.mxu0 0
  %101 = vmatprep.subr.bf16.mxu0 0
  %102 = vmatpush1.bf16.msra.mxu0 0
  %103 = vmatprep.subr.bf16.mxu0 0
  %104 = vmatpush1.bf16.msra.mxu0 0
  %105 = vmatprep.subr.bf16.mxu0 0
  %106 = vmatpush1.bf16.msra.mxu0 0
  %107 = vmatprep.subr.bf16.mxu0 0
  %108 = vmatpush1.bf16.msra.mxu0 0
  %109 = vmatprep.subr.bf16.mxu0 0
  %110 = vmatpush1.bf16.msra.mxu0 0
  %111 = vmatprep.subr.bf16.mxu0 0
  %112 = vmatpush1.bf16.msra.mxu0 0
  %113 = vmatprep.subr.bf16.mxu0 0
  %114 = vmatpush1.bf16.msra.mxu0 0
  %115 = vmatprep.subr.bf16.mxu0 0
  %116 = vmatpush1.bf16.msra.mxu0 0
  %117 = vmatprep.subr.bf16.mxu0 0
  %118 = vmatpush1.bf16.msra.mxu0 0
  %119 = vmatprep.subr.bf16.mxu0 0
  %120 = vmatpush1.bf16.msra.mxu0 0
  %121 = vmatprep.subr.bf16.mxu0 0
  %122 = vmatpush1.bf16.msra.mxu0 0
  %123 = vmatprep.mubr.bf16.mxu0 0
  %124 = vmatmul.mubr.bf16.gmra.mrb[0].mxu0 %v86
  %v125 = vpop.f32.mrb[0].mxu0
  %v126 = vadd.f32 %v75, %v125
  %v127 = vpop.f32.mrb[0].mxu0
  %v128 = vpop.f32.mrb[0].mxu0
  %v129 = vpop.f32.mrb[0].mxu0
  %130 = vdwg.mxu0
  %v131 = vld [vmem:[%s4] sm:$0x1]
  %v133 = vlaneseq
  %v134 = vshrl.u32 %v133, 7
  %v135 = vsub.s32 0, %v134
  %v136 = vrot.slane %v131, %v135
  %v138 = vadd.f32 %v126, %v136
  %v139 = vpack.c.bf16 %v138, %v138
  %140 = vst [vmem:[%s5] sm:$0x1] %v139
  // Predicated region
  $region22: #{net_forward.10} parent=0 // pred_check
    _
  $region23: #{net_forward.10} parent=0 // pred_check_branch
    %142 = sbr.rel (0) target = $region25
  $region24: #{net_forward.10} parent=0 // pred_region
    _
  $region25: #{net_forward.10} parent=0 // pred_fallthru
    _
  // Predicated region
  $region26: #{net_forward.10} parent=0 // pred_check
    _
  $region27: #{net_forward.10} parent=0 // pred_check_branch
    %144 = sbr.rel (0) target = $region29
  $region28: #{net_forward.10} parent=0 // pred_region
    _
  $region29: #{net_forward.10} parent=0 // pred_fallthru
    _

// kernel: net_forward.11
$region0: #{net_forward.11}
  #allocation0 [shape = 'u32[]', space=smem, size = 0x4, offset = 0x4, fixed_abs, tag = 'smem constant byte address 0x4 - core index']
  #allocation1 [shape = 'u32[144,128]{1,0:T(1,128)}', space=vmem, size = 0x12000, scoped, tag = 'internal scratch']
  %s0 = inlined_call_operand.vmem [shape: bf16[12,32,1024], index: 0, kind: input, shape index: {}]
  %s1 = inlined_call_operand.vmem [shape: bf16[6,1024,64], index: 1, kind: input, shape index: {}]
  %s2 = inlined_call_operand.vmem [shape: f32[6,64,32], index: 2, kind: input, shape index: {}]
  %s3 = inlined_call_operand.vmem [shape: f32[6,1,1], index: 3, kind: input, shape index: {}]
  %s4 = inlined_call_operand.vmem [shape: f32[12,64,64], index: 4, kind: output, shape index: {}]
  %s5 = sld [smem:[#allocation0]]
  $region49: #{net_forward.11} parent=0
    _
  %s7 = ssub.s32 1, %s5
  %s8 = scalar_select 0, %s7, %s5
  loop: start=0, step=1, limit=14
  $region2: #{net_forward.11} parent=0 // loop_pre_header
    _
  $region3: #{net_forward.11} parent=0 // loop_header
    %s10 = sphi 0, %s14
    %p11 = scmp.ge.s32.totalorder %s10, 14
    %s17 = sphi 0, %s29
    %s18 = sphi 0, %s25
    %s19 = sphi 0, %s17
    %s20 = sphi 0, %s18
    %s21 = sphi 0, %s19
    %s22 = sphi 0, %s20
    %s36 = sphi 0, %s38
    %s39 = sphi 0, %s36
    %s40 = sphi 0, %s39
    %s56 = sphi 0, %s40
    %s62 = sphi 0, %s64
    %s65 = sphi 0, %s62
    %s66 = sphi 0, %s65
    %s82 = sphi 0, %s66
    %s88 = sphi 0, %s90
    %s91 = sphi 0, %s88
    %s92 = sphi 0, %s91
    %s108 = sphi 0, %s92
    %s114 = sphi 0, %s116
    %s117 = sphi 0, %s114
    %s118 = sphi 0, %s117
    %s134 = sphi 0, %s118
    %s144 = sphi 0, %s146
    %s147 = sphi 0, %s144
    %s148 = sphi 0, %s147
    %s164 = sphi 0, %s148
  $region4: #{net_forward.11} parent=0 // loop_header_branch
    %13 = sbr.rel (%p11) target = $region8
  $region5: #{net_forward.11} parent=0 // loop_body
    %s15 = ssub.s32 %s10, 1
    %s16 = ssub.s32 %s10, 2
    %s23 = sadd.s32 1, %s18
    %p24 = scmp.ge.s32.totalorder %s23, 2
    %s25 = scalar_select %p24, 0, %s23
    %s26 = sadd.s32 1, %s17
    %s27 = scalar_select %p24, %s26, %s17
    %p28 = scmp.ge.s32.totalorder %s27, 6
    %s29 = scalar_select %p28, 0, %s27
    %s30 = smul.u32 %s17, 2
    %s31 = sadd.s32 %s30, %s18
    %s32 = smul.u32 %s29, 2
    %s33 = sadd.s32 %s32, %s25
    %s34 = ssub.s32 %s31, %s33
    %p35 = scmp.eq.s32.totalorder %s34, 0
    %s37 = sadd.s32 %s36, 1
    %s38 = scalar_select %p35, %s36, %s37
    %p41 = pneg %p35
    %p42 = scmp.eq.s32.totalorder %s10, 11
    %p43 = por %p41, %p42
    %p44 = scmp.ne.s32.totalorder %s36, %s39
    %p45 = scmp.eq.s32.totalorder %s10, 0
    %p46 = por %p44, %p45
    %p47 = scmp.ne.s32.totalorder %s36, %s39
    %p48 = scmp.eq.s32.totalorder %s15, 11
    %p49 = por %p47, %p48
    %p50 = scmp.ne.s32.totalorder %s39, %s40
    %p51 = scmp.eq.s32.totalorder %s15, 0
    %p52 = por %p50, %p51
    %p53 = scmp.ne.s32.totalorder %s39, %s40
    %p54 = scmp.eq.s32.totalorder %s16, 11
    %p55 = por %p53, %p54
    %p57 = scmp.ne.s32.totalorder %s40, %s56
    %p58 = scmp.eq.s32.totalorder %s16, 0
    %p59 = por %p57, %p58
    %s60 = ssub.s32 %s17, %s29
    %p61 = scmp.eq.s32.totalorder %s60, 0
    %s63 = sadd.s32 %s62, 1
    %s64 = scalar_select %p61, %s62, %s63
    %p67 = pneg %p61
    %p68 = scmp.eq.s32.totalorder %s10, 11
    %p69 = por %p67, %p68
    %p70 = scmp.ne.s32.totalorder %s62, %s65
    %p71 = scmp.eq.s32.totalorder %s10, 0
    %p72 = por %p70, %p71
    %p73 = scmp.ne.s32.totalorder %s62, %s65
    %p74 = scmp.eq.s32.totalorder %s15, 11
    %p75 = por %p73, %p74
    %p76 = scmp.ne.s32.totalorder %s65, %s66
    %p77 = scmp.eq.s32.totalorder %s15, 0
    %p78 = por %p76, %p77
    %p79 = scmp.ne.s32.totalorder %s65, %s66
    %p80 = scmp.eq.s32.totalorder %s16, 11
    %p81 = por %p79, %p80
    %p83 = scmp.ne.s32.totalorder %s66, %s82
    %p84 = scmp.eq.s32.totalorder %s16, 0
    %p85 = por %p83, %p84
    %s86 = ssub.s32 %s17, %s29
    %p87 = scmp.eq.s32.totalorder %s86, 0
    %s89 = sadd.s32 %s88, 1
    %s90 = scalar_select %p87, %s88, %s89
    %p93 = pneg %p87
    %p94 = scmp.eq.s32.totalorder %s10, 11
    %p95 = por %p93, %p94
    %p96 = scmp.ne.s32.totalorder %s88, %s91
    %p97 = scmp.eq.s32.totalorder %s10, 0
    %p98 = por %p96, %p97
    %p99 = scmp.ne.s32.totalorder %s88, %s91
    %p100 = scmp.eq.s32.totalorder %s15, 11
    %p101 = por %p99, %p100
    %p102 = scmp.ne.s32.totalorder %s91, %s92
    %p103 = scmp.eq.s32.totalorder %s15, 0
    %p104 = por %p102, %p103
    %p105 = scmp.ne.s32.totalorder %s91, %s92
    %p106 = scmp.eq.s32.totalorder %s16, 11
    %p107 = por %p105, %p106
    %p109 = scmp.ne.s32.totalorder %s92, %s108
    %p110 = scmp.eq.s32.totalorder %s16, 0
    %p111 = por %p109, %p110
    %s112 = ssub.s32 %s17, %s29
    %p113 = scmp.eq.s32.totalorder %s112, 0
    %s115 = sadd.s32 %s114, 1
    %s116 = scalar_select %p113, %s114, %s115
    %p119 = pneg %p113
    %p120 = scmp.eq.s32.totalorder %s10, 11
    %p121 = por %p119, %p120
    %p122 = scmp.ne.s32.totalorder %s114, %s117
    %p123 = scmp.eq.s32.totalorder %s10, 0
    %p124 = por %p122, %p123
    %p125 = scmp.ne.s32.totalorder %s114, %s117
    %p126 = scmp.eq.s32.totalorder %s15, 11
    %p127 = por %p125, %p126
    %p128 = scmp.ne.s32.totalorder %s117, %s118
    %p129 = scmp.eq.s32.totalorder %s15, 0
    %p130 = por %p128, %p129
    %p131 = scmp.ne.s32.totalorder %s117, %s118
    %p132 = scmp.eq.s32.totalorder %s16, 11
    %p133 = por %p131, %p132
    %p135 = scmp.ne.s32.totalorder %s118, %s134
    %p136 = scmp.eq.s32.totalorder %s16, 0
    %p137 = por %p135, %p136
    %s138 = smul.u32 %s17, 2
    %s139 = sadd.s32 %s138, %s18
    %s140 = smul.u32 %s29, 2
    %s141 = sadd.s32 %s140, %s25
    %s142 = ssub.s32 %s139, %s141
    %p143 = scmp.eq.s32.totalorder %s142, 0
    %s145 = sadd.s32 %s144, 1
    %s146 = scalar_select %p143, %s144, %s145
    %p149 = pneg %p143
    %p150 = scmp.eq.s32.totalorder %s10, 11
    %p151 = por %p149, %p150
    %p152 = scmp.ne.s32.totalorder %s144, %s147
    %p153 = scmp.eq.s32.totalorder %s10, 0
    %p154 = por %p152, %p153
    %p155 = scmp.ne.s32.totalorder %s144, %s147
    %p156 = scmp.eq.s32.totalorder %s15, 11
    %p157 = por %p155, %p156
    %p158 = scmp.ne.s32.totalorder %s147, %s148
    %p159 = scmp.eq.s32.totalorder %s15, 0
    %p160 = por %p158, %p159
    %p161 = scmp.ne.s32.totalorder %s147, %s148
    %p162 = scmp.eq.s32.totalorder %s16, 11
    %p163 = por %p161, %p162
    %p165 = scmp.ne.s32.totalorder %s148, %s164
    %p166 = scmp.eq.s32.totalorder %s16, 0
    %p167 = por %p165, %p166
    %p168 = scmp.le.s32.totalorder 1, %s10
    %p169 = scmp.lt.s32.totalorder %s10, 13
    %p170 = pnand %p168, %p169
    %p171 = pneg %p170
    // Predicated region
    $region9: #{net_forward.11} parent=5 // pred_check
      _
    $region10: #{net_forward.11} parent=5 // pred_check_branch
      %173 = sbr.rel (%p170) target = $region12
    $region11: #{net_forward.11} parent=5 // pred_region
      %s174 = ssub.s32 %s10, 1
    $region12: #{net_forward.11} parent=5 // pred_fallthru
      _
    %p175 = scmp.lt.s32.totalorder %s10, 12
    // Predicated region
    $region13: #{net_forward.11} parent=5 // pred_check
      %p176 = pneg %p175
    $region14: #{net_forward.11} parent=5 // pred_check_branch
      %178 = sbr.rel (%p176) target = $region16
    $region15: #{net_forward.11} parent=5 // pred_region
      // Predicated region
      $region17: #{net_forward.11} parent=15 // pred_check
        %p179 = pneg %p46
      $region18: #{net_forward.11} parent=15 // pred_check_branch
        %181 = sbr.rel (%p179) target = $region20
      $region19: #{net_forward.11} parent=15 // pred_region
        %s182 = smul.u32 %s17, 2
        %s183 = sadd.s32 %s182, %s18
        %p184 = scmp.lt.s32.totalorder %s183, 11
        %s185 = scalar_select %p184, %s183, 11
        %s186 = smul.addr %s185, 32
        %s187 = smul.addr %s186, 4
        %s188 = scalar_lea.vmem %s0, %s187
        %s189 = smul.u32 %s17, 2
        %s190 = sadd.s32 %s189, %s18
      $region20: #{net_forward.11} parent=15 // pred_fallthru
        _
      // Predicated region
      $region21: #{net_forward.11} parent=15 // pred_check
        %p191 = pneg %p72
      $region22: #{net_forward.11} parent=15 // pred_check_branch
        %193 = sbr.rel (%p191) target = $region24
      $region23: #{net_forward.11} parent=15 // pred_region
        %p194 = scmp.lt.s32.totalorder %s17, 5
        %s195 = scalar_select %p194, %s17, 5
        %s196 = smul.addr %s195, 128
        %s197 = smul.addr %s196, 4
        %s198 = scalar_lea.vmem %s1, %s197
      $region24: #{net_forward.11} parent=15 // pred_fallthru
        _
      // Predicated region
      $region25: #{net_forward.11} parent=15 // pred_check
        %p199 = pneg %p98
      $region26: #{net_forward.11} parent=15 // pred_check_branch
        %201 = sbr.rel (%p199) target = $region28
      $region27: #{net_forward.11} parent=15 // pred_region
        %p202 = scmp.lt.s32.totalorder %s17, 5
        %s203 = scalar_select %p202, %s17, 5
        %s204 = smul.addr %s203, 8
        %s205 = smul.addr %s204, 8
        %s206 = scalar_lea.vmem %s2, %s205
      $region28: #{net_forward.11} parent=15 // pred_fallthru
        _
      // Predicated region
      $region29: #{net_forward.11} parent=15 // pred_check
        %p207 = pneg %p124
      $region30: #{net_forward.11} parent=15 // pred_check_branch
        %209 = sbr.rel (%p207) target = $region32
      $region31: #{net_forward.11} parent=15 // pred_region
        %p210 = scmp.lt.s32.totalorder %s17, 5
        %s211 = scalar_select %p210, %s17, 5
        %s212 = scalar_lea.vmem %s3, %s211
      $region32: #{net_forward.11} parent=15 // pred_fallthru
        _
    $region16: #{net_forward.11} parent=5 // pred_fallthru
      _
    %p213 = scmp.le.s32.totalorder 1, %s10
    %p214 = scmp.lt.s32.totalorder %s10, 13
    %p215 = pnand %p213, %p214
    %p216 = pneg %p215
    // Predicated region
    $region33: #{net_forward.11} parent=5 // pred_check
      _
    $region34: #{net_forward.11} parent=5 // pred_check_branch
      %218 = sbr.rel (%p215) target = $region36
    $region35: #{net_forward.11} parent=5 // pred_region
      %s219 = ssub.s32 %s10, 1
      %s220 = smul.u32 %s19, 2
      %s221 = sadd.s32 %s220, %s20
      %p222 = scmp.lt.s32.totalorder %s221, 11
      %s223 = scalar_select %p222, %s221, 11
      %s224 = smul.addr %s223, 32
      %s225 = smul.addr %s224, 4
      %s226 = scalar_lea.vmem %s0, %s225
      %p227 = pneg %p52
      %p228 = pneg %p49
      %p229 = scmp.lt.s32.totalorder %s19, 5
      %s230 = scalar_select %p229, %s19, 5
      %s231 = smul.addr %s230, 128
      %s232 = smul.addr %s231, 4
      %s233 = scalar_lea.vmem %s1, %s232
      %p234 = pneg %p78
      %p235 = pneg %p75
      %p236 = scmp.lt.s32.totalorder %s19, 5
      %s237 = scalar_select %p236, %s19, 5
      %s238 = smul.addr %s237, 8
      %s239 = smul.addr %s238, 8
      %s240 = scalar_lea.vmem %s2, %s239
      %p241 = pneg %p104
      %p242 = pneg %p101
      %p243 = scmp.lt.s32.totalorder %s19, 5
      %s244 = scalar_select %p243, %s19, 5
      %s245 = scalar_lea.vmem %s3, %s244
      %p246 = pneg %p130
      %p247 = pneg %p127
      %p248 = pneg %p160
      %p249 = pneg %p157
      %s250 = smul.u32 %s19, 2
      %s251 = sadd.s32 %s250, %s20
      %p252 = scmp.lt.s32.totalorder %s251, 11
      %s253 = scalar_select %p252, %s251, 11
      %s254 = smul.addr %s253, 8
      %s255 = smul.addr %s254, 8
      %s256 = scalar_lea.vmem %s4, %s255
      %s257 = smul.u32 %s19, 2
      %s258 = sadd.s32 %s257, %s20
      %p259 = scmp.lt.s32.totalorder %s258, 11
      %s260 = scalar_select %p259, %s258, 11
      %s261 = smul.addr %s260, 32
      %s262 = smul.addr %s261, 4
      %s263 = scalar_lea.vmem %s0, %s262
      %s264 = smul.u32 %s19, 2
      %s265 = sadd.s32 %s264, %s20
      %p266 = scmp.lt.s32.totalorder %s19, 5
      %s267 = scalar_select %p266, %s19, 5
      %s268 = smul.addr %s267, 128
      %s269 = smul.addr %s268, 4
      %s270 = scalar_lea.vmem %s1, %s269
      %p271 = scmp.lt.s32.totalorder %s19, 5
      %s272 = scalar_select %p271, %s19, 5
      %s273 = smul.addr %s272, 8
      %s274 = smul.addr %s273, 8
      %s275 = scalar_lea.vmem %s2, %s274
      %p276 = scmp.lt.s32.totalorder %s19, 5
      %s277 = scalar_select %p276, %s19, 5
      %s278 = scalar_lea.vmem %s3, %s277
      %s279 = smul.u32 %s19, 2
      %s280 = sadd.s32 %s279, %s20
      %p281 = scmp.lt.s32.totalorder %s280, 11
      %s282 = scalar_select %p281, %s280, 11
      %s283 = smul.addr %s282, 8
      %s284 = smul.addr %s283, 8
      %s285 = scalar_lea.vmem %s4, %s284
      %s286 = smul.u32 %s19, 2
      %s287 = sadd.s32 %s286, %s20
      %v289 = vld [vmem:[%s263] sm:$0xff]
      %v290 = vld [vmem:[%s263 + $0x8] sm:$0xff]
      %v291 = vld [vmem:[%s263 + $0x10] sm:$0xff]
      %v292 = vld [vmem:[%s263 + $0x18] sm:$0xff]
      %v293 = vld [vmem:[%s263 + $0x20] sm:$0xff]
      %v294 = vld [vmem:[%s263 + $0x28] sm:$0xff]
      %v295 = vld [vmem:[%s263 + $0x30] sm:$0xff]
      %v296 = vld [vmem:[%s263 + $0x38] sm:$0xff]
      %v297 = vld [vmem:[%s263 + $0x40] sm:$0xff]
      %v298 = vld [vmem:[%s263 + $0x48] sm:$0xff]
      %v299 = vld [vmem:[%s263 + $0x50] sm:$0xff]
      %v300 = vld [vmem:[%s263 + $0x58] sm:$0xff]
      %v301 = vld [vmem:[%s263 + $0x60] sm:$0xff]
      %v302 = vld [vmem:[%s263 + $0x68] sm:$0xff]
      %v303 = vld [vmem:[%s263 + $0x70] sm:$0xff]
      %v304 = vld [vmem:[%s263 + $0x78] sm:$0xff]
      %v305 = vld [vmem:[%s270] sm:$0xf]
      %v306 = vld [vmem:[%s270 + $0x4] sm:$0xf]
      %v307 = vld [vmem:[%s270 + $0x8] sm:$0xf]
      %v308 = vld [vmem:[%s270 + $0xc] sm:$0xf]
      %v309 = vld [vmem:[%s270 + $0x10] sm:$0xf]
      %v310 = vld [vmem:[%s270 + $0x14] sm:$0xf]
      %v311 = vld [vmem:[%s270 + $0x18] sm:$0xf]
      %v312 = vld [vmem:[%s270 + $0x1c] sm:$0xf]
      %v313 = vld [vmem:[%s270 + $0x20] sm:$0xf]
      %v314 = vld [vmem:[%s270 + $0x24] sm:$0xf]
      %v315 = vld [vmem:[%s270 + $0x28] sm:$0xf]
      %v316 = vld [vmem:[%s270 + $0x2c] sm:$0xf]
      %v317 = vld [vmem:[%s270 + $0x30] sm:$0xf]
      %v318 = vld [vmem:[%s270 + $0x34] sm:$0xf]
      %v319 = vld [vmem:[%s270 + $0x38] sm:$0xf]
      %v320 = vld [vmem:[%s270 + $0x3c] sm:$0xf]
      %v321 = vld [vmem:[%s270 + $0x40] sm:$0xf]
      %v322 = vld [vmem:[%s270 + $0x44] sm:$0xf]
      %v323 = vld [vmem:[%s270 + $0x48] sm:$0xf]
      %v324 = vld [vmem:[%s270 + $0x4c] sm:$0xf]
      %v325 = vld [vmem:[%s270 + $0x50] sm:$0xf]
      %v326 = vld [vmem:[%s270 + $0x54] sm:$0xf]
      %v327 = vld [vmem:[%s270 + $0x58] sm:$0xf]
      %v328 = vld [vmem:[%s270 + $0x5c] sm:$0xf]
      %v329 = vld [vmem:[%s270 + $0x60] sm:$0xf]
      %v330 = vld [vmem:[%s270 + $0x64] sm:$0xf]
      %v331 = vld [vmem:[%s270 + $0x68] sm:$0xf]
      %v332 = vld [vmem:[%s270 + $0x6c] sm:$0xf]
      %v333 = vld [vmem:[%s270 + $0x70] sm:$0xf]
      %v334 = vld [vmem:[%s270 + $0x74] sm:$0xf]
      %v335 = vld [vmem:[%s270 + $0x78] sm:$0xf]
      %v336 = vld [vmem:[%s270 + $0x7c] sm:$0xf]
      %v337 = vld [vmem:[%s270 + $0x80] sm:$0xf]
      %v338 = vld [vmem:[%s270 + $0x84] sm:$0xf]
      %v339 = vld [vmem:[%s270 + $0x88] sm:$0xf]
      %v340 = vld [vmem:[%s270 + $0x8c] sm:$0xf]
      %v341 = vld [vmem:[%s270 + $0x90] sm:$0xf]
      %v342 = vld [vmem:[%s270 + $0x94] sm:$0xf]
      %v343 = vld [vmem:[%s270 + $0x98] sm:$0xf]
      %v344 = vld [vmem:[%s270 + $0x9c] sm:$0xf]
      %v345 = vld [vmem:[%s270 + $0xa0] sm:$0xf]
      %v346 = vld [vmem:[%s270 + $0xa4] sm:$0xf]
      %v347 = vld [vmem:[%s270 + $0xa8] sm:$0xf]
      %v348 = vld [vmem:[%s270 + $0xac] sm:$0xf]
      %v349 = vld [vmem:[%s270 + $0xb0] sm:$0xf]
      %v350 = vld [vmem:[%s270 + $0xb4] sm:$0xf]
      %v351 = vld [vmem:[%s270 + $0xb8] sm:$0xf]
      %v352 = vld [vmem:[%s270 + $0xbc] sm:$0xf]
      %v353 = vld [vmem:[%s270 + $0xc0] sm:$0xf]
      %v354 = vld [vmem:[%s270 + $0xc4] sm:$0xf]
      %v355 = vld [vmem:[%s270 + $0xc8] sm:$0xf]
      %v356 = vld [vmem:[%s270 + $0xcc] sm:$0xf]
      %v357 = vld [vmem:[%s270 + $0xd0] sm:$0xf]
      %v358 = vld [vmem:[%s270 + $0xd4] sm:$0xf]
      %v359 = vld [vmem:[%s270 + $0xd8] sm:$0xf]
      %v360 = vld [vmem:[%s270 + $0xdc] sm:$0xf]
      %v361 = vld [vmem:[%s270 + $0xe0] sm:$0xf]
      %v362 = vld [vmem:[%s270 + $0xe4] sm:$0xf]
      %v363 = vld [vmem:[%s270 + $0xe8] sm:$0xf]
      %v364 = vld [vmem:[%s270 + $0xec] sm:$0xf]
      %v365 = vld [vmem:[%s270 + $0xf0] sm:$0xf]
      %v366 = vld [vmem:[%s270 + $0xf4] sm:$0xf]
      %v367 = vld [vmem:[%s270 + $0xf8] sm:$0xf]
      %v368 = vld [vmem:[%s270 + $0xfc] sm:$0xf]
      %v369 = vld [vmem:[%s270 + $0x100] sm:$0xf]
      %v370 = vld [vmem:[%s270 + $0x104] sm:$0xf]
      %v371 = vld [vmem:[%s270 + $0x108] sm:$0xf]
      %v372 = vld [vmem:[%s270 + $0x10c] sm:$0xf]
      %v373 = vld [vmem:[%s270 + $0x110] sm:$0xf]
      %v374 = vld [vmem:[%s270 + $0x114] sm:$0xf]
      %v375 = vld [vmem:[%s270 + $0x118] sm:$0xf]
      %v376 = vld [vmem:[%s270 + $0x11c] sm:$0xf]
      %v377 = vld [vmem:[%s270 + $0x120] sm:$0xf]
      %v378 = vld [vmem:[%s270 + $0x124] sm:$0xf]
      %v379 = vld [vmem:[%s270 + $0x128] sm:$0xf]
      %v380 = vld [vmem:[%s270 + $0x12c] sm:$0xf]
      %v381 = vld [vmem:[%s270 + $0x130] sm:$0xf]
      %v382 = vld [vmem:[%s270 + $0x134] sm:$0xf]
      %v383 = vld [vmem:[%s270 + $0x138] sm:$0xf]
      %v384 = vld [vmem:[%s270 + $0x13c] sm:$0xf]
      %v385 = vld [vmem:[%s270 + $0x140] sm:$0xf]
      %v386 = vld [vmem:[%s270 + $0x144] sm:$0xf]
      %v387 = vld [vmem:[%s270 + $0x148] sm:$0xf]
      %v388 = vld [vmem:[%s270 + $0x14c] sm:$0xf]
      %v389 = vld [vmem:[%s270 + $0x150] sm:$0xf]
      %v390 = vld [vmem:[%s270 + $0x154] sm:$0xf]
      %v391 = vld [vmem:[%s270 + $0x158] sm:$0xf]
      %v392 = vld [vmem:[%s270 + $0x15c] sm:$0xf]
      %v393 = vld [vmem:[%s270 + $0x160] sm:$0xf]
      %v394 = vld [vmem:[%s270 + $0x164] sm:$0xf]
      %v395 = vld [vmem:[%s270 + $0x168] sm:$0xf]
      %v396 = vld [vmem:[%s270 + $0x16c] sm:$0xf]
      %v397 = vld [vmem:[%s270 + $0x170] sm:$0xf]
      %v398 = vld [vmem:[%s270 + $0x174] sm:$0xf]
      %v399 = vld [vmem:[%s270 + $0x178] sm:$0xf]
      %v400 = vld [vmem:[%s270 + $0x17c] sm:$0xf]
      %v401 = vld [vmem:[%s270 + $0x180] sm:$0xf]
      %v402 = vld [vmem:[%s270 + $0x184] sm:$0xf]
      %v403 = vld [vmem:[%s270 + $0x188] sm:$0xf]
      %v404 = vld [vmem:[%s270 + $0x18c] sm:$0xf]
      %v405 = vld [vmem:[%s270 + $0x190] sm:$0xf]
      %v406 = vld [vmem:[%s270 + $0x194] sm:$0xf]
      %v407 = vld [vmem:[%s270 + $0x198] sm:$0xf]
      %v408 = vld [vmem:[%s270 + $0x19c] sm:$0xf]
      %v409 = vld [vmem:[%s270 + $0x1a0] sm:$0xf]
      %v410 = vld [vmem:[%s270 + $0x1a4] sm:$0xf]
      %v411 = vld [vmem:[%s270 + $0x1a8] sm:$0xf]
      %v412 = vld [vmem:[%s270 + $0x1ac] sm:$0xf]
      %v413 = vld [vmem:[%s270 + $0x1b0] sm:$0xf]
      %v414 = vld [vmem:[%s270 + $0x1b4] sm:$0xf]
      %v415 = vld [vmem:[%s270 + $0x1b8] sm:$0xf]
      %v416 = vld [vmem:[%s270 + $0x1bc] sm:$0xf]
      %v417 = vld [vmem:[%s270 + $0x1c0] sm:$0xf]
      %v418 = vld [vmem:[%s270 + $0x1c4] sm:$0xf]
      %v419 = vld [vmem:[%s270 + $0x1c8] sm:$0xf]
      %v420 = vld [vmem:[%s270 + $0x1cc] sm:$0xf]
      %v421 = vld [vmem:[%s270 + $0x1d0] sm:$0xf]
      %v422 = vld [vmem:[%s270 + $0x1d4] sm:$0xf]
      %v423 = vld [vmem:[%s270 + $0x1d8] sm:$0xf]
      %v424 = vld [vmem:[%s270 + $0x1dc] sm:$0xf]
      %v425 = vld [vmem:[%s270 + $0x1e0] sm:$0xf]
      %v426 = vld [vmem:[%s270 + $0x1e4] sm:$0xf]
      %v427 = vld [vmem:[%s270 + $0x1e8] sm:$0xf]
      %v428 = vld [vmem:[%s270 + $0x1ec] sm:$0xf]
      %v429 = vld [vmem:[%s270 + $0x1f0] sm:$0xf]
      %v430 = vld [vmem:[%s270 + $0x1f4] sm:$0xf]
      %v431 = vld [vmem:[%s270 + $0x1f8] sm:$0xf]
      %v432 = vld [vmem:[%s270 + $0x1fc] sm:$0xf]
      %v449 = vunpack.c.l.b16 %v289
      %v450 = vunpack.c.h.b16 %v289
      %v451 = vunpack.c.l.b16 %v290
      %v452 = vunpack.c.h.b16 %v290
      %v453 = vunpack.c.l.b16 %v291
      %v454 = vunpack.c.h.b16 %v291
      %v455 = vunpack.c.l.b16 %v292
      %v456 = vunpack.c.h.b16 %v292
      %v457 = vunpack.c.l.b16 %v293
      %v458 = vunpack.c.h.b16 %v293
      %v459 = vunpack.c.l.b16 %v294
      %v460 = vunpack.c.h.b16 %v294
      %v461 = vunpack.c.l.b16 %v295
      %v462 = vunpack.c.h.b16 %v295
      %v463 = vunpack.c.l.b16 %v296
      %v464 = vunpack.c.h.b16 %v296
      %v465 = vunpack.c.l.b16 %v297
      %v466 = vunpack.c.h.b16 %v297
      %v467 = vunpack.c.l.b16 %v298
      %v468 = vunpack.c.h.b16 %v298
      %v469 = vunpack.c.l.b16 %v299
      %v470 = vunpack.c.h.b16 %v299
      %v471 = vunpack.c.l.b16 %v300
      %v472 = vunpack.c.h.b16 %v300
      %v473 = vunpack.c.l.b16 %v301
      %v474 = vunpack.c.h.b16 %v301
      %v475 = vunpack.c.l.b16 %v302
      %v476 = vunpack.c.h.b16 %v302
      %v477 = vunpack.c.l.b16 %v303
      %v478 = vunpack.c.h.b16 %v303
      %v479 = vunpack.c.l.b16 %v304
      %v480 = vunpack.c.h.b16 %v304
      %v481 = vpack.c.b16 %v457, %v449
      %v482 = vpack.c.b16 %v458, %v450
      %v483 = vpack.c.b16 %v459, %v451
      %v484 = vpack.c.b16 %v460, %v452
      %v485 = vpack.c.b16 %v461, %v453
      %v486 = vpack.c.b16 %v462, %v454
      %v487 = vpack.c.b16 %v463, %v455
      %v488 = vpack.c.b16 %v464, %v456
      %v489 = vpack.c.b16 %v473, %v465
      %v490 = vpack.c.b16 %v474, %v466
      %v491 = vpack.c.b16 %v475, %v467
      %v492 = vpack.c.b16 %v476, %v468
      %v493 = vpack.c.b16 %v477, %v469
      %v494 = vpack.c.b16 %v478, %v470
      %v495 = vpack.c.b16 %v479, %v471
      %v496 = vpack.c.b16 %v480, %v472
      %v641 = vunpack.c.l.b16 %v305
      %v642 = vunpack.c.l.b16 %v306
      %v643 = vunpack.c.l.b16 %v307
      %v644 = vunpack.c.l.b16 %v308
      %v645 = vunpack.c.l.b16 %v309
      %v646 = vunpack.c.l.b16 %v310
      %v647 = vunpack.c.l.b16 %v311
      %v648 = vunpack.c.l.b16 %v312
      %v649 = vunpack.c.l.b16 %v313
      %v650 = vunpack.c.l.b16 %v314
      %v651 = vunpack.c.l.b16 %v315
      %v652 = vunpack.c.l.b16 %v316
      %v653 = vunpack.c.l.b16 %v317
      %v654 = vunpack.c.l.b16 %v318
      %v655 = vunpack.c.l.b16 %v319
      %v656 = vunpack.c.l.b16 %v320
      %v657 = vunpack.c.l.b16 %v321
      %v658 = vunpack.c.l.b16 %v322
      %v659 = vunpack.c.l.b16 %v323
      %v660 = vunpack.c.l.b16 %v324
      %v661 = vunpack.c.l.b16 %v325
      %v662 = vunpack.c.l.b16 %v326
      %v663 = vunpack.c.l.b16 %v327
      %v664 = vunpack.c.l.b16 %v328
      %v665 = vunpack.c.l.b16 %v329
      %v666 = vunpack.c.l.b16 %v330
      %v667 = vunpack.c.l.b16 %v331
      %v668 = vunpack.c.l.b16 %v332
      %v669 = vunpack.c.l.b16 %v333
      %v670 = vunpack.c.l.b16 %v334
      %v671 = vunpack.c.l.b16 %v335
      %v672 = vunpack.c.l.b16 %v336
      %v673 = vunpack.c.l.b16 %v337
      %v674 = vunpack.c.l.b16 %v338
      %v675 = vunpack.c.l.b16 %v339
      %v676 = vunpack.c.l.b16 %v340
      %v677 = vunpack.c.l.b16 %v341
      %v678 = vunpack.c.l.b16 %v342
      %v679 = vunpack.c.l.b16 %v343
      %v680 = vunpack.c.l.b16 %v344
      %v681 = vunpack.c.l.b16 %v345
      %v682 = vunpack.c.l.b16 %v346
      %v683 = vunpack.c.l.b16 %v347
      %v684 = vunpack.c.l.b16 %v348
      %v685 = vunpack.c.l.b16 %v349
      %v686 = vunpack.c.l.b16 %v350
      %v687 = vunpack.c.l.b16 %v351
      %v688 = vunpack.c.l.b16 %v352
      %v689 = vunpack.c.l.b16 %v353
      %v690 = vunpack.c.l.b16 %v354
      %v691 = vunpack.c.l.b16 %v355
      %v692 = vunpack.c.l.b16 %v356
      %v693 = vunpack.c.l.b16 %v357
      %v694 = vunpack.c.l.b16 %v358
      %v695 = vunpack.c.l.b16 %v359
      %v696 = vunpack.c.l.b16 %v360
      %v697 = vunpack.c.l.b16 %v361
      %v698 = vunpack.c.l.b16 %v362
      %v699 = vunpack.c.l.b16 %v363
      %v700 = vunpack.c.l.b16 %v364
      %v701 = vunpack.c.l.b16 %v365
      %v702 = vunpack.c.l.b16 %v366
      %v703 = vunpack.c.l.b16 %v367
      %v704 = vunpack.c.l.b16 %v368
      %v705 = vunpack.c.l.b16 %v369
      %v706 = vunpack.c.l.b16 %v370
      %v707 = vunpack.c.l.b16 %v371
      %v708 = vunpack.c.l.b16 %v372
      %v709 = vunpack.c.l.b16 %v373
      %v710 = vunpack.c.l.b16 %v374
      %v711 = vunpack.c.l.b16 %v375
      %v712 = vunpack.c.l.b16 %v376
      %v713 = vunpack.c.l.b16 %v377
      %v714 = vunpack.c.l.b16 %v378
      %v715 = vunpack.c.l.b16 %v379
      %v716 = vunpack.c.l.b16 %v380
      %v717 = vunpack.c.l.b16 %v381
      %v718 = vunpack.c.l.b16 %v382
      %v719 = vunpack.c.l.b16 %v383
      %v720 = vunpack.c.l.b16 %v384
      %v721 = vunpack.c.l.b16 %v385
      %v722 = vunpack.c.l.b16 %v386
      %v723 = vunpack.c.l.b16 %v387
      %v724 = vunpack.c.l.b16 %v388
      %v725 = vunpack.c.l.b16 %v389
      %v726 = vunpack.c.l.b16 %v390
      %v727 = vunpack.c.l.b16 %v391
      %v728 = vunpack.c.l.b16 %v392
      %v729 = vunpack.c.l.b16 %v393
      %v730 = vunpack.c.l.b16 %v394
      %v731 = vunpack.c.l.b16 %v395
      %v732 = vunpack.c.l.b16 %v396
      %v733 = vunpack.c.l.b16 %v397
      %v734 = vunpack.c.l.b16 %v398
      %v735 = vunpack.c.l.b16 %v399
      %v736 = vunpack.c.l.b16 %v400
      %v737 = vunpack.c.l.b16 %v401
      %v738 = vunpack.c.l.b16 %v402
      %v739 = vunpack.c.l.b16 %v403
      %v740 = vunpack.c.l.b16 %v404
      %v741 = vunpack.c.l.b16 %v405
      %v742 = vunpack.c.l.b16 %v406
      %v743 = vunpack.c.l.b16 %v407
      %v744 = vunpack.c.l.b16 %v408
      %v745 = vunpack.c.l.b16 %v409
      %v746 = vunpack.c.l.b16 %v410
      %v747 = vunpack.c.l.b16 %v411
      %v748 = vunpack.c.l.b16 %v412
      %v749 = vunpack.c.l.b16 %v413
      %v750 = vunpack.c.l.b16 %v414
      %v751 = vunpack.c.l.b16 %v415
      %v752 = vunpack.c.l.b16 %v416
      %v753 = vunpack.c.l.b16 %v417
      %v754 = vunpack.c.l.b16 %v418
      %v755 = vunpack.c.l.b16 %v419
      %v756 = vunpack.c.l.b16 %v420
      %v757 = vunpack.c.l.b16 %v421
      %v758 = vunpack.c.l.b16 %v422
      %v759 = vunpack.c.l.b16 %v423
      %v760 = vunpack.c.l.b16 %v424
      %v761 = vunpack.c.l.b16 %v425
      %v762 = vunpack.c.l.b16 %v426
      %v763 = vunpack.c.l.b16 %v427
      %v764 = vunpack.c.l.b16 %v428
      %v765 = vunpack.c.l.b16 %v429
      %v766 = vunpack.c.l.b16 %v430
      %v767 = vunpack.c.l.b16 %v431
      %v768 = vunpack.c.l.b16 %v432
      %v769 = vpack.c.b16 %v642, %v641
      %v770 = vpack.c.b16 %v644, %v643
      %v771 = vpack.c.b16 %v646, %v645
      %v772 = vpack.c.b16 %v648, %v647
      %v773 = vpack.c.b16 %v650, %v649
      %v774 = vpack.c.b16 %v652, %v651
      %v775 = vpack.c.b16 %v654, %v653
      %v776 = vpack.c.b16 %v656, %v655
      %v777 = vpack.c.b16 %v658, %v657
      %v778 = vpack.c.b16 %v660, %v659
      %v779 = vpack.c.b16 %v662, %v661
      %v780 = vpack.c.b16 %v664, %v663
      %v781 = vpack.c.b16 %v666, %v665
      %v782 = vpack.c.b16 %v668, %v667
      %v783 = vpack.c.b16 %v670, %v669
      %v784 = vpack.c.b16 %v672, %v671
      %v785 = vpack.c.b16 %v674, %v673
      %v786 = vpack.c.b16 %v676, %v675
      %v787 = vpack.c.b16 %v678, %v677
      %v788 = vpack.c.b16 %v680, %v679
      %v789 = vpack.c.b16 %v682, %v681
      %v790 = vpack.c.b16 %v684, %v683
      %v791 = vpack.c.b16 %v686, %v685
      %v792 = vpack.c.b16 %v688, %v687
      %v793 = vpack.c.b16 %v690, %v689
      %v794 = vpack.c.b16 %v692, %v691
      %v795 = vpack.c.b16 %v694, %v693
      %v796 = vpack.c.b16 %v696, %v695
      %v797 = vpack.c.b16 %v698, %v697
      %v798 = vpack.c.b16 %v700, %v699
      %v799 = vpack.c.b16 %v702, %v701
      %v800 = vpack.c.b16 %v704, %v703
      %v801 = vpack.c.b16 %v706, %v705
      %v802 = vpack.c.b16 %v708, %v707
      %v803 = vpack.c.b16 %v710, %v709
      %v804 = vpack.c.b16 %v712, %v711
      %v805 = vpack.c.b16 %v714, %v713
      %v806 = vpack.c.b16 %v716, %v715
      %v807 = vpack.c.b16 %v718, %v717
      %v808 = vpack.c.b16 %v720, %v719
      %v809 = vpack.c.b16 %v722, %v721
      %v810 = vpack.c.b16 %v724, %v723
      %v811 = vpack.c.b16 %v726, %v725
      %v812 = vpack.c.b16 %v728, %v727
      %v813 = vpack.c.b16 %v730, %v729
      %v814 = vpack.c.b16 %v732, %v731
      %v815 = vpack.c.b16 %v734, %v733
      %v816 = vpack.c.b16 %v736, %v735
      %v817 = vpack.c.b16 %v738, %v737
      %v818 = vpack.c.b16 %v740, %v739
      %v819 = vpack.c.b16 %v742, %v741
      %v820 = vpack.c.b16 %v744, %v743
      %v821 = vpack.c.b16 %v746, %v745
      %v822 = vpack.c.b16 %v748, %v747
      %v823 = vpack.c.b16 %v750, %v749
      %v824 = vpack.c.b16 %v752, %v751
      %v825 = vpack.c.b16 %v754, %v753
      %v826 = vpack.c.b16 %v756, %v755
      %v827 = vpack.c.b16 %v758, %v757
      %v828 = vpack.c.b16 %v760, %v759
      %v829 = vpack.c.b16 %v762, %v761
      %v830 = vpack.c.b16 %v764, %v763
      %v831 = vpack.c.b16 %v766, %v765
      %v832 = vpack.c.b16 %v768, %v767
      %897 = vmatprep.subr.bf16.mxu0 0
      %898 = vmatpush1.bf16.msra.mxu0 %v769
      %899 = vmatprep.subr.bf16.mxu0 0
      %900 = vmatpush1.bf16.msra.mxu0 %v770
      %901 = vmatprep.subr.bf16.mxu0 0
      %902 = vmatpush1.bf16.msra.mxu0 %v771
      %903 = vmatprep.subr.bf16.mxu0 0
      %904 = vmatpush1.bf16.msra.mxu0 %v772
      %905 = vmatprep.subr.bf16.mxu0 0
      %906 = vmatpush1.bf16.msra.mxu0 %v773
      %907 = vmatprep.subr.bf16.mxu0 0
      %908 = vmatpush1.bf16.msra.mxu0 %v774
      %909 = vmatprep.subr.bf16.mxu0 0
      %910 = vmatpush1.bf16.msra.mxu0 %v775
      %911 = vmatprep.subr.bf16.mxu0 0
      %912 = vmatpush1.bf16.msra.mxu0 %v776
      %913 = vmatprep.subr.bf16.mxu0 0
      %914 = vmatpush1.bf16.msra.mxu0 %v777
      %915 = vmatprep.subr.bf16.mxu0 0
      %916 = vmatpush1.bf16.msra.mxu0 %v778
      %917 = vmatprep.subr.bf16.mxu0 0
      %918 = vmatpush1.bf16.msra.mxu0 %v779
      %919 = vmatprep.subr.bf16.mxu0 0
      %920 = vmatpush1.bf16.msra.mxu0 %v780
      %921 = vmatprep.subr.bf16.mxu0 0
      %922 = vmatpush1.bf16.msra.mxu0 %v781
      %923 = vmatprep.subr.bf16.mxu0 0
      %924 = vmatpush1.bf16.msra.mxu0 %v782
      %925 = vmatprep.subr.bf16.mxu0 0
      %926 = vmatpush1.bf16.msra.mxu0 %v783
      %927 = vmatprep.subr.bf16.mxu0 0
      %928 = vmatpush1.bf16.msra.mxu0 %v784
      %929 = vmatprep.mubr.bf16.mxu0 %v482
      %930 = vmatmul.mubr.bf16.gmra.mrb[0].mxu0 %v481
      %v931 = vpop.f32.mrb[0].mxu0
      %v932 = vadd.f32 0.0, %v931
      %v933 = vpop.f32.mrb[0].mxu0
      %v934 = vpop.f32.mrb[0].mxu0
      %v935 = vadd.f32 0.0, %v934
      %v936 = vpop.f32.mrb[0].mxu0
      %937 = vmatprep.mubr.bf16.mxu0 %v490
      %938 = vmatmul.mubr.bf16.gmra.mrb[0].mxu0 %v489
      %v939 = vpop.f32.mrb[0].mxu0
      %v940 = vadd.f32 0.0, %v939
      %v941 = vpop.f32.mrb[0].mxu0
      %v942 = vpop.f32.mrb[0].mxu0
      %v943 = vadd.f32 0.0, %v942
      %v944 = vpop.f32.mrb[0].mxu0
      %945 = vdwg.mxu0
      %946 = vmatprep.subr.bf16.mxu0 0
      %947 = vmatpush1.bf16.msra.mxu0 %v785
      %948 = vmatprep.subr.bf16.mxu0 0
      %949 = vmatpush1.bf16.msra.mxu0 %v786
      %950 = vmatprep.subr.bf16.mxu0 0
      %951 = vmatpush1.bf16.msra.mxu0 %v787
      %952 = vmatprep.subr.bf16.mxu0 0
      %953 = vmatpush1.bf16.msra.mxu0 %v788
      %954 = vmatprep.subr.bf16.mxu0 0
      %955 = vmatpush1.bf16.msra.mxu0 %v789
      %956 = vmatprep.subr.bf16.mxu0 0
      %957 = vmatpush1.bf16.msra.mxu0 %v790
      %958 = vmatprep.subr.bf16.mxu0 0
      %959 = vmatpush1.bf16.msra.mxu0 %v791
      %960 = vmatprep.subr.bf16.mxu0 0
      %961 = vmatpush1.bf16.msra.mxu0 %v792
      %962 = vmatprep.subr.bf16.mxu0 0
      %963 = vmatpush1.bf16.msra.mxu0 %v793
      %964 = vmatprep.subr.bf16.mxu0 0
      %965 = vmatpush1.bf16.msra.mxu0 %v794
      %966 = vmatprep.subr.bf16.mxu0 0
      %967 = vmatpush1.bf16.msra.mxu0 %v795
      %968 = vmatprep.subr.bf16.mxu0 0
      %969 = vmatpush1.bf16.msra.mxu0 %v796
      %970 = vmatprep.subr.bf16.mxu0 0
      %971 = vmatpush1.bf16.msra.mxu0 %v797
      %972 = vmatprep.subr.bf16.mxu0 0
      %973 = vmatpush1.bf16.msra.mxu0 %v798
      %974 = vmatprep.subr.bf16.mxu0 0
      %975 = vmatpush1.bf16.msra.mxu0 %v799
      %976 = vmatprep.subr.bf16.mxu0 0
      %977 = vmatpush1.bf16.msra.mxu0 %v800
      %978 = vmatprep.mubr.bf16.mxu0 %v484
      %979 = vmatmul.mubr.bf16.gmra.mrb[0].mxu0 %v483
      %v980 = vpop.f32.mrb[0].mxu0
      %v981 = vadd.f32 %v932, %v980
      %v982 = vpop.f32.mrb[0].mxu0
      %v983 = vpop.f32.mrb[0].mxu0
      %v984 = vadd.f32 %v935, %v983
      %v985 = vpop.f32.mrb[0].mxu0
      %986 = vmatprep.mubr.bf16.mxu0 %v492
      %987 = vmatmul.mubr.bf16.gmra.mrb[0].mxu0 %v491
      %v988 = vpop.f32.mrb[0].mxu0
      %v989 = vadd.f32 %v940, %v988
      %v990 = vpop.f32.mrb[0].mxu0
      %v991 = vpop.f32.mrb[0].mxu0
      %v992 = vadd.f32 %v943, %v991
      %v993 = vpop.f32.mrb[0].mxu0
      %994 = vdwg.mxu0
      %995 = vmatprep.subr.bf16.mxu0 0
      %996 = vmatpush1.bf16.msra.mxu0 %v801
      %997 = vmatprep.subr.bf16.mxu0 0
      %998 = vmatpush1.bf16.msra.mxu0 %v802
      %999 = vmatprep.subr.bf16.mxu0 0
      %1000 = vmatpush1.bf16.msra.mxu0 %v803
      %1001 = vmatprep.subr.bf16.mxu0 0
      %1002 = vmatpush1.bf16.msra.mxu0 %v804
      %1003 = vmatprep.subr.bf16.mxu0 0
      %1004 = vmatpush1.bf16.msra.mxu0 %v805
      %1005 = vmatprep.subr.bf16.mxu0 0
      %1006 = vmatpush1.bf16.msra.mxu0 %v806
      %1007 = vmatprep.subr.bf16.mxu0 0
      %1008 = vmatpush1.bf16.msra.mxu0 %v807
      %1009 = vmatprep.subr.bf16.mxu0 0
      %1010 = vmatpush1.bf16.msra.mxu0 %v808
      %1011 = vmatprep.subr.bf16.mxu0 0
      %1012 = vmatpush1.bf16.msra.mxu0 %v809
      %1013 = vmatprep.subr.bf16.mxu0 0
      %1014 = vmatpush1.bf16.msra.mxu0 %v810
      %1015 = vmatprep.subr.bf16.mxu0 0
      %1016 = vmatpush1.bf16.msra.mxu0 %v811
      %1017 = vmatprep.subr.bf16.mxu0 0
      %1018 = vmatpush1.bf16.msra.mxu0 %v812
      %1019 = vmatprep.subr.bf16.mxu0 0
      %1020 = vmatpush1.bf16.msra.mxu0 %v813
      %1021 = vmatprep.subr.bf16.mxu0 0
      %1022 = vmatpush1.bf16.msra.mxu0 %v814
      %1023 = vmatprep.subr.bf16.mxu0 0
      %1024 = vmatpush1.bf16.msra.mxu0 %v815
      %1025 = vmatprep.subr.bf16.mxu0 0
      %1026 = vmatpush1.bf16.msra.mxu0 %v816
      %1027 = vmatprep.mubr.bf16.mxu0 %v486
      %1028 = vmatmul.mubr.bf16.gmra.mrb[0].mxu0 %v485
      %v1029 = vpop.f32.mrb[0].mxu0
      %v1030 = vadd.f32 %v981, %v1029
      %v1031 = vpop.f32.mrb[0].mxu0
      %v1032 = vpop.f32.mrb[0].mxu0
      %v1033 = vadd.f32 %v984, %v1032
      %v1034 = vpop.f32.mrb[0].mxu0
      %1035 = vmatprep.mubr.bf16.mxu0 %v494
      %1036 = vmatmul.mubr.bf16.gmra.mrb[0].mxu0 %v493
      %v1037 = vpop.f32.mrb[0].mxu0
      %v1038 = vadd.f32 %v989, %v1037
      %v1039 = vpop.f32.mrb[0].mxu0
      %v1040 = vpop.f32.mrb[0].mxu0
      %v1041 = vadd.f32 %v992, %v1040
      %v1042 = vpop.f32.mrb[0].mxu0
      %1043 = vdwg.mxu0
      %1044 = vmatprep.subr.bf16.mxu0 0
      %1045 = vmatpush1.bf16.msra.mxu0 %v817
      %1046 = vmatprep.subr.bf16.mxu0 0
      %1047 = vmatpush1.bf16.msra.mxu0 %v818
      %1048 = vmatprep.subr.bf16.mxu0 0
      %1049 = vmatpush1.bf16.msra.mxu0 %v819
      %1050 = vmatprep.subr.bf16.mxu0 0
      %1051 = vmatpush1.bf16.msra.mxu0 %v820
      %1052 = vmatprep.subr.bf16.mxu0 0
      %1053 = vmatpush1.bf16.msra.mxu0 %v821
      %1054 = vmatprep.subr.bf16.mxu0 0
      %1055 = vmatpush1.bf16.msra.mxu0 %v822
      %1056 = vmatprep.subr.bf16.mxu0 0
      %1057 = vmatpush1.bf16.msra.mxu0 %v823
      %1058 = vmatprep.subr.bf16.mxu0 0
      %1059 = vmatpush1.bf16.msra.mxu0 %v824
      %1060 = vmatprep.subr.bf16.mxu0 0
      %1061 = vmatpush1.bf16.msra.mxu0 %v825
      %1062 = vmatprep.subr.bf16.mxu0 0
      %1063 = vmatpush1.bf16.msra.mxu0 %v826
      %1064 = vmatprep.subr.bf16.mxu0 0
      %1065 = vmatpush1.bf16.msra.mxu0 %v827
      %1066 = vmatprep.subr.bf16.mxu0 0
      %1067 = vmatpush1.bf16.msra.mxu0 %v828
      %1068 = vmatprep.subr.bf16.mxu0 0
      %1069 = vmatpush1.bf16.msra.mxu0 %v829
      %1070 = vmatprep.subr.bf16.mxu0 0
      %1071 = vmatpush1.bf16.msra.mxu0 %v830
      %1072 = vmatprep.subr.bf16.mxu0 0
      %1073 = vmatpush1.bf16.msra.mxu0 %v831
      %1074 = vmatprep.subr.bf16.mxu0 0
      %1075 = vmatpush1.bf16.msra.mxu0 %v832
      %1076 = vmatprep.mubr.bf16.mxu0 %v488
      %1077 = vmatmul.mubr.bf16.gmra.mrb[0].mxu0 %v487
      %v1078 = vpop.f32.mrb[0].mxu0
      %v1079 = vadd.f32 %v1030, %v1078
      %v1080 = vpop.f32.mrb[0].mxu0
      %v1081 = vpop.f32.mrb[0].mxu0
      %v1082 = vadd.f32 %v1033, %v1081
      %v1083 = vpop.f32.mrb[0].mxu0
      %1084 = vmatprep.mubr.bf16.mxu0 %v496
      %1085 = vmatmul.mubr.bf16.gmra.mrb[0].mxu0 %v495
      %v1086 = vpop.f32.mrb[0].mxu0
      %v1087 = vadd.f32 %v1038, %v1086
      %v1088 = vpop.f32.mrb[0].mxu0
      %v1089 = vpop.f32.mrb[0].mxu0
      %v1090 = vadd.f32 %v1041, %v1089
      %v1091 = vpop.f32.mrb[0].mxu0
      %1092 = vdwg.mxu0
      %v1093 = vld [vmem:[%s275] sm:$0xff]
      %v1094 = vld [vmem:[%s275 + $0x8] sm:$0xff]
      %v1095 = vld [vmem:[%s275 + $0x10] sm:$0xff]
      %v1096 = vld [vmem:[%s275 + $0x18] sm:$0xff]
      %v1097 = vld [vmem:[%s275 + $0x20] sm:$0xff]
      %v1098 = vld [vmem:[%s275 + $0x28] sm:$0xff]
      %v1099 = vld [vmem:[%s275 + $0x30] sm:$0xff]
      %v1100 = vld [vmem:[%s275 + $0x38] sm:$0xff]
      %v1101 = vld [vmem:[%s278] sm:$0x1]
      %v1103 = vlaneseq
      %v1104 = vshrl.u32 %v1103, 7
      %v1105 = vsub.s32 0, %v1104
      %v1106 = vrot.slane %v1101, %v1105
      %1107 = vset.pattern.permute.xlu0 0
      %1108 = vperm.xlu0 %1107, %v1106
      %v1109 = vpop.permute.xlu0 %1108
      %vm1111 = vcmask 261120
      %v1113 = vsel %vm1111, %v1093, 0
      %v1116 = vsel %vm1111, %v1094, 0
      %v1119 = vsel %vm1111, %v1095, 0
      %v1122 = vsel %vm1111, %v1096, 0
      %v1125 = vsel %vm1111, %v1097, 0
      %v1128 = vsel %vm1111, %v1098, 0
      %v1131 = vsel %vm1111, %v1099, 0
      %v1134 = vsel %vm1111, %v1100, 0
      %1136 = vmatprep.subr.mxu0 0.0
      %1137 = vmatpush1.msra.mxu0 %v1079
      %1138 = vmatprep.subr.mxu0 0.0
      %1139 = vmatpush1.msra.mxu0 %v1082
      %1140 = vmatprep.subr.mxu0 0.0
      %1141 = vmatpush1.msra.mxu0 %v1087
      %1142 = vmatprep.subr.mxu0 0.0
      %1143 = vmatpush1.msra.mxu0 %v1090
      %1144 = vmatprep.subr.mxu0 0.0
      %1145 = vmatpush1.msra.mxu0 0.0
      %1146 = vmatprep.subr.mxu0 0.0
      %1147 = vmatpush1.msra.mxu0 0.0
      %1148 = vmatprep.subr.mxu0 0.0
      %1149 = vmatpush1.msra.mxu0 0.0
      %1150 = vmatprep.subr.mxu0 0.0
      %1151 = vmatpush1.msra.mxu0 0.0
      %1152 = vmatprep.subr.mxu0 0.0
      %1153 = vmatpush1.msra.mxu0 0.0
      %1154 = vmatprep.subr.mxu0 0.0
      %1155 = vmatpush1.msra.mxu0 0.0
      %1156 = vmatprep.subr.mxu0 0.0
      %1157 = vmatpush1.msra.mxu0 0.0
      %1158 = vmatprep.subr.mxu0 0.0
      %1159 = vmatpush1.msra.mxu0 0.0
      %1160 = vmatprep.subr.mxu0 0.0
      %1161 = vmatpush1.msra.mxu0 0.0
      %1162 = vmatprep.subr.mxu0 0.0
      %1163 = vmatpush1.msra.mxu0 0.0
      %1164 = vmatprep.subr.mxu0 0.0
      %1165 = vmatpush1.msra.mxu0 0.0
      %1166 = vmatprep.subr.mxu0 0.0
      %1167 = vmatpush1.msra.mxu0 0.0
      %1168 = vmatprep.subr.mxu0 0.0
      %1169 = vmatpush1.msra.mxu0 0.0
      %1170 = vmatprep.subr.mxu0 0.0
      %1171 = vmatpush1.msra.mxu0 0.0
      %1172 = vmatprep.subr.mxu0 0.0
      %1173 = vmatpush1.msra.mxu0 0.0
      %1174 = vmatprep.subr.mxu0 0.0
      %1175 = vmatpush1.msra.mxu0 0.0
      %1176 = vmatprep.subr.mxu0 0.0
      %1177 = vmatpush1.msra.mxu0 0.0
      %1178 = vmatprep.subr.mxu0 0.0
      %1179 = vmatpush1.msra.mxu0 0.0
      %1180 = vmatprep.subr.mxu0 0.0
      %1181 = vmatpush1.msra.mxu0 0.0
      %1182 = vmatprep.subr.mxu0 0.0
      %1183 = vmatpush1.msra.mxu0 0.0
      %1184 = vmatprep.subr.mxu0 0.0
      %1185 = vmatpush1.msra.mxu0 0.0
      %1186 = vmatprep.subr.mxu0 0.0
      %1187 = vmatpush1.msra.mxu0 0.0
      %1188 = vmatprep.subr.mxu0 0.0
      %1189 = vmatpush1.msra.mxu0 0.0
      %1190 = vmatprep.subr.mxu0 0.0
      %1191 = vmatpush1.msra.mxu0 0.0
      %1192 = vmatprep.subr.mxu0 0.0
      %1193 = vmatpush1.msra.mxu0 0.0
      %1194 = vmatprep.subr.mxu0 0.0
      %1195 = vmatpush1.msra.mxu0 0.0
      %1196 = vmatprep.subr.mxu0 0.0
      %1197 = vmatpush1.msra.mxu0 0.0
      %1198 = vmatprep.subr.mxu0 0.0
      %1199 = vmatpush1.msra.mxu0 0.0
      %1200 = vmatprep.mubr.f32.mxu0 0.0
      %1201 = vmatmul.mubr.f32.gmra.mrb[0].mxu0 %v1113
      %v1202 = vpop.f32.mrb[0].mxu0
      %v1203 = vadd.f32 %v1109, %v1202
      %v1204 = vpop.f32.mrb[0].mxu0
      %1205 = vmatprep.mubr.f32.mxu0 0.0
      %1206 = vmatmul.mubr.f32.gmra.mrb[0].mxu0 %v1116
      %v1207 = vpop.f32.mrb[0].mxu0
      %v1208 = vadd.f32 %v1109, %v1207
      %v1209 = vpop.f32.mrb[0].mxu0
      %1210 = vmatprep.mubr.f32.mxu0 0.0
      %1211 = vmatmul.mubr.f32.gmra.mrb[0].mxu0 %v1119
      %v1212 = vpop.f32.mrb[0].mxu0
      %v1213 = vadd.f32 %v1109, %v1212
      %v1214 = vpop.f32.mrb[0].mxu0
      %1215 = vmatprep.mubr.f32.mxu0 0.0
      %1216 = vmatmul.mubr.f32.gmra.mrb[0].mxu0 %v1122
      %v1217 = vpop.f32.mrb[0].mxu0
      %v1218 = vadd.f32 %v1109, %v1217
      %v1219 = vpop.f32.mrb[0].mxu0
      %1220 = vmatprep.mubr.f32.mxu0 0.0
      %1221 = vmatmul.mubr.f32.gmra.mrb[0].mxu0 %v1125
      %v1222 = vpop.f32.mrb[0].mxu0
      %v1223 = vadd.f32 %v1109, %v1222
      %v1224 = vpop.f32.mrb[0].mxu0
      %1225 = vmatprep.mubr.f32.mxu0 0.0
      %1226 = vmatmul.mubr.f32.gmra.mrb[0].mxu0 %v1128
      %v1227 = vpop.f32.mrb[0].mxu0
      %v1228 = vadd.f32 %v1109, %v1227
      %v1229 = vpop.f32.mrb[0].mxu0
      %1230 = vmatprep.mubr.f32.mxu0 0.0
      %1231 = vmatmul.mubr.f32.gmra.mrb[0].mxu0 %v1131
      %v1232 = vpop.f32.mrb[0].mxu0
      %v1233 = vadd.f32 %v1109, %v1232
      %v1234 = vpop.f32.mrb[0].mxu0
      %1235 = vmatprep.mubr.f32.mxu0 0.0
      %1236 = vmatmul.mubr.f32.gmra.mrb[0].mxu0 %v1134
      %v1237 = vpop.f32.mrb[0].mxu0
      %v1238 = vadd.f32 %v1109, %v1237
      %v1239 = vpop.f32.mrb[0].mxu0
      %1240 = vdwg.mxu0
      %v1241 = vxor.u32 %v1203, 2147483648
      %v1242 = vxor.u32 %v1208, 2147483648
      %v1243 = vxor.u32 %v1213, 2147483648
      %v1244 = vxor.u32 %v1218, 2147483648
      %v1245 = vxor.u32 %v1223, 2147483648
      %v1246 = vxor.u32 %v1228, 2147483648
      %v1247 = vxor.u32 %v1233, 2147483648
      %v1248 = vxor.u32 %v1238, 2147483648
      %v1249 = vmul.f32 %v1241, 1.442695
      %v1250 = vpow.pop %v1249
      %v1251 = vmul.f32 %v1242, 1.442695
      %v1252 = vpow.pop %v1251
      %v1253 = vmul.f32 %v1243, 1.442695
      %v1254 = vpow.pop %v1253
      %v1255 = vmul.f32 %v1244, 1.442695
      %v1256 = vpow.pop %v1255
      %v1257 = vmul.f32 %v1245, 1.442695
      %v1258 = vpow.pop %v1257
      %v1259 = vmul.f32 %v1246, 1.442695
      %v1260 = vpow.pop %v1259
      %v1261 = vmul.f32 %v1247, 1.442695
      %v1262 = vpow.pop %v1261
      %v1263 = vmul.f32 %v1248, 1.442695
      %v1264 = vpow.pop %v1263
      %v1265 = vadd.f32 %v1250, 1.0
      %v1266 = vadd.f32 %v1252, 1.0
      %v1267 = vadd.f32 %v1254, 1.0
      %v1268 = vadd.f32 %v1256, 1.0
      %v1269 = vadd.f32 %v1258, 1.0
      %v1270 = vadd.f32 %v1260, 1.0
      %v1271 = vadd.f32 %v1262, 1.0
      %v1272 = vadd.f32 %v1264, 1.0
      %v1273 = vrcp.pop %v1265
      %v1274 = vmul.f32 1.0, %v1273
      %v1275 = vrcp.pop %v1266
      %v1276 = vmul.f32 1.0, %v1275
      %v1277 = vrcp.pop %v1267
      %v1278 = vmul.f32 1.0, %v1277
      %v1279 = vrcp.pop %v1268
      %v1280 = vmul.f32 1.0, %v1279
      %v1281 = vrcp.pop %v1269
      %v1282 = vmul.f32 1.0, %v1281
      %v1283 = vrcp.pop %v1270
      %v1284 = vmul.f32 1.0, %v1283
      %v1285 = vrcp.pop %v1271
      %v1286 = vmul.f32 1.0, %v1285
      %v1287 = vrcp.pop %v1272
      %v1288 = vmul.f32 1.0, %v1287
      %vm1289 = vcmask 523264
      %1290 = vst.msk [vmem:[%s285] sm:$0xff] %vm1289, %v1274
      %1291 = vst.msk [vmem:[%s285 + $0x8] sm:$0xff] %vm1289, %v1276
      %1292 = vst.msk [vmem:[%s285 + $0x10] sm:$0xff] %vm1289, %v1278
      %1293 = vst.msk [vmem:[%s285 + $0x18] sm:$0xff] %vm1289, %v1280
      %1294 = vst.msk [vmem:[%s285 + $0x20] sm:$0xff] %vm1289, %v1282
      %1295 = vst.msk [vmem:[%s285 + $0x28] sm:$0xff] %vm1289, %v1284
      %1296 = vst.msk [vmem:[%s285 + $0x30] sm:$0xff] %vm1289, %v1286
      %1297 = vst.msk [vmem:[%s285 + $0x38] sm:$0xff] %vm1289, %v1288
      %s1298 = smul.u32 %s19, 2
      %s1299 = sadd.s32 %s1298, %s20
      %p1300 = scmp.lt.s32.totalorder %s1299, 11
      %s1301 = scalar_select %p1300, %s1299, 11
      %s1302 = smul.addr %s1301, 8
      %s1303 = smul.addr %s1302, 8
      %s1304 = scalar_lea.vmem %s4, %s1303
      // Predicated region
      $region37: #{net_forward.11} parent=35 // pred_check
        %p1305 = pneg %p157
      $region38: #{net_forward.11} parent=35 // pred_check_branch
        %1307 = sbr.rel (%p1305) target = $region40
      $region39: #{net_forward.11} parent=35 // pred_region
        %s1308 = smul.u32 %s19, 2
        %s1309 = sadd.s32 %s1308, %s20
      $region40: #{net_forward.11} parent=35 // pred_fallthru
        _
    $region36: #{net_forward.11} parent=5 // pred_fallthru
      _
    %p1310 = scmp.le.s32.totalorder 2, %s10
    // Predicated region
    $region41: #{net_forward.11} parent=5 // pred_check
      %p1311 = pneg %p1310
    $region42: #{net_forward.11} parent=5 // pred_check_branch
      %1313 = sbr.rel (%p1311) target = $region44
    $region43: #{net_forward.11} parent=5 // pred_region
      %s1314 = ssub.s32 %s10, 2
      // Predicated region
      $region45: #{net_forward.11} parent=43 // pred_check
        %p1315 = pneg %p163
      $region46: #{net_forward.11} parent=43 // pred_check_branch
        %1317 = sbr.rel (%p1315) target = $region48
      $region47: #{net_forward.11} parent=43 // pred_region
        %s1318 = smul.u32 %s21, 2
        %s1319 = sadd.s32 %s1318, %s22
        %p1320 = scmp.lt.s32.totalorder %s1319, 11
        %s1321 = scalar_select %p1320, %s1319, 11
        %s1322 = smul.addr %s1321, 8
        %s1323 = smul.addr %s1322, 8
        %s1324 = scalar_lea.vmem %s4, %s1323
      $region48: #{net_forward.11} parent=43 // pred_fallthru
        _
    $region44: #{net_forward.11} parent=5 // pred_fallthru
      _
  $region6: #{net_forward.11} parent=0 // loop_footer
    %s14 = sadd.s32 1, %s10
  $region7: #{net_forward.11} parent=0 // loop_footer_branch
    %9 = sbr.rel target = $region3
  $region8: #{net_forward.11} parent=0 // loop_exit
    _

</llo_original>
